<compile_context>
chip_gen: v7x
topology: tpu7x:2x2x1
jax: 0.10.0
libtpu: 0.0.40
codegen_flags: <defaults>
</compile_context>

<pallas_src>
import functools
import math

import numpy as np
import jax
import jax.numpy as jnp
from jax import lax
from jax.experimental import pallas as pl
from jax.experimental.pallas import tpu as pltpu


def _round_up(x, m):
    return (x + m - 1) // m * m


def _pick_bt(batch):
    """Batch elements per grid step: keep >=2 grid steps, largest divisor <=8."""
    if batch <= 2:
        return 1
    for bt in range(min(8, batch // 2), 0, -1):
        if batch % bt == 0:
            return bt
    return 1


# ----------------------------------------------------------------------------
# elementwise helpers (in-kernel)
# ----------------------------------------------------------------------------
def _erf(z):
    # TODO(synk): lax.erf has no guaranteed Mosaic lowering; use Abramowitz &
    # Stegun 7.1.26 polynomial (max abs err ~1.5e-7). The divide rides the EUP
    # via pl.reciprocal (review suggestion).
    a1, a2, a3, a4, a5 = (0.254829592, -0.284496736, 1.421413741,
                          -1.453152027, 1.061405429)
    p = 0.3275911
    az = jnp.abs(z)
    t = pl.reciprocal(1.0 + p * az, approx=True)
    poly = ((((a5 * t + a4) * t + a3) * t + a2) * t + a1) * t
    e = 1.0 - poly * jnp.exp(-az * az)
    return jnp.where(z >= 0, e, -e)


def _gelu(x):
    # erf-based GELU, matching torch.nn.GELU() default
    return 0.5 * x * (1.0 + _erf(x * (1.0 / math.sqrt(2.0))))


# ----------------------------------------------------------------------------
# fused kernel: for every selected period,
#   Inception_Block_V1 -> GELU -> Inception_Block_V1 -> softmax-weighted sum,
# plus the residual, all in one grid step per batch block.
# ----------------------------------------------------------------------------
def _times_block_kernel(pw_ref, x_ref, w1_ref, b1_ref, w2_ref, b2_ref,
                        mask_ref, o_ref, xpad_ref, mid_ref, col1_ref,
                        col2_ref, *, periods, Ls, padfs, K, bt, lr1, tr):
    """Grid: (B // bt,), one batch block per step ("parallel").

    pw_ref  : SMEM (B*k_u,) f32      softmax weight per (batch, unique period)
    x_ref   : (bt, T, Cin)  f32      raw input block
    w1_ref  : (K*K*Cin, Cmid) bf16   conv1 weights, im2col layout
    b1_ref  : (1, Cmid) f32
    w2_ref  : (K*K*Cmid, Cout) bf16  conv2 weights, im2col layout
    b2_ref  : (1, Cout) f32
    mask_ref: (k_u, K, maxL, 1) bf16 per-period / per-dw column-validity masks
    o_ref   : (bt, T, Cout) f32
    xpad_ref: VMEM (bt, maxLp2, Cin)  f32  haloed folded input
    mid_ref : VMEM (bt, maxLp2, Cmid) f32  haloed GELU intermediate
    col1_ref: VMEM (bt*lr1, K*K*Cin)  bf16 im2col buffer for conv1
    col2_ref: VMEM (bt*tr,  K*K*Cmid) bf16 im2col buffer for conv2
    """
    P = (K - 1) // 2
    T = x_ref.shape[1]
    cin = xpad_ref.shape[2]
    cmid = mid_ref.shape[2]
    k_u = len(periods)
    gb0 = pl.program_id(0) * bt          # global batch index of local b == 0

    # residual accumulators (exact f32 x), one (T, Cout) slab per local batch
    out_acc = [x_ref[b, :, :] for b in range(bt)]

    for pi in range(k_u):
        period, L, padf = periods[pi], Ls[pi], padfs[pi]
        lp2 = L + 2 * padf
        m1 = (bt - 1) * lr1 + L          # live rows fed to the conv1 dot
        m2 = (bt - 1) * tr + T           # live rows fed to the conv2 dot

        # ---- stage the zero-haloed folded input (and zero mid's halos) ----
        # Scratch persists across the *parallel* batch grid, so halos are
        # re-zeroed every step; interior rows are always rewritten below.
        for b in range(bt):
            xpad_ref[b, 0:padf, :] = jnp.zeros((padf, cin), jnp.float32)
            xpad_ref[b, padf + T:lp2, :] = jnp.zeros((lp2 - padf - T, cin),
                                                     jnp.float32)
            xpad_ref[b, padf:padf + T, :] = x_ref[b, :, :]
            mid_ref[b, 0:padf, :] = jnp.zeros((padf, cmid), jnp.float32)
            mid_ref[b, padf + L:lp2, :] = jnp.zeros((padf, cmid), jnp.float32)

        # ---- im2col gather for conv1 (mask folded in, bf16) ---------------
        for dh in range(K):
            for dw in range(K):
                tap = dh * K + dw
                shift = (dh - P) * period + (dw - P)      # static per tap
                for b in range(bt):
                    slab = xpad_ref[b, padf + shift:padf + shift + L, :]
                    slab = slab.astype(jnp.bfloat16)
                    if dw != P:                           # center col: no mask
                        slab = slab * mask_ref[pi, dw, 0:L, :]
                    col1_ref[b * lr1:b * lr1 + L,
                             tap * cin:(tap + 1) * cin] = slab

        # conv1 (d_model -> d_ff): ONE fat MXU dot, contraction K*K*Cin
        acc1 = jnp.dot(col1_ref[0:m1, :], w1_ref[...],
                       preferred_element_type=jnp.float32)
        h = _gelu(acc1 + b1_ref[...])                     # (m1, Cmid) f32

        # ---- stage GELU intermediate into its haloed buffer ---------------
        for b in range(bt):
            mid_ref[b, padf:padf + L, :] = h[b * lr1:b * lr1 + L, :]

        # ---- im2col gather for conv2 (only the T surviving rows) ----------
        for dh in range(K):
            for dw in range(K):
                tap = dh * K + dw
                shift = (dh - P) * period + (dw - P)
                for b in range(bt):
                    slab = mid_ref[b, padf + shift:padf + shift + T, :]
                    slab = slab.astype(jnp.bfloat16)
                    if dw != P:
                        slab = slab * mask_ref[pi, dw, 0:T, :]
                    col2_ref[b * tr:b * tr + T,
                             tap * cmid:(tap + 1) * cmid] = slab

        # conv2 (d_ff -> d_model): ONE fat MXU dot, contraction K*K*Cmid
        acc2 = jnp.dot(col2_ref[0:m2, :], w2_ref[...],
                       preferred_element_type=jnp.float32)
        conv = acc2 + b2_ref[...]                         # (m2, Cout) f32

        # ---- softmax(period_weight)-weighted accumulation ------------------
        for b in range(bt):
            w_b = pw_ref[(gb0 + b) * k_u + pi]            # SMEM scalar
            out_acc[b] = out_acc[b] + w_b * conv[b * tr:b * tr + T, :]

    # TODO(synk): repack lane-dense (last dim >= 128) when d_model < 128.
    for b in range(bt):
        o_ref[b, :, :] = out_acc[b]


def _fused_times_call(pw_flat, x, w1c, b1, w2c, b2, masks, *, periods, Ls,
                      padfs, K, bt):
    """Single pallas_call covering all selected periods + residual combine."""
    B, T, cin = x.shape
    cmid = b1.shape[1]
    cout = b2.shape[1]
    k_u = len(periods)
    maxL = max(Ls)
    maxLp2 = max(L + 2 * pf for L, pf in zip(Ls, padfs))
    lr1 = _round_up(maxL, 16)            # bf16-tile-aligned per-batch stride
    tr = _round_up(T, 16)

    kernel = functools.partial(_times_block_kernel, periods=periods, Ls=Ls,
                               padfs=padfs, K=K, bt=bt, lr1=lr1, tr=tr)

    flops = 2 * B * K * K * sum(L * cin * cmid + T * cmid * cout for L in Ls)
    cost = pl.CostEstimate(
        flops=int(flops),
        transcendentals=int(B * sum(Ls) * cmid),
        bytes_accessed=int(x.size * 4 + B * T * cout * 4 + w1c.size * 2
                           + w2c.size * 2 + masks.size * 2 + pw_flat.size * 4),
    )

    grid_spec = pltpu.PrefetchScalarGridSpec(
        num_scalar_prefetch=0,
        grid=(B // bt,),
        in_specs=[
            # per-(batch, period) softmax weights: flat scalars in SMEM
            pl.BlockSpec(memory_space=pltpu.MemorySpace.SMEM),
            pl.BlockSpec((bt, T, cin), lambda i: (i, 0, 0)),        # x (f32)
            # weights / biases / masks: whole-array resident VMEM blocks.
            # TODO(synk): pipeline_mode=pl.Buffered(1) at production d_ff.
            pl.BlockSpec((K * K * cin, cmid), lambda i: (0, 0)),
            pl.BlockSpec((1, cmid), lambda i: (0, 0)),
            pl.BlockSpec((K * K * cmid, cout), lambda i: (0, 0)),
            pl.BlockSpec((1, cout), lambda i: (0, 0)),
            pl.BlockSpec((k_u, K, maxL, 1), lambda i: (0, 0, 0, 0)),
        ],
        out_specs=pl.BlockSpec((bt, T, cout), lambda i: (i, 0, 0)),
        scratch_shapes=[
            pltpu.VMEM((bt, maxLp2, cin), jnp.float32),
            pltpu.VMEM((bt, maxLp2, cmid), jnp.float32),
            pltpu.VMEM((bt * lr1, K * K * cin), jnp.bfloat16),
            pltpu.VMEM((bt * tr, K * K * cmid), jnp.bfloat16),
        ],
    )

    return pl.pallas_call(
        kernel,
        out_shape=jax.ShapeDtypeStruct((B, T, cout), jnp.float32),
        grid_spec=grid_spec,
        compiler_params=pltpu.CompilerParams(
            dimension_semantics=("parallel",),
            vmem_limit_bytes=32 * 1024 * 1024),
        cost_estimate=cost,
    )(pw_flat, x, w1c, b1, w2c, b2, masks)


# ----------------------------------------------------------------------------
# glue: FFT period selection (matches torch FFT_for_Period)
# ----------------------------------------------------------------------------
def fft_for_period(x, k=2):
    # TODO(synk): rfft/top-k stay in plain JAX + host numpy: the selected
    # periods determine static kernel shapes (mirrors .detach().cpu().numpy()).
    xf = jnp.fft.rfft(x, axis=1)
    amp = jnp.abs(xf)                          # (B, F, N)
    frequency_list = amp.mean(0).mean(-1)      # (F,)
    frequency_list = frequency_list.at[0].set(0.0)
    _, top = lax.top_k(frequency_list, k)
    top_np = np.asarray(jax.device_get(top))
    period = x.shape[1] // top_np              # numpy int array, shape (k,)
    period_weight = amp.mean(-1)[:, top_np]    # (B, k)
    return period, period_weight


# ----------------------------------------------------------------------------
# parameters: two Inception_Block_V1 blocks (d_model->d_ff, d_ff->d_model)
# ----------------------------------------------------------------------------
def init_inception_params(key, d_model, d_ff, num_kernels):
    """Deterministic init matching Inception_Block_V1: num_kernels Conv2d
    kernels of size 2i+1 (padding i), kaiming-normal weights, zero biases.
    mean-over-kernels is folded into a single combined KxK kernel (exact)."""
    P = num_kernels - 1
    K = 2 * P + 1
    keys = jax.random.split(key, 2 * num_kernels)

    def build(subkeys, cin, cout):
        W = jnp.zeros((K, K, cin, cout), jnp.float32)
        for i in range(num_kernels):
            ksz = 2 * i + 1
            fan_in = cin * ksz * ksz
            w_oihw = (jax.random.normal(subkeys[i], (cout, cin, ksz, ksz),
                                        jnp.float32)
                      * np.float32(math.sqrt(2.0 / fan_in)))
            pad = P - i
            W = W.at[pad:pad + ksz, pad:pad + ksz, :, :].add(
                jnp.transpose(w_oihw, (2, 3, 1, 0)))
        W = W / num_kernels
        b = jnp.zeros((1, cout), jnp.float32)   # torch init: constant_(bias, 0)
        return W, b

    w1, b1 = build(keys[:num_kernels], d_model, d_ff)
    w2, b2 = build(keys[num_kernels:], d_ff, d_model)
    return {"w1": w1, "b1": b1, "w2": w2, "b2": b2}


# ----------------------------------------------------------------------------
# TimesBlock forward
# ----------------------------------------------------------------------------
def times_block_forward(x, params, *, seq_len, pred_len, top_k):
    B, T, N = x.shape
    total = seq_len + pred_len
    # This TimesBlock variant appends `length - total + 1` zero rows, which is
    # only shape-consistent when x carries total - 1 rows.
    assert T == total - 1, (T, total)

    period_list, period_weight = fft_for_period(x, top_k)

    # softmax over the k period weights (k*B scalars) in the wrapper
    pw = jax.nn.softmax(period_weight.astype(jnp.float32), axis=1)   # (B, k)

    # de-duplicate equal periods (identical conv outputs) by summing weights
    period_np = np.asarray(period_list, dtype=np.int64)
    uniq, inv = np.unique(period_np, return_inverse=True)
    inv = np.asarray(inv).reshape(-1)
    agg = np.zeros((top_k, len(uniq)), np.float32)
    agg[np.arange(top_k), inv] = 1.0
    pw_u = pw @ jnp.asarray(agg)              # (B, k_u)
    pw_flat = pw_u.reshape(-1)                # (B*k_u,), SMEM layout

    K = params["w1"].shape[0]
    P = (K - 1) // 2
    periods, Ls, padfs = [], [], []
    for per in uniq.tolist():
        per = int(per)
        if total % per != 0:
            L = (total // per + 1) * per       # torch padding branch
        else:
            L = total                          # (kernel still pads L - T rows)
        periods.append(per)
        Ls.append(L)
        padfs.append(P * per + P)

    # per-(period, dw) column-validity masks for row wrap-around (static)
    maxL = max(Ls)
    mask_np = np.zeros((len(periods), K, maxL, 1), np.float32)
    for pi, (per, L) in enumerate(zip(periods, Ls)):
        cols = np.arange(L) % per
        for dw in range(K):
            valid = (cols + dw - P >= 0) & (cols + dw - P < per)
            mask_np[pi, dw, :L, 0] = valid.astype(np.float32)
    masks = jnp.asarray(mask_np, dtype=jnp.bfloat16)

    # im2col weight layout; bf16 MXU inputs, f32 biases / accumulation
    w1c = params["w1"].astype(jnp.bfloat16).reshape(K * K * N, -1)
    w2c = params["w2"].astype(jnp.bfloat16).reshape(-1, N)

    bt = _pick_bt(B)
    y = _fused_times_call(pw_flat, x.astype(jnp.float32), w1c, params["b1"],
                          w2c, params["b2"], masks,
                          periods=tuple(periods), Ls=tuple(Ls),
                          padfs=tuple(padfs), K=K, bt=bt)
    return y


# ----------------------------------------------------------------------------
if __name__ == "__main__":
    # configs: seq_len=12, pred_len=5, top_k=2, d_model=16, d_ff=32,
    # num_kernels=2.  This TimesBlock variant slices to seq_len+pred_len-1,
    # so x has T = 16 rows.
    B, seq_len, pred_len = 2, 12, 5
    d_model, d_ff, top_k, num_kernels = 16, 32, 2, 2
    T = seq_len + pred_len - 1

    key = jax.random.PRNGKey(0)
    kx, kp = jax.random.split(key)
    x = jax.random.normal(kx, (B, T, d_model), jnp.float32)
    params = init_inception_params(kp, d_model, d_ff, num_kernels)

    y = times_block_forward(x, params, seq_len=seq_len, pred_len=pred_len,
                            top_k=top_k)
    y = jax.block_until_ready(y)

    assert y.shape == (B, T, d_model), y.shape
    assert bool(jnp.all(jnp.isfinite(y)))
    print("KERNEL_OK")
</pallas_src>

<mosaic_0001>
module attributes {stable_mosaic.version = 11 : i64} {
  func.func @_times_block_kernel(%arg0: i32, %arg1: memref<4xf32, #tpu.memory_space<smem>>, %arg2: memref<1x16x16xf32, #tpu.memory_space<vmem>>, %arg3: memref<144x32xbf16, #tpu.memory_space<vmem>>, %arg4: memref<1x32xf32, #tpu.memory_space<vmem>>, %arg5: memref<288x16xbf16, #tpu.memory_space<vmem>>, %arg6: memref<1x16xf32, #tpu.memory_space<vmem>>, %arg7: memref<2x3x20x1xbf16, #tpu.memory_space<vmem>>, %arg8: memref<1x16x16xf32, #tpu.memory_space<vmem>>, %arg9: memref<1x32x16xf32, #tpu.memory_space<vmem>>, %arg10: memref<1x32x32xf32, #tpu.memory_space<vmem>>, %arg11: memref<32x144xbf16, #tpu.memory_space<vmem>>, %arg12: memref<16x288xbf16, #tpu.memory_space<vmem>>) attributes {dimension_semantics = [#tpu.dimension_semantics<parallel>], iteration_bounds = array<i64: 2>, scalar_prefetch = 0 : i64, scratch_operands = 4 : i64, tpu.core_type = #tpu.core_type<tc>, window_params = [{transform_indices = @transform_0, window_bounds = array<i64: 4>}, {transform_indices = @transform_1, window_bounds = array<i64: 1, 16, 16>}, {pipeline_mode = #tpu.pipeline_mode<synchronous>, transform_indices = @transform_2, window_bounds = array<i64: 144, 32>}, {pipeline_mode = #tpu.pipeline_mode<synchronous>, transform_indices = @transform_3, window_bounds = array<i64: 1, 32>}, {pipeline_mode = #tpu.pipeline_mode<synchronous>, transform_indices = @transform_4, window_bounds = array<i64: 288, 16>}, {pipeline_mode = #tpu.pipeline_mode<synchronous>, transform_indices = @transform_5, window_bounds = array<i64: 1, 16>}, {pipeline_mode = #tpu.pipeline_mode<synchronous>, transform_indices = @transform_6, window_bounds = array<i64: 2, 3, 20, 1>}, {transform_indices = @transform_7, window_bounds = array<i64: 1, 16, 16>}]} {
    %c1_i32 = arith.constant 1 : i32
    %0 = arith.muli %arg0, %c1_i32 : i32
    %c0 = arith.constant 0 : index
    %c0_0 = arith.constant 0 : index
    %c0_1 = arith.constant 0 : index
    %1 = vector.load %arg2[%c0, %c0_0, %c0_1] : memref<1x16x16xf32, #tpu.memory_space<vmem>>, vector<1x16x16xf32>
    %2 = vector.shape_cast %1 : vector<1x16x16xf32> to vector<16x16xf32>
    %cst = arith.constant 0.000000e+00 : f32
    %3 = vector.broadcast %cst : f32 to vector<3x16xf32>
    %c0_2 = arith.constant 0 : index
    %c0_3 = arith.constant 0 : index
    %c0_4 = arith.constant 0 : index
    %4 = vector.load %arg9[%c0_2, %c0_3, %c0_4] : memref<1x32x16xf32, #tpu.memory_space<vmem>>, vector<1x3x16xf32>
    %5 = vector.shape_cast %4 : vector<1x3x16xf32> to vector<3x16xf32>
    %6 = vector.shape_cast %3 : vector<3x16xf32> to vector<1x3x16xf32>
    tpu.vector_store %arg9[%c0_2, %c0_3, %c0_4], %6 {strides = array<i32>} : memref<1x32x16xf32, #tpu.memory_space<vmem>>, vector<1x3x16xf32>,
    %cst_5 = arith.constant 0.000000e+00 : f32
    %7 = vector.broadcast %cst_5 : f32 to vector<5x16xf32>
    %c0_6 = arith.constant 0 : index
    %c19 = arith.constant 19 : index
    %c0_7 = arith.constant 0 : index
    %8 = vector.load %arg9[%c0_6, %c19, %c0_7] : memref<1x32x16xf32, #tpu.memory_space<vmem>>, vector<1x5x16xf32>
    %9 = vector.shape_cast %8 : vector<1x5x16xf32> to vector<5x16xf32>
    %10 = vector.shape_cast %7 : vector<5x16xf32> to vector<1x5x16xf32>
    tpu.vector_store %arg9[%c0_6, %c19, %c0_7], %10 {strides = array<i32>} : memref<1x32x16xf32, #tpu.memory_space<vmem>>, vector<1x5x16xf32>,
    %c0_8 = arith.constant 0 : index
    %c0_9 = arith.constant 0 : index
    %c0_10 = arith.constant 0 : index
    %11 = vector.load %arg2[%c0_8, %c0_9, %c0_10] : memref<1x16x16xf32, #tpu.memory_space<vmem>>, vector<1x16x16xf32>
    %12 = vector.shape_cast %11 : vector<1x16x16xf32> to vector<16x16xf32>
    %c0_11 = arith.constant 0 : index
    %c3 = arith.constant 3 : index
    %c0_12 = arith.constant 0 : index
    %13 = vector.load %arg9[%c0_11, %c3, %c0_12] : memref<1x32x16xf32, #tpu.memory_space<vmem>>, vector<1x16x16xf32>
    %14 = vector.shape_cast %13 : vector<1x16x16xf32> to vector<16x16xf32>
    %15 = vector.shape_cast %12 : vector<16x16xf32> to vector<1x16x16xf32>
    tpu.vector_store %arg9[%c0_11, %c3, %c0_12], %15 {strides = array<i32>} : memref<1x32x16xf32, #tpu.memory_space<vmem>>, vector<1x16x16xf32>,
    %cst_13 = arith.constant 0.000000e+00 : f32
    %16 = vector.broadcast %cst_13 : f32 to vector<3x32xf32>
    %c0_14 = arith.constant 0 : index
    %c0_15 = arith.constant 0 : index
    %c0_16 = arith.constant 0 : index
    %17 = vector.load %arg10[%c0_14, %c0_15, %c0_16] : memref<1x32x32xf32, #tpu.memory_space<vmem>>, vector<1x3x32xf32>
    %18 = vector.shape_cast %17 : vector<1x3x32xf32> to vector<3x32xf32>
    %19 = vector.shape_cast %16 : vector<3x32xf32> to vector<1x3x32xf32>
    tpu.vector_store %arg10[%c0_14, %c0_15, %c0_16], %19 {strides = array<i32>} : memref<1x32x32xf32, #tpu.memory_space<vmem>>, vector<1x3x32xf32>,
    %cst_17 = arith.constant 0.000000e+00 : f32
    %20 = vector.broadcast %cst_17 : f32 to vector<3x32xf32>
    %c0_18 = arith.constant 0 : index
    %c21 = arith.constant 21 : index
    %c0_19 = arith.constant 0 : index
    %21 = vector.load %arg10[%c0_18, %c21, %c0_19] : memref<1x32x32xf32, #tpu.memory_space<vmem>>, vector<1x3x32xf32>
    %22 = vector.shape_cast %21 : vector<1x3x32xf32> to vector<3x32xf32>
    %23 = vector.shape_cast %20 : vector<3x32xf32> to vector<1x3x32xf32>
    tpu.vector_store %arg10[%c0_18, %c21, %c0_19], %23 {strides = array<i32>} : memref<1x32x32xf32, #tpu.memory_space<vmem>>, vector<1x3x32xf32>,
    %c0_20 = arith.constant 0 : index
    %c0_21 = arith.constant 0 : index
    %c0_22 = arith.constant 0 : index
    %24 = vector.load %arg9[%c0_20, %c0_21, %c0_22] : memref<1x32x16xf32, #tpu.memory_space<vmem>>, vector<1x18x16xf32>
    %25 = vector.shape_cast %24 : vector<1x18x16xf32> to vector<18x16xf32>
    %26 = arith.truncf %25 : vector<18x16xf32> to vector<18x16xbf16>
    %c0_23 = arith.constant 0 : index
    %c0_24 = arith.constant 0 : index
    %c0_25 = arith.constant 0 : index
    %c0_26 = arith.constant 0 : index
    %27 = vector.load %arg7[%c0_23, %c0_24, %c0_25, %c0_26] : memref<2x3x20x1xbf16, #tpu.memory_space<vmem>>, vector<1x1x18x1xbf16>
    %28 = vector.shape_cast %27 : vector<1x1x18x1xbf16> to vector<18x1xbf16>
    %29 = vector.broadcast %28 : vector<18x1xbf16> to vector<18x16xbf16>
    %30 = arith.mulf %26, %29 : vector<18x16xbf16>
    %c0_27 = arith.constant 0 : index
    %c0_28 = arith.constant 0 : index
    %31 = vector.load %arg11[%c0_27, %c0_28] : memref<32x144xbf16, #tpu.memory_space<vmem>>, vector<18x16xbf16>
    tpu.vector_store %arg11[%c0_27, %c0_28], %30 {strides = array<i32>} : memref<32x144xbf16, #tpu.memory_space<vmem>>, vector<18x16xbf16>,
    %c0_29 = arith.constant 0 : index
    %c1 = arith.constant 1 : index
    %c0_30 = arith.constant 0 : index
    %32 = vector.load %arg9[%c0_29, %c1, %c0_30] : memref<1x32x16xf32, #tpu.memory_space<vmem>>, vector<1x18x16xf32>
    %33 = vector.shape_cast %32 : vector<1x18x16xf32> to vector<18x16xf32>
    %34 = arith.truncf %33 : vector<18x16xf32> to vector<18x16xbf16>
    %c0_31 = arith.constant 0 : index
    %c16 = arith.constant 16 : index
    %35 = vector.load %arg11[%c0_31, %c16] : memref<32x144xbf16, #tpu.memory_space<vmem>>, vector<18x16xbf16>
    tpu.vector_store %arg11[%c0_31, %c16], %34 {strides = array<i32>} : memref<32x144xbf16, #tpu.memory_space<vmem>>, vector<18x16xbf16>,
    %c0_32 = arith.constant 0 : index
    %c2 = arith.constant 2 : index
    %c0_33 = arith.constant 0 : index
    %36 = vector.load %arg9[%c0_32, %c2, %c0_33] : memref<1x32x16xf32, #tpu.memory_space<vmem>>, vector<1x18x16xf32>
    %37 = vector.shape_cast %36 : vector<1x18x16xf32> to vector<18x16xf32>
    %38 = arith.truncf %37 : vector<18x16xf32> to vector<18x16xbf16>
    %c0_34 = arith.constant 0 : index
    %c2_35 = arith.constant 2 : index
    %c0_36 = arith.constant 0 : index
    %c0_37 = arith.constant 0 : index
    %39 = vector.load %arg7[%c0_34, %c2_35, %c0_36, %c0_37] : memref<2x3x20x1xbf16, #tpu.memory_space<vmem>>, vector<1x1x18x1xbf16>
    %40 = vector.shape_cast %39 : vector<1x1x18x1xbf16> to vector<18x1xbf16>
    %41 = vector.broadcast %40 : vector<18x1xbf16> to vector<18x16xbf16>
    %42 = arith.mulf %38, %41 : vector<18x16xbf16>
    %c0_38 = arith.constant 0 : index
    %c32 = arith.constant 32 : index
    %43 = vector.load %arg11[%c0_38, %c32] : memref<32x144xbf16, #tpu.memory_space<vmem>>, vector<18x16xbf16>
    tpu.vector_store %arg11[%c0_38, %c32], %42 {strides = array<i32>} : memref<32x144xbf16, #tpu.memory_space<vmem>>, vector<18x16xbf16>,
    %c0_39 = arith.constant 0 : index
    %c2_40 = arith.constant 2 : index
    %c0_41 = arith.constant 0 : index
    %44 = vector.load %arg9[%c0_39, %c2_40, %c0_41] : memref<1x32x16xf32, #tpu.memory_space<vmem>>, vector<1x18x16xf32>
    %45 = vector.shape_cast %44 : vector<1x18x16xf32> to vector<18x16xf32>
    %46 = arith.truncf %45 : vector<18x16xf32> to vector<18x16xbf16>
    %c0_42 = arith.constant 0 : index
    %c0_43 = arith.constant 0 : index
    %c0_44 = arith.constant 0 : index
    %c0_45 = arith.constant 0 : index
    %47 = vector.load %arg7[%c0_42, %c0_43, %c0_44, %c0_45] : memref<2x3x20x1xbf16, #tpu.memory_space<vmem>>, vector<1x1x18x1xbf16>
    %48 = vector.shape_cast %47 : vector<1x1x18x1xbf16> to vector<18x1xbf16>
    %49 = vector.broadcast %48 : vector<18x1xbf16> to vector<18x16xbf16>
    %50 = arith.mulf %46, %49 : vector<18x16xbf16>
    %c0_46 = arith.constant 0 : index
    %c48 = arith.constant 48 : index
    %51 = vector.load %arg11[%c0_46, %c48] : memref<32x144xbf16, #tpu.memory_space<vmem>>, vector<18x16xbf16>
    tpu.vector_store %arg11[%c0_46, %c48], %50 {strides = array<i32>} : memref<32x144xbf16, #tpu.memory_space<vmem>>, vector<18x16xbf16>,
    %c0_47 = arith.constant 0 : index
    %c3_48 = arith.constant 3 : index
    %c0_49 = arith.constant 0 : index
    %52 = vector.load %arg9[%c0_47, %c3_48, %c0_49] : memref<1x32x16xf32, #tpu.memory_space<vmem>>, vector<1x18x16xf32>
    %53 = vector.shape_cast %52 : vector<1x18x16xf32> to vector<18x16xf32>
    %54 = arith.truncf %53 : vector<18x16xf32> to vector<18x16xbf16>
    %c0_50 = arith.constant 0 : index
    %c64 = arith.constant 64 : index
    %55 = vector.load %arg11[%c0_50, %c64] : memref<32x144xbf16, #tpu.memory_space<vmem>>, vector<18x16xbf16>
    tpu.vector_store %arg11[%c0_50, %c64], %54 {strides = array<i32>} : memref<32x144xbf16, #tpu.memory_space<vmem>>, vector<18x16xbf16>,
    %c0_51 = arith.constant 0 : index
    %c4 = arith.constant 4 : index
    %c0_52 = arith.constant 0 : index
    %56 = vector.load %arg9[%c0_51, %c4, %c0_52] : memref<1x32x16xf32, #tpu.memory_space<vmem>>, vector<1x18x16xf32>
    %57 = vector.shape_cast %56 : vector<1x18x16xf32> to vector<18x16xf32>
    %58 = arith.truncf %57 : vector<18x16xf32> to vector<18x16xbf16>
    %c0_53 = arith.constant 0 : index
    %c2_54 = arith.constant 2 : index
    %c0_55 = arith.constant 0 : index
    %c0_56 = arith.constant 0 : index
    %59 = vector.load %arg7[%c0_53, %c2_54, %c0_55, %c0_56] : memref<2x3x20x1xbf16, #tpu.memory_space<vmem>>, vector<1x1x18x1xbf16>
    %60 = vector.shape_cast %59 : vector<1x1x18x1xbf16> to vector<18x1xbf16>
    %61 = vector.broadcast %60 : vector<18x1xbf16> to vector<18x16xbf16>
    %62 = arith.mulf %58, %61 : vector<18x16xbf16>
    %c0_57 = arith.constant 0 : index
    %c80 = arith.constant 80 : index
    %63 = vector.load %arg11[%c0_57, %c80] : memref<32x144xbf16, #tpu.memory_space<vmem>>, vector<18x16xbf16>
    tpu.vector_store %arg11[%c0_57, %c80], %62 {strides = array<i32>} : memref<32x144xbf16, #tpu.memory_space<vmem>>, vector<18x16xbf16>,
    %c0_58 = arith.constant 0 : index
    %c4_59 = arith.constant 4 : index
    %c0_60 = arith.constant 0 : index
    %64 = vector.load %arg9[%c0_58, %c4_59, %c0_60] : memref<1x32x16xf32, #tpu.memory_space<vmem>>, vector<1x18x16xf32>
    %65 = vector.shape_cast %64 : vector<1x18x16xf32> to vector<18x16xf32>
    %66 = arith.truncf %65 : vector<18x16xf32> to vector<18x16xbf16>
    %c0_61 = arith.constant 0 : index
    %c0_62 = arith.constant 0 : index
    %c0_63 = arith.constant 0 : index
    %c0_64 = arith.constant 0 : index
    %67 = vector.load %arg7[%c0_61, %c0_62, %c0_63, %c0_64] : memref<2x3x20x1xbf16, #tpu.memory_space<vmem>>, vector<1x1x18x1xbf16>
    %68 = vector.shape_cast %67 : vector<1x1x18x1xbf16> to vector<18x1xbf16>
    %69 = vector.broadcast %68 : vector<18x1xbf16> to vector<18x16xbf16>
    %70 = arith.mulf %66, %69 : vector<18x16xbf16>
    %c0_65 = arith.constant 0 : index
    %c96 = arith.constant 96 : index
    %71 = vector.load %arg11[%c0_65, %c96] : memref<32x144xbf16, #tpu.memory_space<vmem>>, vector<18x16xbf16>
    tpu.vector_store %arg11[%c0_65, %c96], %70 {strides = array<i32>} : memref<32x144xbf16, #tpu.memory_space<vmem>>, vector<18x16xbf16>,
    %c0_66 = arith.constant 0 : index
    %c5 = arith.constant 5 : index
    %c0_67 = arith.constant 0 : index
    %72 = vector.load %arg9[%c0_66, %c5, %c0_67] : memref<1x32x16xf32, #tpu.memory_space<vmem>>, vector<1x18x16xf32>
    %73 = vector.shape_cast %72 : vector<1x18x16xf32> to vector<18x16xf32>
    %74 = arith.truncf %73 : vector<18x16xf32> to vector<18x16xbf16>
    %c0_68 = arith.constant 0 : index
    %c112 = arith.constant 112 : index
    %75 = vector.load %arg11[%c0_68, %c112] : memref<32x144xbf16, #tpu.memory_space<vmem>>, vector<18x16xbf16>
    tpu.vector_store %arg11[%c0_68, %c112], %74 {strides = array<i32>} : memref<32x144xbf16, #tpu.memory_space<vmem>>, vector<18x16xbf16>,
    %c0_69 = arith.constant 0 : index
    %c6 = arith.constant 6 : index
    %c0_70 = arith.constant 0 : index
    %76 = vector.load %arg9[%c0_69, %c6, %c0_70] : memref<1x32x16xf32, #tpu.memory_space<vmem>>, vector<1x18x16xf32>
    %77 = vector.shape_cast %76 : vector<1x18x16xf32> to vector<18x16xf32>
    %78 = arith.truncf %77 : vector<18x16xf32> to vector<18x16xbf16>
    %c0_71 = arith.constant 0 : index
    %c2_72 = arith.constant 2 : index
    %c0_73 = arith.constant 0 : index
    %c0_74 = arith.constant 0 : index
    %79 = vector.load %arg7[%c0_71, %c2_72, %c0_73, %c0_74] : memref<2x3x20x1xbf16, #tpu.memory_space<vmem>>, vector<1x1x18x1xbf16>
    %80 = vector.shape_cast %79 : vector<1x1x18x1xbf16> to vector<18x1xbf16>
    %81 = vector.broadcast %80 : vector<18x1xbf16> to vector<18x16xbf16>
    %82 = arith.mulf %78, %81 : vector<18x16xbf16>
    %c0_75 = arith.constant 0 : index
    %c128 = arith.constant 128 : index
    %83 = vector.load %arg11[%c0_75, %c128] : memref<32x144xbf16, #tpu.memory_space<vmem>>, vector<18x16xbf16>
    tpu.vector_store %arg11[%c0_75, %c128], %82 {strides = array<i32>} : memref<32x144xbf16, #tpu.memory_space<vmem>>, vector<18x16xbf16>,
    %c0_76 = arith.constant 0 : index
    %c0_77 = arith.constant 0 : index
    %84 = vector.load %arg11[%c0_76, %c0_77] : memref<32x144xbf16, #tpu.memory_space<vmem>>, vector<18x144xbf16>
    %c0_78 = arith.constant 0 : index
    %c0_79 = arith.constant 0 : index
    %85 = vector.load %arg3[%c0_78, %c0_79] : memref<144x32xbf16, #tpu.memory_space<vmem>>, vector<144x32xbf16>
    %cst_80 = arith.constant dense<0.000000e+00> : vector<18x32xf32>
    %86 = tpu.matmul %84, %85, %cst_80 {dimension_numbers = #tpu.dot_dimension_numbers<[1], [0], [0], [1], [0, 0, 1, 1], [], []>} : vector<18x144xbf16>, vector<144x32xbf16>, vector<18x32xf32> -> vector<18x32xf32>
    %c0_81 = arith.constant 0 : index
    %c0_82 = arith.constant 0 : index
    %87 = vector.load %arg4[%c0_81, %c0_82] : memref<1x32xf32, #tpu.memory_space<vmem>>, vector<1x32xf32>
    %88 = vector.broadcast %87 : vector<1x32xf32> to vector<18x32xf32>
    %89 = arith.addf %86, %88 : vector<18x32xf32>
    %cst_83 = arith.constant 5.000000e-01 : f32
    %90 = vector.broadcast %cst_83 : f32 to vector<18x32xf32>
    %91 = arith.mulf %90, %89 : vector<18x32xf32>
    %cst_84 = arith.constant 0.707106769 : f32
    %92 = vector.broadcast %cst_84 : f32 to vector<18x32xf32>
    %93 = arith.mulf %89, %92 : vector<18x32xf32>
    %94 = math.absf %93 : vector<18x32xf32>
    %cst_85 = arith.constant 0.327591091 : f32
    %95 = vector.broadcast %cst_85 : f32 to vector<18x32xf32>
    %96 = arith.mulf %95, %94 : vector<18x32xf32>
    %cst_86 = arith.constant 1.000000e+00 : f32
    %97 = vector.broadcast %cst_86 : f32 to vector<18x32xf32>
    %98 = arith.addf %97, %96 : vector<18x32xf32>
    %99 = tpu.reciprocal %98 {approx = true} : vector<18x32xf32> -> vector<18x32xf32>
    %cst_87 = arith.constant 1.06140542 : f32
    %100 = vector.broadcast %cst_87 : f32 to vector<18x32xf32>
    %101 = arith.mulf %100, %99 : vector<18x32xf32>
    %cst_88 = arith.constant -1.45315206 : f32
    %102 = vector.broadcast %cst_88 : f32 to vector<18x32xf32>
    %103 = arith.addf %101, %102 : vector<18x32xf32>
    %104 = arith.mulf %103, %99 : vector<18x32xf32>
    %cst_89 = arith.constant 1.42141378 : f32
    %105 = vector.broadcast %cst_89 : f32 to vector<18x32xf32>
    %106 = arith.addf %104, %105 : vector<18x32xf32>
    %107 = arith.mulf %106, %99 : vector<18x32xf32>
    %cst_90 = arith.constant -0.284496725 : f32
    %108 = vector.broadcast %cst_90 : f32 to vector<18x32xf32>
    %109 = arith.addf %107, %108 : vector<18x32xf32>
    %110 = arith.mulf %109, %99 : vector<18x32xf32>
    %cst_91 = arith.constant 0.254829586 : f32
    %111 = vector.broadcast %cst_91 : f32 to vector<18x32xf32>
    %112 = arith.addf %110, %111 : vector<18x32xf32>
    %113 = arith.mulf %112, %99 : vector<18x32xf32>
    %cst_92 = arith.constant 0.000000e+00 : f32
    %114 = vector.broadcast %cst_92 : f32 to vector<18x32xf32>
    %115 = arith.subf %114, %94 : vector<18x32xf32>
    %116 = arith.mulf %115, %94 : vector<18x32xf32>
    %117 = math.exp %116 : vector<18x32xf32>
    %118 = arith.mulf %113, %117 : vector<18x32xf32>
    %cst_93 = arith.constant 1.000000e+00 : f32
    %119 = vector.broadcast %cst_93 : f32 to vector<18x32xf32>
    %120 = arith.subf %119, %118 : vector<18x32xf32>
    %cst_94 = arith.constant 0.000000e+00 : f32
    %121 = vector.broadcast %cst_94 : f32 to vector<18x32xf32>
    %122 = arith.cmpf oge, %93, %121 : vector<18x32xf32>
    %cst_95 = arith.constant 0.000000e+00 : f32
    %123 = vector.broadcast %cst_95 : f32 to vector<18x32xf32>
    %124 = arith.subf %123, %120 : vector<18x32xf32>
    %125 = arith.select %122, %120, %124 : vector<18x32xi1>, vector<18x32xf32>
    %cst_96 = arith.constant 1.000000e+00 : f32
    %126 = vector.broadcast %cst_96 : f32 to vector<18x32xf32>
    %127 = arith.addf %126, %125 : vector<18x32xf32>
    %128 = arith.mulf %91, %127 : vector<18x32xf32>
    %c0_97 = arith.constant 0 : index
    %c3_98 = arith.constant 3 : index
    %c0_99 = arith.constant 0 : index
    %129 = vector.load %arg10[%c0_97, %c3_98, %c0_99] : memref<1x32x32xf32, #tpu.memory_space<vmem>>, vector<1x18x32xf32>
    %130 = vector.shape_cast %129 : vector<1x18x32xf32> to vector<18x32xf32>
    %131 = vector.shape_cast %128 : vector<18x32xf32> to vector<1x18x32xf32>
    tpu.vector_store %arg10[%c0_97, %c3_98, %c0_99], %131 {strides = array<i32>} : memref<1x32x32xf32, #tpu.memory_space<vmem>>, vector<1x18x32xf32>,
    %c0_100 = arith.constant 0 : index
    %c0_101 = arith.constant 0 : index
    %c0_102 = arith.constant 0 : index
    %132 = vector.load %arg10[%c0_100, %c0_101, %c0_102] : memref<1x32x32xf32, #tpu.memory_space<vmem>>, vector<1x16x32xf32>
    %133 = vector.shape_cast %132 : vector<1x16x32xf32> to vector<16x32xf32>
    %134 = arith.truncf %133 : vector<16x32xf32> to vector<16x32xbf16>
    %c0_103 = arith.constant 0 : index
    %c0_104 = arith.constant 0 : index
    %c0_105 = arith.constant 0 : index
    %c0_106 = arith.constant 0 : index
    %135 = vector.load %arg7[%c0_103, %c0_104, %c0_105, %c0_106] : memref<2x3x20x1xbf16, #tpu.memory_space<vmem>>, vector<1x1x16x1xbf16>
    %136 = vector.shape_cast %135 : vector<1x1x16x1xbf16> to vector<16x1xbf16>
    %137 = vector.broadcast %136 : vector<16x1xbf16> to vector<16x32xbf16>
    %138 = arith.mulf %134, %137 : vector<16x32xbf16>
    %c0_107 = arith.constant 0 : index
    %c0_108 = arith.constant 0 : index
    %139 = vector.load %arg12[%c0_107, %c0_108] : memref<16x288xbf16, #tpu.memory_space<vmem>>, vector<16x32xbf16>
    tpu.vector_store %arg12[%c0_107, %c0_108], %138 {strides = array<i32>} : memref<16x288xbf16, #tpu.memory_space<vmem>>, vector<16x32xbf16>,
    %c0_109 = arith.constant 0 : index
    %c1_110 = arith.constant 1 : index
    %c0_111 = arith.constant 0 : index
    %140 = vector.load %arg10[%c0_109, %c1_110, %c0_111] : memref<1x32x32xf32, #tpu.memory_space<vmem>>, vector<1x16x32xf32>
    %141 = vector.shape_cast %140 : vector<1x16x32xf32> to vector<16x32xf32>
    %142 = arith.truncf %141 : vector<16x32xf32> to vector<16x32xbf16>
    %c0_112 = arith.constant 0 : index
    %c32_113 = arith.constant 32 : index
    %143 = vector.load %arg12[%c0_112, %c32_113] : memref<16x288xbf16, #tpu.memory_space<vmem>>, vector<16x32xbf16>
    tpu.vector_store %arg12[%c0_112, %c32_113], %142 {strides = array<i32>} : memref<16x288xbf16, #tpu.memory_space<vmem>>, vector<16x32xbf16>,
    %c0_114 = arith.constant 0 : index
    %c2_115 = arith.constant 2 : index
    %c0_116 = arith.constant 0 : index
    %144 = vector.load %arg10[%c0_114, %c2_115, %c0_116] : memref<1x32x32xf32, #tpu.memory_space<vmem>>, vector<1x16x32xf32>
    %145 = vector.shape_cast %144 : vector<1x16x32xf32> to vector<16x32xf32>
    %146 = arith.truncf %145 : vector<16x32xf32> to vector<16x32xbf16>
    %c0_117 = arith.constant 0 : index
    %c2_118 = arith.constant 2 : index
    %c0_119 = arith.constant 0 : index
    %c0_120 = arith.constant 0 : index
    %147 = vector.load %arg7[%c0_117, %c2_118, %c0_119, %c0_120] : memref<2x3x20x1xbf16, #tpu.memory_space<vmem>>, vector<1x1x16x1xbf16>
    %148 = vector.shape_cast %147 : vector<1x1x16x1xbf16> to vector<16x1xbf16>
    %149 = vector.broadcast %148 : vector<16x1xbf16> to vector<16x32xbf16>
    %150 = arith.mulf %146, %149 : vector<16x32xbf16>
    %c0_121 = arith.constant 0 : index
    %c64_122 = arith.constant 64 : index
    %151 = vector.load %arg12[%c0_121, %c64_122] : memref<16x288xbf16, #tpu.memory_space<vmem>>, vector<16x32xbf16>
    tpu.vector_store %arg12[%c0_121, %c64_122], %150 {strides = array<i32>} : memref<16x288xbf16, #tpu.memory_space<vmem>>, vector<16x32xbf16>,
    %c0_123 = arith.constant 0 : index
    %c2_124 = arith.constant 2 : index
    %c0_125 = arith.constant 0 : index
    %152 = vector.load %arg10[%c0_123, %c2_124, %c0_125] : memref<1x32x32xf32, #tpu.memory_space<vmem>>, vector<1x16x32xf32>
    %153 = vector.shape_cast %152 : vector<1x16x32xf32> to vector<16x32xf32>
    %154 = arith.truncf %153 : vector<16x32xf32> to vector<16x32xbf16>
    %c0_126 = arith.constant 0 : index
    %c0_127 = arith.constant 0 : index
    %c0_128 = arith.constant 0 : index
    %c0_129 = arith.constant 0 : index
    %155 = vector.load %arg7[%c0_126, %c0_127, %c0_128, %c0_129] : memref<2x3x20x1xbf16, #tpu.memory_space<vmem>>, vector<1x1x16x1xbf16>
    %156 = vector.shape_cast %155 : vector<1x1x16x1xbf16> to vector<16x1xbf16>
    %157 = vector.broadcast %156 : vector<16x1xbf16> to vector<16x32xbf16>
    %158 = arith.mulf %154, %157 : vector<16x32xbf16>
    %c0_130 = arith.constant 0 : index
    %c96_131 = arith.constant 96 : index
    %159 = vector.load %arg12[%c0_130, %c96_131] : memref<16x288xbf16, #tpu.memory_space<vmem>>, vector<16x32xbf16>
    tpu.vector_store %arg12[%c0_130, %c96_131], %158 {strides = array<i32>} : memref<16x288xbf16, #tpu.memory_space<vmem>>, vector<16x32xbf16>,
    %c0_132 = arith.constant 0 : index
    %c3_133 = arith.constant 3 : index
    %c0_134 = arith.constant 0 : index
    %160 = vector.load %arg10[%c0_132, %c3_133, %c0_134] : memref<1x32x32xf32, #tpu.memory_space<vmem>>, vector<1x16x32xf32>
    %161 = vector.shape_cast %160 : vector<1x16x32xf32> to vector<16x32xf32>
    %162 = arith.truncf %161 : vector<16x32xf32> to vector<16x32xbf16>
    %c0_135 = arith.constant 0 : index
    %c128_136 = arith.constant 128 : index
    %163 = vector.load %arg12[%c0_135, %c128_136] : memref<16x288xbf16, #tpu.memory_space<vmem>>, vector<16x32xbf16>
    tpu.vector_store %arg12[%c0_135, %c128_136], %162 {strides = array<i32>} : memref<16x288xbf16, #tpu.memory_space<vmem>>, vector<16x32xbf16>,
    %c0_137 = arith.constant 0 : index
    %c4_138 = arith.constant 4 : index
    %c0_139 = arith.constant 0 : index
    %164 = vector.load %arg10[%c0_137, %c4_138, %c0_139] : memref<1x32x32xf32, #tpu.memory_space<vmem>>, vector<1x16x32xf32>
    %165 = vector.shape_cast %164 : vector<1x16x32xf32> to vector<16x32xf32>
    %166 = arith.truncf %165 : vector<16x32xf32> to vector<16x32xbf16>
    %c0_140 = arith.constant 0 : index
    %c2_141 = arith.constant 2 : index
    %c0_142 = arith.constant 0 : index
    %c0_143 = arith.constant 0 : index
    %167 = vector.load %arg7[%c0_140, %c2_141, %c0_142, %c0_143] : memref<2x3x20x1xbf16, #tpu.memory_space<vmem>>, vector<1x1x16x1xbf16>
    %168 = vector.shape_cast %167 : vector<1x1x16x1xbf16> to vector<16x1xbf16>
    %169 = vector.broadcast %168 : vector<16x1xbf16> to vector<16x32xbf16>
    %170 = arith.mulf %166, %169 : vector<16x32xbf16>
    %c0_144 = arith.constant 0 : index
    %c160 = arith.constant 160 : index
    %171 = vector.load %arg12[%c0_144, %c160] : memref<16x288xbf16, #tpu.memory_space<vmem>>, vector<16x32xbf16>
    tpu.vector_store %arg12[%c0_144, %c160], %170 {strides = array<i32>} : memref<16x288xbf16, #tpu.memory_space<vmem>>, vector<16x32xbf16>,
    %c0_145 = arith.constant 0 : index
    %c4_146 = arith.constant 4 : index
    %c0_147 = arith.constant 0 : index
    %172 = vector.load %arg10[%c0_145, %c4_146, %c0_147] : memref<1x32x32xf32, #tpu.memory_space<vmem>>, vector<1x16x32xf32>
    %173 = vector.shape_cast %172 : vector<1x16x32xf32> to vector<16x32xf32>
    %174 = arith.truncf %173 : vector<16x32xf32> to vector<16x32xbf16>
    %c0_148 = arith.constant 0 : index
    %c0_149 = arith.constant 0 : index
    %c0_150 = arith.constant 0 : index
    %c0_151 = arith.constant 0 : index
    %175 = vector.load %arg7[%c0_148, %c0_149, %c0_150, %c0_151] : memref<2x3x20x1xbf16, #tpu.memory_space<vmem>>, vector<1x1x16x1xbf16>
    %176 = vector.shape_cast %175 : vector<1x1x16x1xbf16> to vector<16x1xbf16>
    %177 = vector.broadcast %176 : vector<16x1xbf16> to vector<16x32xbf16>
    %178 = arith.mulf %174, %177 : vector<16x32xbf16>
    %c0_152 = arith.constant 0 : index
    %c192 = arith.constant 192 : index
    %179 = vector.load %arg12[%c0_152, %c192] : memref<16x288xbf16, #tpu.memory_space<vmem>>, vector<16x32xbf16>
    tpu.vector_store %arg12[%c0_152, %c192], %178 {strides = array<i32>} : memref<16x288xbf16, #tpu.memory_space<vmem>>, vector<16x32xbf16>,
    %c0_153 = arith.constant 0 : index
    %c5_154 = arith.constant 5 : index
    %c0_155 = arith.constant 0 : index
    %180 = vector.load %arg10[%c0_153, %c5_154, %c0_155] : memref<1x32x32xf32, #tpu.memory_space<vmem>>, vector<1x16x32xf32>
    %181 = vector.shape_cast %180 : vector<1x16x32xf32> to vector<16x32xf32>
    %182 = arith.truncf %181 : vector<16x32xf32> to vector<16x32xbf16>
    %c0_156 = arith.constant 0 : index
    %c224 = arith.constant 224 : index
    %183 = vector.load %arg12[%c0_156, %c224] : memref<16x288xbf16, #tpu.memory_space<vmem>>, vector<16x32xbf16>
    tpu.vector_store %arg12[%c0_156, %c224], %182 {strides = array<i32>} : memref<16x288xbf16, #tpu.memory_space<vmem>>, vector<16x32xbf16>,
    %c0_157 = arith.constant 0 : index
    %c6_158 = arith.constant 6 : index
    %c0_159 = arith.constant 0 : index
    %184 = vector.load %arg10[%c0_157, %c6_158, %c0_159] : memref<1x32x32xf32, #tpu.memory_space<vmem>>, vector<1x16x32xf32>
    %185 = vector.shape_cast %184 : vector<1x16x32xf32> to vector<16x32xf32>
    %186 = arith.truncf %185 : vector<16x32xf32> to vector<16x32xbf16>
    %c0_160 = arith.constant 0 : index
    %c2_161 = arith.constant 2 : index
    %c0_162 = arith.constant 0 : index
    %c0_163 = arith.constant 0 : index
    %187 = vector.load %arg7[%c0_160, %c2_161, %c0_162, %c0_163] : memref<2x3x20x1xbf16, #tpu.memory_space<vmem>>, vector<1x1x16x1xbf16>
    %188 = vector.shape_cast %187 : vector<1x1x16x1xbf16> to vector<16x1xbf16>
    %189 = vector.broadcast %188 : vector<16x1xbf16> to vector<16x32xbf16>
    %190 = arith.mulf %186, %189 : vector<16x32xbf16>
    %c0_164 = arith.constant 0 : index
    %c256 = arith.constant 256 : index
    %191 = vector.load %arg12[%c0_164, %c256] : memref<16x288xbf16, #tpu.memory_space<vmem>>, vector<16x32xbf16>
    tpu.vector_store %arg12[%c0_164, %c256], %190 {strides = array<i32>} : memref<16x288xbf16, #tpu.memory_space<vmem>>, vector<16x32xbf16>,
    %c0_165 = arith.constant 0 : index
    %c0_166 = arith.constant 0 : index
    %192 = vector.load %arg12[%c0_165, %c0_166] : memref<16x288xbf16, #tpu.memory_space<vmem>>, vector<16x288xbf16>
    %c0_167 = arith.constant 0 : index
    %c0_168 = arith.constant 0 : index
    %193 = vector.load %arg5[%c0_167, %c0_168] : memref<288x16xbf16, #tpu.memory_space<vmem>>, vector<288x16xbf16>
    %cst_169 = arith.constant dense<0.000000e+00> : vector<16x16xf32>
    %194 = tpu.matmul %192, %193, %cst_169 {dimension_numbers = #tpu.dot_dimension_numbers<[1], [0], [0], [1], [0, 0, 1, 1], [], []>} : vector<16x288xbf16>, vector<288x16xbf16>, vector<16x16xf32> -> vector<16x16xf32>
    %c0_170 = arith.constant 0 : index
    %c0_171 = arith.constant 0 : index
    %195 = vector.load %arg6[%c0_170, %c0_171] : memref<1x16xf32, #tpu.memory_space<vmem>>, vector<1x16xf32>
    %196 = vector.broadcast %195 : vector<1x16xf32> to vector<16x16xf32>
    %197 = arith.addf %194, %196 : vector<16x16xf32>
    %c0_i32 = arith.constant 0 : i32
    %198 = arith.addi %0, %c0_i32 : i32
    %c2_i32 = arith.constant 2 : i32
    %199 = arith.muli %198, %c2_i32 : i32
    %c0_i32_172 = arith.constant 0 : i32
    %200 = arith.addi %199, %c0_i32_172 : i32
    %201 = arith.index_cast %200 : i32 to index
    %202 = memref.load %arg1[%201] : memref<4xf32, #tpu.memory_space<smem>>
    %203 = vector.broadcast %202 : f32 to vector<16x16xf32>
    %204 = arith.mulf %203, %197 : vector<16x16xf32>
    %205 = arith.addf %2, %204 : vector<16x16xf32>
    %cst_173 = arith.constant 0.000000e+00 : f32
    %206 = vector.broadcast %cst_173 : f32 to vector<6x16xf32>
    %c0_174 = arith.constant 0 : index
    %c0_175 = arith.constant 0 : index
    %c0_176 = arith.constant 0 : index
    %207 = vector.load %arg9[%c0_174, %c0_175, %c0_176] : memref<1x32x16xf32, #tpu.memory_space<vmem>>, vector<1x6x16xf32>
    %208 = vector.shape_cast %207 : vector<1x6x16xf32> to vector<6x16xf32>
    %209 = vector.shape_cast %206 : vector<6x16xf32> to vector<1x6x16xf32>
    tpu.vector_store %arg9[%c0_174, %c0_175, %c0_176], %209 {strides = array<i32>} : memref<1x32x16xf32, #tpu.memory_space<vmem>>, vector<1x6x16xf32>,
    %cst_177 = arith.constant 0.000000e+00 : f32
    %210 = vector.broadcast %cst_177 : f32 to vector<10x16xf32>
    %c0_178 = arith.constant 0 : index
    %c22 = arith.constant 22 : index
    %c0_179 = arith.constant 0 : index
    %211 = vector.load %arg9[%c0_178, %c22, %c0_179] : memref<1x32x16xf32, #tpu.memory_space<vmem>>, vector<1x10x16xf32>
    %212 = vector.shape_cast %211 : vector<1x10x16xf32> to vector<10x16xf32>
    %213 = vector.shape_cast %210 : vector<10x16xf32> to vector<1x10x16xf32>
    tpu.vector_store %arg9[%c0_178, %c22, %c0_179], %213 {strides = array<i32>} : memref<1x32x16xf32, #tpu.memory_space<vmem>>, vector<1x10x16xf32>,
    %c0_180 = arith.constant 0 : index
    %c0_181 = arith.constant 0 : index
    %c0_182 = arith.constant 0 : index
    %214 = vector.load %arg2[%c0_180, %c0_181, %c0_182] : memref<1x16x16xf32, #tpu.memory_space<vmem>>, vector<1x16x16xf32>
    %215 = vector.shape_cast %214 : vector<1x16x16xf32> to vector<16x16xf32>
    %c0_183 = arith.constant 0 : index
    %c6_184 = arith.constant 6 : index
    %c0_185 = arith.constant 0 : index
    %216 = vector.load %arg9[%c0_183, %c6_184, %c0_185] : memref<1x32x16xf32, #tpu.memory_space<vmem>>, vector<1x16x16xf32>
    %217 = vector.shape_cast %216 : vector<1x16x16xf32> to vector<16x16xf32>
    %218 = vector.shape_cast %215 : vector<16x16xf32> to vector<1x16x16xf32>
    tpu.vector_store %arg9[%c0_183, %c6_184, %c0_185], %218 {strides = array<i32>} : memref<1x32x16xf32, #tpu.memory_space<vmem>>, vector<1x16x16xf32>,
    %cst_186 = arith.constant 0.000000e+00 : f32
    %219 = vector.broadcast %cst_186 : f32 to vector<6x32xf32>
    %c0_187 = arith.constant 0 : index
    %c0_188 = arith.constant 0 : index
    %c0_189 = arith.constant 0 : index
    %220 = vector.load %arg10[%c0_187, %c0_188, %c0_189] : memref<1x32x32xf32, #tpu.memory_space<vmem>>, vector<1x6x32xf32>
    %221 = vector.shape_cast %220 : vector<1x6x32xf32> to vector<6x32xf32>
    %222 = vector.shape_cast %219 : vector<6x32xf32> to vector<1x6x32xf32>
    tpu.vector_store %arg10[%c0_187, %c0_188, %c0_189], %222 {strides = array<i32>} : memref<1x32x32xf32, #tpu.memory_space<vmem>>, vector<1x6x32xf32>,
    %cst_190 = arith.constant 0.000000e+00 : f32
    %223 = vector.broadcast %cst_190 : f32 to vector<6x32xf32>
    %c0_191 = arith.constant 0 : index
    %c26 = arith.constant 26 : index
    %c0_192 = arith.constant 0 : index
    %224 = vector.load %arg10[%c0_191, %c26, %c0_192] : memref<1x32x32xf32, #tpu.memory_space<vmem>>, vector<1x6x32xf32>
    %225 = vector.shape_cast %224 : vector<1x6x32xf32> to vector<6x32xf32>
    %226 = vector.shape_cast %223 : vector<6x32xf32> to vector<1x6x32xf32>
    tpu.vector_store %arg10[%c0_191, %c26, %c0_192], %226 {strides = array<i32>} : memref<1x32x32xf32, #tpu.memory_space<vmem>>, vector<1x6x32xf32>,
    %c0_193 = arith.constant 0 : index
    %c0_194 = arith.constant 0 : index
    %c0_195 = arith.constant 0 : index
    %227 = vector.load %arg9[%c0_193, %c0_194, %c0_195] : memref<1x32x16xf32, #tpu.memory_space<vmem>>, vector<1x20x16xf32>
    %228 = vector.shape_cast %227 : vector<1x20x16xf32> to vector<20x16xf32>
    %229 = arith.truncf %228 : vector<20x16xf32> to vector<20x16xbf16>
    %c1_196 = arith.constant 1 : index
    %c0_197 = arith.constant 0 : index
    %c0_198 = arith.constant 0 : index
    %c0_199 = arith.constant 0 : index
    %230 = vector.load %arg7[%c1_196, %c0_197, %c0_198, %c0_199] : memref<2x3x20x1xbf16, #tpu.memory_space<vmem>>, vector<1x1x20x1xbf16>
    %231 = vector.shape_cast %230 : vector<1x1x20x1xbf16> to vector<20x1xbf16>
    %232 = vector.broadcast %231 : vector<20x1xbf16> to vector<20x16xbf16>
    %233 = arith.mulf %229, %232 : vector<20x16xbf16>
    %c0_200 = arith.constant 0 : index
    %c0_201 = arith.constant 0 : index
    %234 = vector.load %arg11[%c0_200, %c0_201] : memref<32x144xbf16, #tpu.memory_space<vmem>>, vector<20x16xbf16>
    tpu.vector_store %arg11[%c0_200, %c0_201], %233 {strides = array<i32>} : memref<32x144xbf16, #tpu.memory_space<vmem>>, vector<20x16xbf16>,
    %c0_202 = arith.constant 0 : index
    %c1_203 = arith.constant 1 : index
    %c0_204 = arith.constant 0 : index
    %235 = vector.load %arg9[%c0_202, %c1_203, %c0_204] : memref<1x32x16xf32, #tpu.memory_space<vmem>>, vector<1x20x16xf32>
    %236 = vector.shape_cast %235 : vector<1x20x16xf32> to vector<20x16xf32>
    %237 = arith.truncf %236 : vector<20x16xf32> to vector<20x16xbf16>
    %c0_205 = arith.constant 0 : index
    %c16_206 = arith.constant 16 : index
    %238 = vector.load %arg11[%c0_205, %c16_206] : memref<32x144xbf16, #tpu.memory_space<vmem>>, vector<20x16xbf16>
    tpu.vector_store %arg11[%c0_205, %c16_206], %237 {strides = array<i32>} : memref<32x144xbf16, #tpu.memory_space<vmem>>, vector<20x16xbf16>,
    %c0_207 = arith.constant 0 : index
    %c2_208 = arith.constant 2 : index
    %c0_209 = arith.constant 0 : index
    %239 = vector.load %arg9[%c0_207, %c2_208, %c0_209] : memref<1x32x16xf32, #tpu.memory_space<vmem>>, vector<1x20x16xf32>
    %240 = vector.shape_cast %239 : vector<1x20x16xf32> to vector<20x16xf32>
    %241 = arith.truncf %240 : vector<20x16xf32> to vector<20x16xbf16>
    %c1_210 = arith.constant 1 : index
    %c2_211 = arith.constant 2 : index
    %c0_212 = arith.constant 0 : index
    %c0_213 = arith.constant 0 : index
    %242 = vector.load %arg7[%c1_210, %c2_211, %c0_212, %c0_213] : memref<2x3x20x1xbf16, #tpu.memory_space<vmem>>, vector<1x1x20x1xbf16>
    %243 = vector.shape_cast %242 : vector<1x1x20x1xbf16> to vector<20x1xbf16>
    %244 = vector.broadcast %243 : vector<20x1xbf16> to vector<20x16xbf16>
    %245 = arith.mulf %241, %244 : vector<20x16xbf16>
    %c0_214 = arith.constant 0 : index
    %c32_215 = arith.constant 32 : index
    %246 = vector.load %arg11[%c0_214, %c32_215] : memref<32x144xbf16, #tpu.memory_space<vmem>>, vector<20x16xbf16>
    tpu.vector_store %arg11[%c0_214, %c32_215], %245 {strides = array<i32>} : memref<32x144xbf16, #tpu.memory_space<vmem>>, vector<20x16xbf16>,
    %c0_216 = arith.constant 0 : index
    %c5_217 = arith.constant 5 : index
    %c0_218 = arith.constant 0 : index
    %247 = vector.load %arg9[%c0_216, %c5_217, %c0_218] : memref<1x32x16xf32, #tpu.memory_space<vmem>>, vector<1x20x16xf32>
    %248 = vector.shape_cast %247 : vector<1x20x16xf32> to vector<20x16xf32>
    %249 = arith.truncf %248 : vector<20x16xf32> to vector<20x16xbf16>
    %c1_219 = arith.constant 1 : index
    %c0_220 = arith.constant 0 : index
    %c0_221 = arith.constant 0 : index
    %c0_222 = arith.constant 0 : index
    %250 = vector.load %arg7[%c1_219, %c0_220, %c0_221, %c0_222] : memref<2x3x20x1xbf16, #tpu.memory_space<vmem>>, vector<1x1x20x1xbf16>
    %251 = vector.shape_cast %250 : vector<1x1x20x1xbf16> to vector<20x1xbf16>
    %252 = vector.broadcast %251 : vector<20x1xbf16> to vector<20x16xbf16>
    %253 = arith.mulf %249, %252 : vector<20x16xbf16>
    %c0_223 = arith.constant 0 : index
    %c48_224 = arith.constant 48 : index
    %254 = vector.load %arg11[%c0_223, %c48_224] : memref<32x144xbf16, #tpu.memory_space<vmem>>, vector<20x16xbf16>
    tpu.vector_store %arg11[%c0_223, %c48_224], %253 {strides = array<i32>} : memref<32x144xbf16, #tpu.memory_space<vmem>>, vector<20x16xbf16>,
    %c0_225 = arith.constant 0 : index
    %c6_226 = arith.constant 6 : index
    %c0_227 = arith.constant 0 : index
    %255 = vector.load %arg9[%c0_225, %c6_226, %c0_227] : memref<1x32x16xf32, #tpu.memory_space<vmem>>, vector<1x20x16xf32>
    %256 = vector.shape_cast %255 : vector<1x20x16xf32> to vector<20x16xf32>
    %257 = arith.truncf %256 : vector<20x16xf32> to vector<20x16xbf16>
    %c0_228 = arith.constant 0 : index
    %c64_229 = arith.constant 64 : index
    %258 = vector.load %arg11[%c0_228, %c64_229] : memref<32x144xbf16, #tpu.memory_space<vmem>>, vector<20x16xbf16>
    tpu.vector_store %arg11[%c0_228, %c64_229], %257 {strides = array<i32>} : memref<32x144xbf16, #tpu.memory_space<vmem>>, vector<20x16xbf16>,
    %c0_230 = arith.constant 0 : index
    %c7 = arith.constant 7 : index
    %c0_231 = arith.constant 0 : index
    %259 = vector.load %arg9[%c0_230, %c7, %c0_231] : memref<1x32x16xf32, #tpu.memory_space<vmem>>, vector<1x20x16xf32>
    %260 = vector.shape_cast %259 : vector<1x20x16xf32> to vector<20x16xf32>
    %261 = arith.truncf %260 : vector<20x16xf32> to vector<20x16xbf16>
    %c1_232 = arith.constant 1 : index
    %c2_233 = arith.constant 2 : index
    %c0_234 = arith.constant 0 : index
    %c0_235 = arith.constant 0 : index
    %262 = vector.load %arg7[%c1_232, %c2_233, %c0_234, %c0_235] : memref<2x3x20x1xbf16, #tpu.memory_space<vmem>>, vector<1x1x20x1xbf16>
    %263 = vector.shape_cast %262 : vector<1x1x20x1xbf16> to vector<20x1xbf16>
    %264 = vector.broadcast %263 : vector<20x1xbf16> to vector<20x16xbf16>
    %265 = arith.mulf %261, %264 : vector<20x16xbf16>
    %c0_236 = arith.constant 0 : index
    %c80_237 = arith.constant 80 : index
    %266 = vector.load %arg11[%c0_236, %c80_237] : memref<32x144xbf16, #tpu.memory_space<vmem>>, vector<20x16xbf16>
    tpu.vector_store %arg11[%c0_236, %c80_237], %265 {strides = array<i32>} : memref<32x144xbf16, #tpu.memory_space<vmem>>, vector<20x16xbf16>,
    %c0_238 = arith.constant 0 : index
    %c10 = arith.constant 10 : index
    %c0_239 = arith.constant 0 : index
    %267 = vector.load %arg9[%c0_238, %c10, %c0_239] : memref<1x32x16xf32, #tpu.memory_space<vmem>>, vector<1x20x16xf32>
    %268 = vector.shape_cast %267 : vector<1x20x16xf32> to vector<20x16xf32>
    %269 = arith.truncf %268 : vector<20x16xf32> to vector<20x16xbf16>
    %c1_240 = arith.constant 1 : index
    %c0_241 = arith.constant 0 : index
    %c0_242 = arith.constant 0 : index
    %c0_243 = arith.constant 0 : index
    %270 = vector.load %arg7[%c1_240, %c0_241, %c0_242, %c0_243] : memref<2x3x20x1xbf16, #tpu.memory_space<vmem>>, vector<1x1x20x1xbf16>
    %271 = vector.shape_cast %270 : vector<1x1x20x1xbf16> to vector<20x1xbf16>
    %272 = vector.broadcast %271 : vector<20x1xbf16> to vector<20x16xbf16>
    %273 = arith.mulf %269, %272 : vector<20x16xbf16>
    %c0_244 = arith.constant 0 : index
    %c96_245 = arith.constant 96 : index
    %274 = vector.load %arg11[%c0_244, %c96_245] : memref<32x144xbf16, #tpu.memory_space<vmem>>, vector<20x16xbf16>
    tpu.vector_store %arg11[%c0_244, %c96_245], %273 {strides = array<i32>} : memref<32x144xbf16, #tpu.memory_space<vmem>>, vector<20x16xbf16>,
    %c0_246 = arith.constant 0 : index
    %c11 = arith.constant 11 : index
    %c0_247 = arith.constant 0 : index
    %275 = vector.load %arg9[%c0_246, %c11, %c0_247] : memref<1x32x16xf32, #tpu.memory_space<vmem>>, vector<1x20x16xf32>
    %276 = vector.shape_cast %275 : vector<1x20x16xf32> to vector<20x16xf32>
    %277 = arith.truncf %276 : vector<20x16xf32> to vector<20x16xbf16>
    %c0_248 = arith.constant 0 : index
    %c112_249 = arith.constant 112 : index
    %278 = vector.load %arg11[%c0_248, %c112_249] : memref<32x144xbf16, #tpu.memory_space<vmem>>, vector<20x16xbf16>
    tpu.vector_store %arg11[%c0_248, %c112_249], %277 {strides = array<i32>} : memref<32x144xbf16, #tpu.memory_space<vmem>>, vector<20x16xbf16>,
    %c0_250 = arith.constant 0 : index
    %c12 = arith.constant 12 : index
    %c0_251 = arith.constant 0 : index
    %279 = vector.load %arg9[%c0_250, %c12, %c0_251] : memref<1x32x16xf32, #tpu.memory_space<vmem>>, vector<1x20x16xf32>
    %280 = vector.shape_cast %279 : vector<1x20x16xf32> to vector<20x16xf32>
    %281 = arith.truncf %280 : vector<20x16xf32> to vector<20x16xbf16>
    %c1_252 = arith.constant 1 : index
    %c2_253 = arith.constant 2 : index
    %c0_254 = arith.constant 0 : index
    %c0_255 = arith.constant 0 : index
    %282 = vector.load %arg7[%c1_252, %c2_253, %c0_254, %c0_255] : memref<2x3x20x1xbf16, #tpu.memory_space<vmem>>, vector<1x1x20x1xbf16>
    %283 = vector.shape_cast %282 : vector<1x1x20x1xbf16> to vector<20x1xbf16>
    %284 = vector.broadcast %283 : vector<20x1xbf16> to vector<20x16xbf16>
    %285 = arith.mulf %281, %284 : vector<20x16xbf16>
    %c0_256 = arith.constant 0 : index
    %c128_257 = arith.constant 128 : index
    %286 = vector.load %arg11[%c0_256, %c128_257] : memref<32x144xbf16, #tpu.memory_space<vmem>>, vector<20x16xbf16>
    tpu.vector_store %arg11[%c0_256, %c128_257], %285 {strides = array<i32>} : memref<32x144xbf16, #tpu.memory_space<vmem>>, vector<20x16xbf16>,
    %c0_258 = arith.constant 0 : index
    %c0_259 = arith.constant 0 : index
    %287 = vector.load %arg11[%c0_258, %c0_259] : memref<32x144xbf16, #tpu.memory_space<vmem>>, vector<20x144xbf16>
    %c0_260 = arith.constant 0 : index
    %c0_261 = arith.constant 0 : index
    %288 = vector.load %arg3[%c0_260, %c0_261] : memref<144x32xbf16, #tpu.memory_space<vmem>>, vector<144x32xbf16>
    %cst_262 = arith.constant dense<0.000000e+00> : vector<20x32xf32>
    %289 = tpu.matmul %287, %288, %cst_262 {dimension_numbers = #tpu.dot_dimension_numbers<[1], [0], [0], [1], [0, 0, 1, 1], [], []>} : vector<20x144xbf16>, vector<144x32xbf16>, vector<20x32xf32> -> vector<20x32xf32>
    %c0_263 = arith.constant 0 : index
    %c0_264 = arith.constant 0 : index
    %290 = vector.load %arg4[%c0_263, %c0_264] : memref<1x32xf32, #tpu.memory_space<vmem>>, vector<1x32xf32>
    %291 = vector.broadcast %290 : vector<1x32xf32> to vector<20x32xf32>
    %292 = arith.addf %289, %291 : vector<20x32xf32>
    %cst_265 = arith.constant 5.000000e-01 : f32
    %293 = vector.broadcast %cst_265 : f32 to vector<20x32xf32>
    %294 = arith.mulf %293, %292 : vector<20x32xf32>
    %cst_266 = arith.constant 0.707106769 : f32
    %295 = vector.broadcast %cst_266 : f32 to vector<20x32xf32>
    %296 = arith.mulf %292, %295 : vector<20x32xf32>
    %297 = math.absf %296 : vector<20x32xf32>
    %cst_267 = arith.constant 0.327591091 : f32
    %298 = vector.broadcast %cst_267 : f32 to vector<20x32xf32>
    %299 = arith.mulf %298, %297 : vector<20x32xf32>
    %cst_268 = arith.constant 1.000000e+00 : f32
    %300 = vector.broadcast %cst_268 : f32 to vector<20x32xf32>
    %301 = arith.addf %300, %299 : vector<20x32xf32>
    %302 = tpu.reciprocal %301 {approx = true} : vector<20x32xf32> -> vector<20x32xf32>
    %cst_269 = arith.constant 1.06140542 : f32
    %303 = vector.broadcast %cst_269 : f32 to vector<20x32xf32>
    %304 = arith.mulf %303, %302 : vector<20x32xf32>
    %cst_270 = arith.constant -1.45315206 : f32
    %305 = vector.broadcast %cst_270 : f32 to vector<20x32xf32>
    %306 = arith.addf %304, %305 : vector<20x32xf32>
    %307 = arith.mulf %306, %302 : vector<20x32xf32>
    %cst_271 = arith.constant 1.42141378 : f32
    %308 = vector.broadcast %cst_271 : f32 to vector<20x32xf32>
    %309 = arith.addf %307, %308 : vector<20x32xf32>
    %310 = arith.mulf %309, %302 : vector<20x32xf32>
    %cst_272 = arith.constant -0.284496725 : f32
    %311 = vector.broadcast %cst_272 : f32 to vector<20x32xf32>
    %312 = arith.addf %310, %311 : vector<20x32xf32>
    %313 = arith.mulf %312, %302 : vector<20x32xf32>
    %cst_273 = arith.constant 0.254829586 : f32
    %314 = vector.broadcast %cst_273 : f32 to vector<20x32xf32>
    %315 = arith.addf %313, %314 : vector<20x32xf32>
    %316 = arith.mulf %315, %302 : vector<20x32xf32>
    %cst_274 = arith.constant 0.000000e+00 : f32
    %317 = vector.broadcast %cst_274 : f32 to vector<20x32xf32>
    %318 = arith.subf %317, %297 : vector<20x32xf32>
    %319 = arith.mulf %318, %297 : vector<20x32xf32>
    %320 = math.exp %319 : vector<20x32xf32>
    %321 = arith.mulf %316, %320 : vector<20x32xf32>
    %cst_275 = arith.constant 1.000000e+00 : f32
    %322 = vector.broadcast %cst_275 : f32 to vector<20x32xf32>
    %323 = arith.subf %322, %321 : vector<20x32xf32>
    %cst_276 = arith.constant 0.000000e+00 : f32
    %324 = vector.broadcast %cst_276 : f32 to vector<20x32xf32>
    %325 = arith.cmpf oge, %296, %324 : vector<20x32xf32>
    %cst_277 = arith.constant 0.000000e+00 : f32
    %326 = vector.broadcast %cst_277 : f32 to vector<20x32xf32>
    %327 = arith.subf %326, %323 : vector<20x32xf32>
    %328 = arith.select %325, %323, %327 : vector<20x32xi1>, vector<20x32xf32>
    %cst_278 = arith.constant 1.000000e+00 : f32
    %329 = vector.broadcast %cst_278 : f32 to vector<20x32xf32>
    %330 = arith.addf %329, %328 : vector<20x32xf32>
    %331 = arith.mulf %294, %330 : vector<20x32xf32>
    %c0_279 = arith.constant 0 : index
    %c6_280 = arith.constant 6 : index
    %c0_281 = arith.constant 0 : index
    %332 = vector.load %arg10[%c0_279, %c6_280, %c0_281] : memref<1x32x32xf32, #tpu.memory_space<vmem>>, vector<1x20x32xf32>
    %333 = vector.shape_cast %332 : vector<1x20x32xf32> to vector<20x32xf32>
    %334 = vector.shape_cast %331 : vector<20x32xf32> to vector<1x20x32xf32>
    tpu.vector_store %arg10[%c0_279, %c6_280, %c0_281], %334 {strides = array<i32>} : memref<1x32x32xf32, #tpu.memory_space<vmem>>, vector<1x20x32xf32>,
    %c0_282 = arith.constant 0 : index
    %c0_283 = arith.constant 0 : index
    %c0_284 = arith.constant 0 : index
    %335 = vector.load %arg10[%c0_282, %c0_283, %c0_284] : memref<1x32x32xf32, #tpu.memory_space<vmem>>, vector<1x16x32xf32>
    %336 = vector.shape_cast %335 : vector<1x16x32xf32> to vector<16x32xf32>
    %337 = arith.truncf %336 : vector<16x32xf32> to vector<16x32xbf16>
    %c1_285 = arith.constant 1 : index
    %c0_286 = arith.constant 0 : index
    %c0_287 = arith.constant 0 : index
    %c0_288 = arith.constant 0 : index
    %338 = vector.load %arg7[%c1_285, %c0_286, %c0_287, %c0_288] : memref<2x3x20x1xbf16, #tpu.memory_space<vmem>>, vector<1x1x16x1xbf16>
    %339 = vector.shape_cast %338 : vector<1x1x16x1xbf16> to vector<16x1xbf16>
    %340 = vector.broadcast %339 : vector<16x1xbf16> to vector<16x32xbf16>
    %341 = arith.mulf %337, %340 : vector<16x32xbf16>
    %c0_289 = arith.constant 0 : index
    %c0_290 = arith.constant 0 : index
    %342 = vector.load %arg12[%c0_289, %c0_290] : memref<16x288xbf16, #tpu.memory_space<vmem>>, vector<16x32xbf16>
    tpu.vector_store %arg12[%c0_289, %c0_290], %341 {strides = array<i32>} : memref<16x288xbf16, #tpu.memory_space<vmem>>, vector<16x32xbf16>,
    %c0_291 = arith.constant 0 : index
    %c1_292 = arith.constant 1 : index
    %c0_293 = arith.constant 0 : index
    %343 = vector.load %arg10[%c0_291, %c1_292, %c0_293] : memref<1x32x32xf32, #tpu.memory_space<vmem>>, vector<1x16x32xf32>
    %344 = vector.shape_cast %343 : vector<1x16x32xf32> to vector<16x32xf32>
    %345 = arith.truncf %344 : vector<16x32xf32> to vector<16x32xbf16>
    %c0_294 = arith.constant 0 : index
    %c32_295 = arith.constant 32 : index
    %346 = vector.load %arg12[%c0_294, %c32_295] : memref<16x288xbf16, #tpu.memory_space<vmem>>, vector<16x32xbf16>
    tpu.vector_store %arg12[%c0_294, %c32_295], %345 {strides = array<i32>} : memref<16x288xbf16, #tpu.memory_space<vmem>>, vector<16x32xbf16>,
    %c0_296 = arith.constant 0 : index
    %c2_297 = arith.constant 2 : index
    %c0_298 = arith.constant 0 : index
    %347 = vector.load %arg10[%c0_296, %c2_297, %c0_298] : memref<1x32x32xf32, #tpu.memory_space<vmem>>, vector<1x16x32xf32>
    %348 = vector.shape_cast %347 : vector<1x16x32xf32> to vector<16x32xf32>
    %349 = arith.truncf %348 : vector<16x32xf32> to vector<16x32xbf16>
    %c1_299 = arith.constant 1 : index
    %c2_300 = arith.constant 2 : index
    %c0_301 = arith.constant 0 : index
    %c0_302 = arith.constant 0 : index
    %350 = vector.load %arg7[%c1_299, %c2_300, %c0_301, %c0_302] : memref<2x3x20x1xbf16, #tpu.memory_space<vmem>>, vector<1x1x16x1xbf16>
    %351 = vector.shape_cast %350 : vector<1x1x16x1xbf16> to vector<16x1xbf16>
    %352 = vector.broadcast %351 : vector<16x1xbf16> to vector<16x32xbf16>
    %353 = arith.mulf %349, %352 : vector<16x32xbf16>
    %c0_303 = arith.constant 0 : index
    %c64_304 = arith.constant 64 : index
    %354 = vector.load %arg12[%c0_303, %c64_304] : memref<16x288xbf16, #tpu.memory_space<vmem>>, vector<16x32xbf16>
    tpu.vector_store %arg12[%c0_303, %c64_304], %353 {strides = array<i32>} : memref<16x288xbf16, #tpu.memory_space<vmem>>, vector<16x32xbf16>,
    %c0_305 = arith.constant 0 : index
    %c5_306 = arith.constant 5 : index
    %c0_307 = arith.constant 0 : index
    %355 = vector.load %arg10[%c0_305, %c5_306, %c0_307] : memref<1x32x32xf32, #tpu.memory_space<vmem>>, vector<1x16x32xf32>
    %356 = vector.shape_cast %355 : vector<1x16x32xf32> to vector<16x32xf32>
    %357 = arith.truncf %356 : vector<16x32xf32> to vector<16x32xbf16>
    %c1_308 = arith.constant 1 : index
    %c0_309 = arith.constant 0 : index
    %c0_310 = arith.constant 0 : index
    %c0_311 = arith.constant 0 : index
    %358 = vector.load %arg7[%c1_308, %c0_309, %c0_310, %c0_311] : memref<2x3x20x1xbf16, #tpu.memory_space<vmem>>, vector<1x1x16x1xbf16>
    %359 = vector.shape_cast %358 : vector<1x1x16x1xbf16> to vector<16x1xbf16>
    %360 = vector.broadcast %359 : vector<16x1xbf16> to vector<16x32xbf16>
    %361 = arith.mulf %357, %360 : vector<16x32xbf16>
    %c0_312 = arith.constant 0 : index
    %c96_313 = arith.constant 96 : index
    %362 = vector.load %arg12[%c0_312, %c96_313] : memref<16x288xbf16, #tpu.memory_space<vmem>>, vector<16x32xbf16>
    tpu.vector_store %arg12[%c0_312, %c96_313], %361 {strides = array<i32>} : memref<16x288xbf16, #tpu.memory_space<vmem>>, vector<16x32xbf16>,
    %c0_314 = arith.constant 0 : index
    %c6_315 = arith.constant 6 : index
    %c0_316 = arith.constant 0 : index
    %363 = vector.load %arg10[%c0_314, %c6_315, %c0_316] : memref<1x32x32xf32, #tpu.memory_space<vmem>>, vector<1x16x32xf32>
    %364 = vector.shape_cast %363 : vector<1x16x32xf32> to vector<16x32xf32>
    %365 = arith.truncf %364 : vector<16x32xf32> to vector<16x32xbf16>
    %c0_317 = arith.constant 0 : index
    %c128_318 = arith.constant 128 : index
    %366 = vector.load %arg12[%c0_317, %c128_318] : memref<16x288xbf16, #tpu.memory_space<vmem>>, vector<16x32xbf16>
    tpu.vector_store %arg12[%c0_317, %c128_318], %365 {strides = array<i32>} : memref<16x288xbf16, #tpu.memory_space<vmem>>, vector<16x32xbf16>,
    %c0_319 = arith.constant 0 : index
    %c7_320 = arith.constant 7 : index
    %c0_321 = arith.constant 0 : index
    %367 = vector.load %arg10[%c0_319, %c7_320, %c0_321] : memref<1x32x32xf32, #tpu.memory_space<vmem>>, vector<1x16x32xf32>
    %368 = vector.shape_cast %367 : vector<1x16x32xf32> to vector<16x32xf32>
    %369 = arith.truncf %368 : vector<16x32xf32> to vector<16x32xbf16>
    %c1_322 = arith.constant 1 : index
    %c2_323 = arith.constant 2 : index
    %c0_324 = arith.constant 0 : index
    %c0_325 = arith.constant 0 : index
    %370 = vector.load %arg7[%c1_322, %c2_323, %c0_324, %c0_325] : memref<2x3x20x1xbf16, #tpu.memory_space<vmem>>, vector<1x1x16x1xbf16>
    %371 = vector.shape_cast %370 : vector<1x1x16x1xbf16> to vector<16x1xbf16>
    %372 = vector.broadcast %371 : vector<16x1xbf16> to vector<16x32xbf16>
    %373 = arith.mulf %369, %372 : vector<16x32xbf16>
    %c0_326 = arith.constant 0 : index
    %c160_327 = arith.constant 160 : index
    %374 = vector.load %arg12[%c0_326, %c160_327] : memref<16x288xbf16, #tpu.memory_space<vmem>>, vector<16x32xbf16>
    tpu.vector_store %arg12[%c0_326, %c160_327], %373 {strides = array<i32>} : memref<16x288xbf16, #tpu.memory_space<vmem>>, vector<16x32xbf16>,
    %c0_328 = arith.constant 0 : index
    %c10_329 = arith.constant 10 : index
    %c0_330 = arith.constant 0 : index
    %375 = vector.load %arg10[%c0_328, %c10_329, %c0_330] : memref<1x32x32xf32, #tpu.memory_space<vmem>>, vector<1x16x32xf32>
    %376 = vector.shape_cast %375 : vector<1x16x32xf32> to vector<16x32xf32>
    %377 = arith.truncf %376 : vector<16x32xf32> to vector<16x32xbf16>
    %c1_331 = arith.constant 1 : index
    %c0_332 = arith.constant 0 : index
    %c0_333 = arith.constant 0 : index
    %c0_334 = arith.constant 0 : index
    %378 = vector.load %arg7[%c1_331, %c0_332, %c0_333, %c0_334] : memref<2x3x20x1xbf16, #tpu.memory_space<vmem>>, vector<1x1x16x1xbf16>
    %379 = vector.shape_cast %378 : vector<1x1x16x1xbf16> to vector<16x1xbf16>
    %380 = vector.broadcast %379 : vector<16x1xbf16> to vector<16x32xbf16>
    %381 = arith.mulf %377, %380 : vector<16x32xbf16>
    %c0_335 = arith.constant 0 : index
    %c192_336 = arith.constant 192 : index
    %382 = vector.load %arg12[%c0_335, %c192_336] : memref<16x288xbf16, #tpu.memory_space<vmem>>, vector<16x32xbf16>
    tpu.vector_store %arg12[%c0_335, %c192_336], %381 {strides = array<i32>} : memref<16x288xbf16, #tpu.memory_space<vmem>>, vector<16x32xbf16>,
    %c0_337 = arith.constant 0 : index
    %c11_338 = arith.constant 11 : index
    %c0_339 = arith.constant 0 : index
    %383 = vector.load %arg10[%c0_337, %c11_338, %c0_339] : memref<1x32x32xf32, #tpu.memory_space<vmem>>, vector<1x16x32xf32>
    %384 = vector.shape_cast %383 : vector<1x16x32xf32> to vector<16x32xf32>
    %385 = arith.truncf %384 : vector<16x32xf32> to vector<16x32xbf16>
    %c0_340 = arith.constant 0 : index
    %c224_341 = arith.constant 224 : index
    %386 = vector.load %arg12[%c0_340, %c224_341] : memref<16x288xbf16, #tpu.memory_space<vmem>>, vector<16x32xbf16>
    tpu.vector_store %arg12[%c0_340, %c224_341], %385 {strides = array<i32>} : memref<16x288xbf16, #tpu.memory_space<vmem>>, vector<16x32xbf16>,
    %c0_342 = arith.constant 0 : index
    %c12_343 = arith.constant 12 : index
    %c0_344 = arith.constant 0 : index
    %387 = vector.load %arg10[%c0_342, %c12_343, %c0_344] : memref<1x32x32xf32, #tpu.memory_space<vmem>>, vector<1x16x32xf32>
    %388 = vector.shape_cast %387 : vector<1x16x32xf32> to vector<16x32xf32>
    %389 = arith.truncf %388 : vector<16x32xf32> to vector<16x32xbf16>
    %c1_345 = arith.constant 1 : index
    %c2_346 = arith.constant 2 : index
    %c0_347 = arith.constant 0 : index
    %c0_348 = arith.constant 0 : index
    %390 = vector.load %arg7[%c1_345, %c2_346, %c0_347, %c0_348] : memref<2x3x20x1xbf16, #tpu.memory_space<vmem>>, vector<1x1x16x1xbf16>
    %391 = vector.shape_cast %390 : vector<1x1x16x1xbf16> to vector<16x1xbf16>
    %392 = vector.broadcast %391 : vector<16x1xbf16> to vector<16x32xbf16>
    %393 = arith.mulf %389, %392 : vector<16x32xbf16>
    %c0_349 = arith.constant 0 : index
    %c256_350 = arith.constant 256 : index
    %394 = vector.load %arg12[%c0_349, %c256_350] : memref<16x288xbf16, #tpu.memory_space<vmem>>, vector<16x32xbf16>
    tpu.vector_store %arg12[%c0_349, %c256_350], %393 {strides = array<i32>} : memref<16x288xbf16, #tpu.memory_space<vmem>>, vector<16x32xbf16>,
    %c0_351 = arith.constant 0 : index
    %c0_352 = arith.constant 0 : index
    %395 = vector.load %arg12[%c0_351, %c0_352] : memref<16x288xbf16, #tpu.memory_space<vmem>>, vector<16x288xbf16>
    %c0_353 = arith.constant 0 : index
    %c0_354 = arith.constant 0 : index
    %396 = vector.load %arg5[%c0_353, %c0_354] : memref<288x16xbf16, #tpu.memory_space<vmem>>, vector<288x16xbf16>
    %cst_355 = arith.constant dense<0.000000e+00> : vector<16x16xf32>
    %397 = tpu.matmul %395, %396, %cst_355 {dimension_numbers = #tpu.dot_dimension_numbers<[1], [0], [0], [1], [0, 0, 1, 1], [], []>} : vector<16x288xbf16>, vector<288x16xbf16>, vector<16x16xf32> -> vector<16x16xf32>
    %c0_356 = arith.constant 0 : index
    %c0_357 = arith.constant 0 : index
    %398 = vector.load %arg6[%c0_356, %c0_357] : memref<1x16xf32, #tpu.memory_space<vmem>>, vector<1x16xf32>
    %399 = vector.broadcast %398 : vector<1x16xf32> to vector<16x16xf32>
    %400 = arith.addf %397, %399 : vector<16x16xf32>
    %c0_i32_358 = arith.constant 0 : i32
    %401 = arith.addi %0, %c0_i32_358 : i32
    %c2_i32_359 = arith.constant 2 : i32
    %402 = arith.muli %401, %c2_i32_359 : i32
    %c1_i32_360 = arith.constant 1 : i32
    %403 = arith.addi %402, %c1_i32_360 : i32
    %404 = arith.index_cast %403 : i32 to index
    %405 = memref.load %arg1[%404] : memref<4xf32, #tpu.memory_space<smem>>
    %406 = vector.broadcast %405 : f32 to vector<16x16xf32>
    %407 = arith.mulf %406, %400 : vector<16x16xf32>
    %408 = arith.addf %205, %407 : vector<16x16xf32>
    %c0_361 = arith.constant 0 : index
    %c0_362 = arith.constant 0 : index
    %c0_363 = arith.constant 0 : index
    %409 = vector.load %arg8[%c0_361, %c0_362, %c0_363] : memref<1x16x16xf32, #tpu.memory_space<vmem>>, vector<1x16x16xf32>
    %410 = vector.shape_cast %409 : vector<1x16x16xf32> to vector<16x16xf32>
    %411 = vector.shape_cast %408 : vector<16x16xf32> to vector<1x16x16xf32>
    tpu.vector_store %arg8[%c0_361, %c0_362, %c0_363], %411 {strides = array<i32>} : memref<1x16x16xf32, #tpu.memory_space<vmem>>, vector<1x16x16xf32>,
    return
  }
  func.func @transform_0(%arg0: i32) -> i32 {
    %c0_i32 = arith.constant 0 : i32
    %c0_i32_0 = arith.constant 0 : i32
    return %c0_i32 : i32
  }
  func.func @transform_1(%arg0: i32) -> (i32, i32, i32) {
    %c0_i32 = arith.constant 0 : i32
    %c0_i32_0 = arith.constant 0 : i32
    %c0_i32_1 = arith.constant 0 : i32
    return %arg0, %c0_i32, %c0_i32_0 : i32, i32, i32
  }
  func.func @transform_2(%arg0: i32) -> (i32, i32) {
    %c0_i32 = arith.constant 0 : i32
    %c0_i32_0 = arith.constant 0 : i32
    %c0_i32_1 = arith.constant 0 : i32
    return %c0_i32, %c0_i32_0 : i32, i32
  }
  func.func @transform_3(%arg0: i32) -> (i32, i32) {
    %c0_i32 = arith.constant 0 : i32
    %c0_i32_0 = arith.constant 0 : i32
    %c0_i32_1 = arith.constant 0 : i32
    return %c0_i32, %c0_i32_0 : i32, i32
  }
  func.func @transform_4(%arg0: i32) -> (i32, i32) {
    %c0_i32 = arith.constant 0 : i32
    %c0_i32_0 = arith.constant 0 : i32
    %c0_i32_1 = arith.constant 0 : i32
    return %c0_i32, %c0_i32_0 : i32, i32
  }
  func.func @transform_5(%arg0: i32) -> (i32, i32) {
    %c0_i32 = arith.constant 0 : i32
    %c0_i32_0 = arith.constant 0 : i32
    %c0_i32_1 = arith.constant 0 : i32
    return %c0_i32, %c0_i32_0 : i32, i32
  }
  func.func @transform_6(%arg0: i32) -> (i32, i32, i32, i32) {
    %c0_i32 = arith.constant 0 : i32
    %c0_i32_0 = arith.constant 0 : i32
    %c0_i32_1 = arith.constant 0 : i32
    %c0_i32_2 = arith.constant 0 : i32
    %c0_i32_3 = arith.constant 0 : i32
    return %c0_i32, %c0_i32_0, %c0_i32_1, %c0_i32_2 : i32, i32, i32, i32
  }
  func.func @transform_7(%arg0: i32) -> (i32, i32, i32) {
    %c0_i32 = arith.constant 0 : i32
    %c0_i32_0 = arith.constant 0 : i32
    %c0_i32_1 = arith.constant 0 : i32
    return %arg0, %c0_i32, %c0_i32_0 : i32, i32, i32
  }
}

</mosaic_0001>

<llo_original>
// kernel: tpu_custom_call.1
$region0: #{tpu_custom_call.1}
  #allocation0 [shape = 'u32[]', space=smem, size = 0x4, offset = 0x4, fixed_abs, tag = 'smem constant byte address 0x4 - core index']
  #allocation1 [shape = 'u32[144,128]{1,0:T(1,128)}', space=vmem, size = 0x12000, scoped, tag = 'internal scratch']
  #allocation2 [shape = 'f32[1,32,16]{2,1,0:T(8,128)}', space=vmem, size = 0x4000, scoped, tag = 'scratch operand']
  #allocation3 [shape = 'f32[1,32,32]{2,1,0:T(8,128)}', space=vmem, size = 0x4000, scoped, tag = 'scratch operand']
  #allocation4 [shape = 'bf16[32,144]{1,0:T(16,128)(2,1)}', space=vmem, size = 0x4000, scoped, tag = 'scratch operand']
  #allocation5 [shape = 'bf16[16,288]{1,0:T(16,128)(2,1)}', space=vmem, size = 0x3000, scoped, tag = 'scratch operand']
  %s0 = inlined_call_operand.vmem [shape: f32[4], index: 0, kind: input, shape index: {}]
  %s1 = inlined_call_operand.vmem [shape: f32[2,16,16], index: 1, kind: input, shape index: {}]
  %s2 = inlined_call_operand.vmem [shape: bf16[144,32], index: 2, kind: input, shape index: {}]
  %s3 = inlined_call_operand.vmem [shape: f32[1,32], index: 3, kind: input, shape index: {}]
  %s4 = inlined_call_operand.vmem [shape: bf16[288,16], index: 4, kind: input, shape index: {}]
  %s5 = inlined_call_operand.vmem [shape: f32[1,16], index: 5, kind: input, shape index: {}]
  %s6 = inlined_call_operand.vmem [shape: bf16[2,3,20,1], index: 6, kind: input, shape index: {}]
  %s7 = inlined_call_operand.hbm [shape: f32[2,16,16], index: 7, kind: output, shape index: {}]
  %s8 = sld [smem:[#allocation0]]
  $region65: #{tpu_custom_call.1} parent=0
    _
  %s10 = ssub.s32 1, %s8
  %s11 = scalar_select 0, %s10, %s8
  $region1: #{tpu_custom_call.1} parent=0
    #allocation6 [shape = 'u8[512]{0}', space=smem, size = 0x200, scoped, tag = 'input window, operand 0, single buffered']
    #allocation7 [shape = 's32[2]{0}', space=sflag, size = 0x8, scoped, tag = 'scoped memory for tpu_custom_call.1']
    #allocation8 [shape = 's32[2]{0}', space=sflag, size = 0x8, scoped, tag = 'scoped memory for tpu_custom_call.1']
    #allocation9 [shape = 'u8[16384]{0}', space=vmem, size = 0x4000, scoped, tag = 'output window, operand 0']
    %12 = vsyncpa [#allocation8], 0
    %13 = vsyncpa [#allocation7], 0
    %s14 = scalar_lea.sflag [#allocation7], 1
    %15 = vsyncpa %s14, 0
    loop: start=0, step=1, limit=4
    $region2: #{tpu_custom_call.1} parent=1 // loop_pre_header
      _
    $region3: #{tpu_custom_call.1} parent=1 // loop_header
      %s17 = sphi 0, %s21
      %p18 = scmp.ge.s32.totalorder %s17, 4
      %s25 = sphi 0, %s25
      %s27 = sphi 0, %s25
      %s28 = sphi 0, %s27
      %s42 = sphi 0, %s28
      %s48 = sphi 0, %s50
      %s51 = sphi 0, %s48
      %s52 = sphi 0, %s51
      %s68 = sphi 0, %s52
      %s72 = sphi 0, %s72
      %s74 = sphi 0, %s72
      %s75 = sphi 0, %s74
      %s89 = sphi 0, %s75
      %s93 = sphi 0, %s93
      %s95 = sphi 0, %s93
      %s96 = sphi 0, %s95
      %s110 = sphi 0, %s96
      %s114 = sphi 0, %s114
      %s116 = sphi 0, %s114
      %s117 = sphi 0, %s116
      %s131 = sphi 0, %s117
      %s135 = sphi 0, %s135
      %s137 = sphi 0, %s135
      %s138 = sphi 0, %s137
      %s152 = sphi 0, %s138
      %s156 = sphi 0, %s156
      %s158 = sphi 0, %s156
      %s159 = sphi 0, %s158
      %s173 = sphi 0, %s159
      %s179 = sphi 0, %s181
      %s182 = sphi 0, %s179
      %s183 = sphi 0, %s182
      %s199 = sphi 0, %s183
    $region4: #{tpu_custom_call.1} parent=1 // loop_header_branch
      %20 = sbr.rel (%p18) target = $region8
    $region5: #{tpu_custom_call.1} parent=1 // loop_body
      %s22 = ssub.s32 %s17, 1
      %s23 = ssub.s32 %s17, 2
      %s24 = sadd.s32 %s17, 1
      %s26 = sadd.s32 %s25, 1
      %p29 = scmp.eq.s32.totalorder %s17, 1
      %p30 = scmp.ne.s32.totalorder %s25, %s27
      %p31 = scmp.eq.s32.totalorder %s17, 0
      %p32 = por %p30, %p31
      %p33 = scmp.ne.s32.totalorder %s25, %s27
      %p34 = scmp.eq.s32.totalorder %s22, 1
      %p35 = por %p33, %p34
      %p36 = scmp.ne.s32.totalorder %s27, %s28
      %p37 = scmp.eq.s32.totalorder %s22, 0
      %p38 = por %p36, %p37
      %p39 = scmp.ne.s32.totalorder %s27, %s28
      %p40 = scmp.eq.s32.totalorder %s23, 1
      %p41 = por %p39, %p40
      %p43 = scmp.ne.s32.totalorder %s28, %s42
      %p44 = scmp.eq.s32.totalorder %s23, 0
      %p45 = por %p43, %p44
      %s46 = ssub.s32 %s17, %s24
      %p47 = scmp.eq.s32.totalorder %s46, 0
      %s49 = sadd.s32 %s48, 1
      %s50 = scalar_select %p47, %s48, %s49
      %p53 = pneg %p47
      %p54 = scmp.eq.s32.totalorder %s17, 1
      %p55 = por %p53, %p54
      %p56 = scmp.ne.s32.totalorder %s48, %s51
      %p57 = scmp.eq.s32.totalorder %s17, 0
      %p58 = por %p56, %p57
      %p59 = scmp.ne.s32.totalorder %s48, %s51
      %p60 = scmp.eq.s32.totalorder %s22, 1
      %p61 = por %p59, %p60
      %p62 = scmp.ne.s32.totalorder %s51, %s52
      %p63 = scmp.eq.s32.totalorder %s22, 0
      %p64 = por %p62, %p63
      %p65 = scmp.ne.s32.totalorder %s51, %s52
      %p66 = scmp.eq.s32.totalorder %s23, 1
      %p67 = por %p65, %p66
      %p69 = scmp.ne.s32.totalorder %s52, %s68
      %p70 = scmp.eq.s32.totalorder %s23, 0
      %p71 = por %p69, %p70
      %s73 = sadd.s32 %s72, 1
      %p76 = scmp.eq.s32.totalorder %s17, 1
      %p77 = scmp.ne.s32.totalorder %s72, %s74
      %p78 = scmp.eq.s32.totalorder %s17, 0
      %p79 = por %p77, %p78
      %p80 = scmp.ne.s32.totalorder %s72, %s74
      %p81 = scmp.eq.s32.totalorder %s22, 1
      %p82 = por %p80, %p81
      %p83 = scmp.ne.s32.totalorder %s74, %s75
      %p84 = scmp.eq.s32.totalorder %s22, 0
      %p85 = por %p83, %p84
      %p86 = scmp.ne.s32.totalorder %s74, %s75
      %p87 = scmp.eq.s32.totalorder %s23, 1
      %p88 = por %p86, %p87
      %p90 = scmp.ne.s32.totalorder %s75, %s89
      %p91 = scmp.eq.s32.totalorder %s23, 0
      %p92 = por %p90, %p91
      %s94 = sadd.s32 %s93, 1
      %p97 = scmp.eq.s32.totalorder %s17, 1
      %p98 = scmp.ne.s32.totalorder %s93, %s95
      %p99 = scmp.eq.s32.totalorder %s17, 0
      %p100 = por %p98, %p99
      %p101 = scmp.ne.s32.totalorder %s93, %s95
      %p102 = scmp.eq.s32.totalorder %s22, 1
      %p103 = por %p101, %p102
      %p104 = scmp.ne.s32.totalorder %s95, %s96
      %p105 = scmp.eq.s32.totalorder %s22, 0
      %p106 = por %p104, %p105
      %p107 = scmp.ne.s32.totalorder %s95, %s96
      %p108 = scmp.eq.s32.totalorder %s23, 1
      %p109 = por %p107, %p108
      %p111 = scmp.ne.s32.totalorder %s96, %s110
      %p112 = scmp.eq.s32.totalorder %s23, 0
      %p113 = por %p111, %p112
      %s115 = sadd.s32 %s114, 1
      %p118 = scmp.eq.s32.totalorder %s17, 1
      %p119 = scmp.ne.s32.totalorder %s114, %s116
      %p120 = scmp.eq.s32.totalorder %s17, 0
      %p121 = por %p119, %p120
      %p122 = scmp.ne.s32.totalorder %s114, %s116
      %p123 = scmp.eq.s32.totalorder %s22, 1
      %p124 = por %p122, %p123
      %p125 = scmp.ne.s32.totalorder %s116, %s117
      %p126 = scmp.eq.s32.totalorder %s22, 0
      %p127 = por %p125, %p126
      %p128 = scmp.ne.s32.totalorder %s116, %s117
      %p129 = scmp.eq.s32.totalorder %s23, 1
      %p130 = por %p128, %p129
      %p132 = scmp.ne.s32.totalorder %s117, %s131
      %p133 = scmp.eq.s32.totalorder %s23, 0
      %p134 = por %p132, %p133
      %s136 = sadd.s32 %s135, 1
      %p139 = scmp.eq.s32.totalorder %s17, 1
      %p140 = scmp.ne.s32.totalorder %s135, %s137
      %p141 = scmp.eq.s32.totalorder %s17, 0
      %p142 = por %p140, %p141
      %p143 = scmp.ne.s32.totalorder %s135, %s137
      %p144 = scmp.eq.s32.totalorder %s22, 1
      %p145 = por %p143, %p144
      %p146 = scmp.ne.s32.totalorder %s137, %s138
      %p147 = scmp.eq.s32.totalorder %s22, 0
      %p148 = por %p146, %p147
      %p149 = scmp.ne.s32.totalorder %s137, %s138
      %p150 = scmp.eq.s32.totalorder %s23, 1
      %p151 = por %p149, %p150
      %p153 = scmp.ne.s32.totalorder %s138, %s152
      %p154 = scmp.eq.s32.totalorder %s23, 0
      %p155 = por %p153, %p154
      %s157 = sadd.s32 %s156, 1
      %p160 = scmp.eq.s32.totalorder %s17, 1
      %p161 = scmp.ne.s32.totalorder %s156, %s158
      %p162 = scmp.eq.s32.totalorder %s17, 0
      %p163 = por %p161, %p162
      %p164 = scmp.ne.s32.totalorder %s156, %s158
      %p165 = scmp.eq.s32.totalorder %s22, 1
      %p166 = por %p164, %p165
      %p167 = scmp.ne.s32.totalorder %s158, %s159
      %p168 = scmp.eq.s32.totalorder %s22, 0
      %p169 = por %p167, %p168
      %p170 = scmp.ne.s32.totalorder %s158, %s159
      %p171 = scmp.eq.s32.totalorder %s23, 1
      %p172 = por %p170, %p171
      %p174 = scmp.ne.s32.totalorder %s159, %s173
      %p175 = scmp.eq.s32.totalorder %s23, 0
      %p176 = por %p174, %p175
      %s177 = ssub.s32 %s17, %s24
      %p178 = scmp.eq.s32.totalorder %s177, 0
      %s180 = sadd.s32 %s179, 1
      %s181 = scalar_select %p178, %s179, %s180
      %p184 = pneg %p178
      %p185 = scmp.eq.s32.totalorder %s17, 1
      %p186 = por %p184, %p185
      %p187 = scmp.ne.s32.totalorder %s179, %s182
      %p188 = scmp.eq.s32.totalorder %s17, 0
      %p189 = por %p187, %p188
      %p190 = scmp.ne.s32.totalorder %s179, %s182
      %p191 = scmp.eq.s32.totalorder %s22, 1
      %p192 = por %p190, %p191
      %p193 = scmp.ne.s32.totalorder %s182, %s183
      %p194 = scmp.eq.s32.totalorder %s22, 0
      %p195 = por %p193, %p194
      %p196 = scmp.ne.s32.totalorder %s182, %s183
      %p197 = scmp.eq.s32.totalorder %s23, 1
      %p198 = por %p196, %p197
      %p200 = scmp.ne.s32.totalorder %s183, %s199
      %p201 = scmp.eq.s32.totalorder %s23, 0
      %p202 = por %p200, %p201
      %p203 = scmp.le.s32.totalorder 1, %s17
      %p204 = scmp.lt.s32.totalorder %s17, 3
      %p205 = pnand %p203, %p204
      %p206 = pneg %p205
      // Predicated region
      $region9: #{tpu_custom_call.1} parent=5 // pred_check
        _
      $region10: #{tpu_custom_call.1} parent=5 // pred_check_branch
        %208 = sbr.rel (%p205) target = $region12
      $region11: #{tpu_custom_call.1} parent=5 // pred_region
        %s209 = ssub.s32 %s17, 1
        // Predicated region
        $region13: #{tpu_custom_call.1} parent=11 // pred_check
          %p210 = pneg %p38
        $region14: #{tpu_custom_call.1} parent=11 // pred_check_branch
          %212 = sbr.rel (%p210) target = $region16
        $region15: #{tpu_custom_call.1} parent=11 // pred_region
          %s214 = ssub.s32 16, 16
          %215 = vsyncadd [#allocation8], %s214
          %s217 = sshll.u32 %s0, 4
          %s218 = int_to_ptr.vmem [resolvable:$true] %s217
          %220 = dma.vmem_to_smem %s218, 16, [#allocation6], [#allocation8]
        $region16: #{tpu_custom_call.1} parent=11 // pred_fallthru
          _
        // Predicated region
        $region17: #{tpu_custom_call.1} parent=11 // pred_check
          %p221 = pneg %p85
        $region18: #{tpu_custom_call.1} parent=11 // pred_check_branch
          %223 = sbr.rel (%p221) target = $region20
        $region19: #{tpu_custom_call.1} parent=11 // pred_region
          _
        $region20: #{tpu_custom_call.1} parent=11 // pred_fallthru
          _
        // Predicated region
        $region21: #{tpu_custom_call.1} parent=11 // pred_check
          %p224 = pneg %p106
        $region22: #{tpu_custom_call.1} parent=11 // pred_check_branch
          %226 = sbr.rel (%p224) target = $region24
        $region23: #{tpu_custom_call.1} parent=11 // pred_region
          _
        $region24: #{tpu_custom_call.1} parent=11 // pred_fallthru
          _
        // Predicated region
        $region25: #{tpu_custom_call.1} parent=11 // pred_check
          %p227 = pneg %p127
        $region26: #{tpu_custom_call.1} parent=11 // pred_check_branch
          %229 = sbr.rel (%p227) target = $region28
        $region27: #{tpu_custom_call.1} parent=11 // pred_region
          _
        $region28: #{tpu_custom_call.1} parent=11 // pred_fallthru
          _
        // Predicated region
        $region29: #{tpu_custom_call.1} parent=11 // pred_check
          %p230 = pneg %p148
        $region30: #{tpu_custom_call.1} parent=11 // pred_check_branch
          %232 = sbr.rel (%p230) target = $region32
        $region31: #{tpu_custom_call.1} parent=11 // pred_region
          _
        $region32: #{tpu_custom_call.1} parent=11 // pred_fallthru
          _
        // Predicated region
        $region33: #{tpu_custom_call.1} parent=11 // pred_check
          %p233 = pneg %p169
        $region34: #{tpu_custom_call.1} parent=11 // pred_check_branch
          %235 = sbr.rel (%p233) target = $region36
        $region35: #{tpu_custom_call.1} parent=11 // pred_region
          _
        $region36: #{tpu_custom_call.1} parent=11 // pred_fallthru
          _
      $region12: #{tpu_custom_call.1} parent=5 // pred_fallthru
        _
      %p236 = scmp.lt.s32.totalorder %s17, 2
      // Predicated region
      $region37: #{tpu_custom_call.1} parent=5 // pred_check
        %p237 = pneg %p236
      $region38: #{tpu_custom_call.1} parent=5 // pred_check_branch
        %239 = sbr.rel (%p237) target = $region40
      $region39: #{tpu_custom_call.1} parent=5 // pred_region
        // Predicated region
        $region41: #{tpu_custom_call.1} parent=39 // pred_check
          %p240 = pneg %p58
        $region42: #{tpu_custom_call.1} parent=39 // pred_check_branch
          %242 = sbr.rel (%p240) target = $region44
        $region43: #{tpu_custom_call.1} parent=39 // pred_region
          %p243 = scmp.lt.s32.totalorder %s17, 1
          %s244 = scalar_select %p243, %s17, 1
          %s245 = smul.addr %s244, 2
          %s246 = smul.addr %s245, 8
          %s247 = scalar_lea.vmem %s1, %s246
        $region44: #{tpu_custom_call.1} parent=39 // pred_fallthru
          _
      $region40: #{tpu_custom_call.1} parent=5 // pred_fallthru
        _
      %p248 = scmp.le.s32.totalorder 1, %s17
      %p249 = scmp.lt.s32.totalorder %s17, 3
      %p250 = pnand %p248, %p249
      %p251 = pneg %p250
      // Predicated region
      $region45: #{tpu_custom_call.1} parent=5 // pred_check
        _
      $region46: #{tpu_custom_call.1} parent=5 // pred_check_branch
        %253 = sbr.rel (%p250) target = $region48
      $region47: #{tpu_custom_call.1} parent=5 // pred_region
        %s254 = ssub.s32 %s17, 1
        // Predicated region
        $region49: #{tpu_custom_call.1} parent=47 // pred_check
          %p255 = pneg %p38
        $region50: #{tpu_custom_call.1} parent=47 // pred_check_branch
          %257 = sbr.rel (%p255) target = $region52
        $region51: #{tpu_custom_call.1} parent=47 // pred_region
          %258 = dma.done [#allocation8], 16
        $region52: #{tpu_custom_call.1} parent=47 // pred_fallthru
          _
        %259 = sfence
        %p260 = pneg %p38
        %p261 = pneg %p35
        %p262 = scmp.lt.s32.totalorder %s22, 1
        %s263 = scalar_select %p262, %s22, 1
        %s264 = smul.addr %s263, 2
        %s265 = smul.addr %s264, 8
        %s266 = scalar_lea.vmem %s1, %s265
        %p267 = pneg %p64
        %p268 = pneg %p61
        %p269 = pneg %p85
        %p270 = pneg %p82
        %p271 = pneg %p106
        %p272 = pneg %p103
        %p273 = pneg %p127
        %p274 = pneg %p124
        %p275 = pneg %p148
        %p276 = pneg %p145
        %p277 = pneg %p169
        %p278 = pneg %p166
        %p279 = pneg %p195
        %p280 = pneg %p192
        %s281 = sand.u32 %s182, 1
        %s282 = scalar_lea.sflag [#allocation7], %s281
        %s283 = sand.u32 %s182, 1
        %s284 = smul.addr %s283, 16
        %s285 = scalar_lea.vmem [#allocation9], %s284
        %p286 = scmp.lt.s32.totalorder %s22, 1
        %s287 = scalar_select %p286, %s22, 1
        %s288 = smul.addr %s287, 2
        %s289 = smul.addr %s288, 8
        %s290 = scalar_lea.vmem %s1, %s289
        %v292 = vld [vmem:[%s290] sm:$0xff]
        %v293 = vld [vmem:[%s290 + $0x8] sm:$0xff]
        %vm294 = vcmask 124928
        %295 = vst.msk [vmem:[#allocation2] sm:$0x7] %vm294, 0.0
        %vm296 = vcmask 126976
        %297 = vst.msk [vmem:[#allocation2 + $0x13] sm:$0x1f] %vm296, 0.0
        %v298 = vld [vmem:[%s290] sm:$0xff]
        %v299 = vld [vmem:[%s290 + $0x8] sm:$0xff]
        %vm300 = vcmask 130048
        %301 = vst.msk [vmem:[#allocation2 + $0x3] sm:$0xff] %vm300, %v298
        %302 = vst.msk [vmem:[#allocation2 + $0xb] sm:$0xff] %vm300, %v299
        %vm303 = vcmask 256000
        %304 = vst.msk [vmem:[#allocation3] sm:$0x7] %vm303, 0.0
        %305 = vst.msk [vmem:[#allocation3 + $0x15] sm:$0x7] %vm303, 0.0
        %v306 = vld [vmem:[#allocation2] sm:$0xff]
        %v307 = vld [vmem:[#allocation2 + $0x8] sm:$0xff]
        %v308 = vld [vmem:[#allocation2 + $0x10] sm:$0x3]
        %v309 = vpack.c.bf16 %v307, %v306
        %v310 = vpack.c.bf16 %v308, %v308
        %v311 = vld [vmem:[%s6] sm:$0xf]
        %v312 = vld [vmem:[%s6 + $0x4] sm:$0xf]
        %v313 = vld [vmem:[%s6 + $0x8] sm:$0x1]
        %315 = vset.pattern.permute.xlu0 0
        %316 = vperm.xlu0 %315, %v311
        %v317 = vpop.permute.xlu0 %316
        %v320 = vunpack.c.l.s4 839922192
        %v321 = vunpack.c.0.s8 %v320
        %v322 = vlaneseq
        %v323 = vshrl.u32 %v322, 7
        %v324 = vsub.s32 %v321, %v323
        %v325 = vrot.slane %v317, %v324
        %327 = vset.pattern.permute.xlu0 0
        %328 = vperm.xlu0 %327, %v312
        %v329 = vpop.permute.xlu0 %328
        %v332 = vunpack.c.l.s4 839922192
        %v333 = vunpack.c.0.s8 %v332
        %v334 = vlaneseq
        %v335 = vshrl.u32 %v334, 7
        %v336 = vsub.s32 %v333, %v335
        %v337 = vrot.slane %v329, %v336
        %339 = vset.pattern.permute.xlu0 0
        %340 = vperm.xlu0 %339, %v313
        %v341 = vpop.permute.xlu0 %340
        %v344 = vunpack.c.l.s4 839922192
        %v345 = vunpack.c.0.s8 %v344
        %v346 = vlaneseq
        %v347 = vshrl.u32 %v346, 7
        %v348 = vsub.s32 %v345, %v347
        %v349 = vrot.slane %v341, %v348
        %v353 = vunpack.c.l.b16 %v325
        %v354 = vunpack.c.l.b16 %v337
        %v355 = vunpack.c.l.b16 %v349
        %v356 = vpack.c.b16 %v354, %v353
        %v357 = vpack.c.b16 %v355, %v355
        %v360 = vmul.bf16 %v309, %v356
        %v361 = vmul.bf16 %v310, %v357
        %362 = vst.msk [vmem:[#allocation4] sm:$0xff] %vm300, %v360
        %vm363 = vcmask 122880
        %364 = vst.msk [vmem:[#allocation4 + $0x10] sm:$0x1] %vm363, %v361
        %v365 = vld [vmem:[#allocation2 + $0x1] sm:$0xff]
        %v366 = vld [vmem:[#allocation2 + $0x9] sm:$0xff]
        %v367 = vld [vmem:[#allocation2 + $0x11] sm:$0x3]
        %v368 = vpack.c.bf16 %v366, %v365
        %v369 = vpack.c.bf16 %v367, %v367
        %372 = vrot.lane.b32.xlu0 %v368, 16
        %v373 = vpop.permute.xlu0 %372
        %374 = vrot.lane.b32.xlu0 %v369, 16
        %v375 = vpop.permute.xlu0 %374
        %vm378 = vcmask 261248
        %379 = vst.msk [vmem:[#allocation4] sm:$0xff] %vm378, %v373
        %vm380 = vcmask 254080
        %381 = vst.msk [vmem:[#allocation4 + $0x10] sm:$0x1] %vm380, %v375
        %v382 = vld [vmem:[#allocation2 + $0x2] sm:$0xff]
        %v383 = vld [vmem:[#allocation2 + $0xa] sm:$0xff]
        %v384 = vld [vmem:[#allocation2 + $0x12] sm:$0x3]
        %v385 = vpack.c.bf16 %v383, %v382
        %v386 = vpack.c.bf16 %v384, %v384
        %s387 = scalar_lea.vmem %s6, 24
        %v388 = vld [vmem:[%s387] sm:$0xf]
        %v389 = vld [vmem:[%s387 + $0x4] sm:$0xf]
        %v390 = vld [vmem:[%s387 + $0x8] sm:$0x1]
        %392 = vset.pattern.permute.xlu0 0
        %393 = vperm.xlu0 %392, %v388
        %v394 = vpop.permute.xlu0 %393
        %v397 = vunpack.c.l.s4 839922192
        %v398 = vunpack.c.0.s8 %v397
        %v399 = vlaneseq
        %v400 = vshrl.u32 %v399, 7
        %v401 = vsub.s32 %v398, %v400
        %v402 = vrot.slane %v394, %v401
        %404 = vset.pattern.permute.xlu0 0
        %405 = vperm.xlu0 %404, %v389
        %v406 = vpop.permute.xlu0 %405
        %v409 = vunpack.c.l.s4 839922192
        %v410 = vunpack.c.0.s8 %v409
        %v411 = vlaneseq
        %v412 = vshrl.u32 %v411, 7
        %v413 = vsub.s32 %v410, %v412
        %v414 = vrot.slane %v406, %v413
        %416 = vset.pattern.permute.xlu0 0
        %417 = vperm.xlu0 %416, %v390
        %v418 = vpop.permute.xlu0 %417
        %v421 = vunpack.c.l.s4 839922192
        %v422 = vunpack.c.0.s8 %v421
        %v423 = vlaneseq
        %v424 = vshrl.u32 %v423, 7
        %v425 = vsub.s32 %v422, %v424
        %v426 = vrot.slane %v418, %v425
        %v430 = vunpack.c.l.b16 %v402
        %v431 = vunpack.c.l.b16 %v414
        %v432 = vunpack.c.l.b16 %v426
        %v433 = vpack.c.b16 %v431, %v430
        %v434 = vpack.c.b16 %v432, %v432
        %v437 = vmul.bf16 %v385, %v433
        %v438 = vmul.bf16 %v386, %v434
        %441 = vrot.lane.b32.xlu0 %v437, 32
        %v442 = vpop.permute.xlu0 %441
        %443 = vrot.lane.b32.xlu0 %v438, 32
        %v444 = vpop.permute.xlu0 %443
        %vm447 = vcmask 392448
        %448 = vst.msk [vmem:[#allocation4] sm:$0xff] %vm447, %v442
        %vm449 = vcmask 385280
        %450 = vst.msk [vmem:[#allocation4 + $0x10] sm:$0x1] %vm449, %v444
        %v451 = vld [vmem:[#allocation2 + $0x2] sm:$0xff]
        %v452 = vld [vmem:[#allocation2 + $0xa] sm:$0xff]
        %v453 = vld [vmem:[#allocation2 + $0x12] sm:$0x3]
        %v454 = vpack.c.bf16 %v452, %v451
        %v455 = vpack.c.bf16 %v453, %v453
        %v456 = vld [vmem:[%s6] sm:$0xf]
        %v457 = vld [vmem:[%s6 + $0x4] sm:$0xf]
        %v458 = vld [vmem:[%s6 + $0x8] sm:$0x1]
        %460 = vset.pattern.permute.xlu0 0
        %461 = vperm.xlu0 %460, %v456
        %v462 = vpop.permute.xlu0 %461
        %v465 = vunpack.c.l.s4 839922192
        %v466 = vunpack.c.0.s8 %v465
        %v467 = vlaneseq
        %v468 = vshrl.u32 %v467, 7
        %v469 = vsub.s32 %v466, %v468
        %v470 = vrot.slane %v462, %v469
        %472 = vset.pattern.permute.xlu0 0
        %473 = vperm.xlu0 %472, %v457
        %v474 = vpop.permute.xlu0 %473
        %v477 = vunpack.c.l.s4 839922192
        %v478 = vunpack.c.0.s8 %v477
        %v479 = vlaneseq
        %v480 = vshrl.u32 %v479, 7
        %v481 = vsub.s32 %v478, %v480
        %v482 = vrot.slane %v474, %v481
        %484 = vset.pattern.permute.xlu0 0
        %485 = vperm.xlu0 %484, %v458
        %v486 = vpop.permute.xlu0 %485
        %v489 = vunpack.c.l.s4 839922192
        %v490 = vunpack.c.0.s8 %v489
        %v491 = vlaneseq
        %v492 = vshrl.u32 %v491, 7
        %v493 = vsub.s32 %v490, %v492
        %v494 = vrot.slane %v486, %v493
        %v498 = vunpack.c.l.b16 %v470
        %v499 = vunpack.c.l.b16 %v482
        %v500 = vunpack.c.l.b16 %v494
        %v501 = vpack.c.b16 %v499, %v498
        %v502 = vpack.c.b16 %v500, %v500
        %v505 = vmul.bf16 %v454, %v501
        %v506 = vmul.bf16 %v455, %v502
        %509 = vrot.lane.b32.xlu0 %v505, 48
        %v510 = vpop.permute.xlu0 %509
        %511 = vrot.lane.b32.xlu0 %v506, 48
        %v512 = vpop.permute.xlu0 %511
        %vm515 = vcmask 523648
        %516 = vst.msk [vmem:[#allocation4] sm:$0xff] %vm515, %v510
        %vm517 = vcmask 516480
        %518 = vst.msk [vmem:[#allocation4 + $0x10] sm:$0x1] %vm517, %v512
        %v519 = vld [vmem:[#allocation2 + $0x3] sm:$0xff]
        %v520 = vld [vmem:[#allocation2 + $0xb] sm:$0xff]
        %v521 = vld [vmem:[#allocation2 + $0x13] sm:$0x3]
        %v522 = vpack.c.bf16 %v520, %v519
        %v523 = vpack.c.bf16 %v521, %v521
        %526 = vrot.lane.b32.xlu0 %v522, 64
        %v527 = vpop.permute.xlu0 %526
        %528 = vrot.lane.b32.xlu0 %v523, 64
        %v529 = vpop.permute.xlu0 %528
        %vm532 = vcmask 654848
        %533 = vst.msk [vmem:[#allocation4] sm:$0xff] %vm532, %v527
        %vm534 = vcmask 647680
        %535 = vst.msk [vmem:[#allocation4 + $0x10] sm:$0x1] %vm534, %v529
        %v536 = vld [vmem:[#allocation2 + $0x4] sm:$0xff]
        %v537 = vld [vmem:[#allocation2 + $0xc] sm:$0xff]
        %v538 = vld [vmem:[#allocation2 + $0x14] sm:$0x3]
        %v539 = vpack.c.bf16 %v537, %v536
        %v540 = vpack.c.bf16 %v538, %v538
        %v541 = vld [vmem:[%s387] sm:$0xf]
        %v542 = vld [vmem:[%s387 + $0x4] sm:$0xf]
        %v543 = vld [vmem:[%s387 + $0x8] sm:$0x1]
        %545 = vset.pattern.permute.xlu0 0
        %546 = vperm.xlu0 %545, %v541
        %v547 = vpop.permute.xlu0 %546
        %v550 = vunpack.c.l.s4 839922192
        %v551 = vunpack.c.0.s8 %v550
        %v552 = vlaneseq
        %v553 = vshrl.u32 %v552, 7
        %v554 = vsub.s32 %v551, %v553
        %v555 = vrot.slane %v547, %v554
        %557 = vset.pattern.permute.xlu0 0
        %558 = vperm.xlu0 %557, %v542
        %v559 = vpop.permute.xlu0 %558
        %v562 = vunpack.c.l.s4 839922192
        %v563 = vunpack.c.0.s8 %v562
        %v564 = vlaneseq
        %v565 = vshrl.u32 %v564, 7
        %v566 = vsub.s32 %v563, %v565
        %v567 = vrot.slane %v559, %v566
        %569 = vset.pattern.permute.xlu0 0
        %570 = vperm.xlu0 %569, %v543
        %v571 = vpop.permute.xlu0 %570
        %v574 = vunpack.c.l.s4 839922192
        %v575 = vunpack.c.0.s8 %v574
        %v576 = vlaneseq
        %v577 = vshrl.u32 %v576, 7
        %v578 = vsub.s32 %v575, %v577
        %v579 = vrot.slane %v571, %v578
        %v583 = vunpack.c.l.b16 %v555
        %v584 = vunpack.c.l.b16 %v567
        %v585 = vunpack.c.l.b16 %v579
        %v586 = vpack.c.b16 %v584, %v583
        %v587 = vpack.c.b16 %v585, %v585
        %v590 = vmul.bf16 %v539, %v586
        %v591 = vmul.bf16 %v540, %v587
        %594 = vrot.lane.b32.xlu0 %v590, 80
        %v595 = vpop.permute.xlu0 %594
        %596 = vrot.lane.b32.xlu0 %v591, 80
        %v597 = vpop.permute.xlu0 %596
        %vm600 = vcmask 786048
        %601 = vst.msk [vmem:[#allocation4] sm:$0xff] %vm600, %v595
        %vm602 = vcmask 778880
        %603 = vst.msk [vmem:[#allocation4 + $0x10] sm:$0x1] %vm602, %v597
        %v604 = vld [vmem:[#allocation2 + $0x4] sm:$0xff]
        %v605 = vld [vmem:[#allocation2 + $0xc] sm:$0xff]
        %v606 = vld [vmem:[#allocation2 + $0x14] sm:$0x3]
        %v607 = vpack.c.bf16 %v605, %v604
        %v608 = vpack.c.bf16 %v606, %v606
        %v609 = vld [vmem:[%s6] sm:$0xf]
        %v610 = vld [vmem:[%s6 + $0x4] sm:$0xf]
        %v611 = vld [vmem:[%s6 + $0x8] sm:$0x1]
        %613 = vset.pattern.permute.xlu0 0
        %614 = vperm.xlu0 %613, %v609
        %v615 = vpop.permute.xlu0 %614
        %v618 = vunpack.c.l.s4 839922192
        %v619 = vunpack.c.0.s8 %v618
        %v620 = vlaneseq
        %v621 = vshrl.u32 %v620, 7
        %v622 = vsub.s32 %v619, %v621
        %v623 = vrot.slane %v615, %v622
        %625 = vset.pattern.permute.xlu0 0
        %626 = vperm.xlu0 %625, %v610
        %v627 = vpop.permute.xlu0 %626
        %v630 = vunpack.c.l.s4 839922192
        %v631 = vunpack.c.0.s8 %v630
        %v632 = vlaneseq
        %v633 = vshrl.u32 %v632, 7
        %v634 = vsub.s32 %v631, %v633
        %v635 = vrot.slane %v627, %v634
        %637 = vset.pattern.permute.xlu0 0
        %638 = vperm.xlu0 %637, %v611
        %v639 = vpop.permute.xlu0 %638
        %v642 = vunpack.c.l.s4 839922192
        %v643 = vunpack.c.0.s8 %v642
        %v644 = vlaneseq
        %v645 = vshrl.u32 %v644, 7
        %v646 = vsub.s32 %v643, %v645
        %v647 = vrot.slane %v639, %v646
        %v651 = vunpack.c.l.b16 %v623
        %v652 = vunpack.c.l.b16 %v635
        %v653 = vunpack.c.l.b16 %v647
        %v654 = vpack.c.b16 %v652, %v651
        %v655 = vpack.c.b16 %v653, %v653
        %v658 = vmul.bf16 %v607, %v654
        %v659 = vmul.bf16 %v608, %v655
        %662 = vrot.lane.b32.xlu0 %v658, 96
        %v663 = vpop.permute.xlu0 %662
        %664 = vrot.lane.b32.xlu0 %v659, 96
        %v665 = vpop.permute.xlu0 %664
        %vm668 = vcmask 917248
        %669 = vst.msk [vmem:[#allocation4] sm:$0xff] %vm668, %v663
        %vm670 = vcmask 910080
        %671 = vst.msk [vmem:[#allocation4 + $0x10] sm:$0x1] %vm670, %v665
        %v672 = vld [vmem:[#allocation2 + $0x5] sm:$0xff]
        %v673 = vld [vmem:[#allocation2 + $0xd] sm:$0xff]
        %v674 = vld [vmem:[#allocation2 + $0x15] sm:$0x3]
        %v675 = vpack.c.bf16 %v673, %v672
        %v676 = vpack.c.bf16 %v674, %v674
        %679 = vrot.lane.b32.xlu0 %v675, 112
        %v680 = vpop.permute.xlu0 %679
        %681 = vrot.lane.b32.xlu0 %v676, 112
        %v682 = vpop.permute.xlu0 %681
        %vm685 = vcmask 1048448
        %686 = vst.msk [vmem:[#allocation4] sm:$0xff] %vm685, %v680
        %vm687 = vcmask 1041280
        %688 = vst.msk [vmem:[#allocation4 + $0x10] sm:$0x1] %vm687, %v682
        %v689 = vld [vmem:[#allocation2 + $0x6] sm:$0xff]
        %v690 = vld [vmem:[#allocation2 + $0xe] sm:$0xff]
        %v691 = vld [vmem:[#allocation2 + $0x16] sm:$0x3]
        %v692 = vpack.c.bf16 %v690, %v689
        %v693 = vpack.c.bf16 %v691, %v691
        %v694 = vld [vmem:[%s387] sm:$0xf]
        %v695 = vld [vmem:[%s387 + $0x4] sm:$0xf]
        %v696 = vld [vmem:[%s387 + $0x8] sm:$0x1]
        %698 = vset.pattern.permute.xlu0 0
        %699 = vperm.xlu0 %698, %v694
        %v700 = vpop.permute.xlu0 %699
        %v703 = vunpack.c.l.s4 839922192
        %v704 = vunpack.c.0.s8 %v703
        %v705 = vlaneseq
        %v706 = vshrl.u32 %v705, 7
        %v707 = vsub.s32 %v704, %v706
        %v708 = vrot.slane %v700, %v707
        %710 = vset.pattern.permute.xlu0 0
        %711 = vperm.xlu0 %710, %v695
        %v712 = vpop.permute.xlu0 %711
        %v715 = vunpack.c.l.s4 839922192
        %v716 = vunpack.c.0.s8 %v715
        %v717 = vlaneseq
        %v718 = vshrl.u32 %v717, 7
        %v719 = vsub.s32 %v716, %v718
        %v720 = vrot.slane %v712, %v719
        %722 = vset.pattern.permute.xlu0 0
        %723 = vperm.xlu0 %722, %v696
        %v724 = vpop.permute.xlu0 %723
        %v727 = vunpack.c.l.s4 839922192
        %v728 = vunpack.c.0.s8 %v727
        %v729 = vlaneseq
        %v730 = vshrl.u32 %v729, 7
        %v731 = vsub.s32 %v728, %v730
        %v732 = vrot.slane %v724, %v731
        %v736 = vunpack.c.l.b16 %v708
        %v737 = vunpack.c.l.b16 %v720
        %v738 = vunpack.c.l.b16 %v732
        %v739 = vpack.c.b16 %v737, %v736
        %v740 = vpack.c.b16 %v738, %v738
        %v743 = vmul.bf16 %v692, %v739
        %v744 = vmul.bf16 %v693, %v740
        %745 = vst.msk [vmem:[#allocation4 + $0x8] sm:$0xff] %vm300, %v743
        %746 = vst.msk [vmem:[#allocation4 + $0x18] sm:$0x1] %vm363, %v744
        %v747 = vld [vmem:[#allocation4] sm:$0xff]
        %v748 = vld [vmem:[#allocation4 + $0x8] sm:$0xff]
        %v749 = vld [vmem:[#allocation4 + $0x10] sm:$0x1]
        %v750 = vld [vmem:[#allocation4 + $0x18] sm:$0x1]
        %v751 = vld [vmem:[%s2] sm:$0xf]
        %v752 = vld [vmem:[%s2 + $0x4] sm:$0xf]
        %v753 = vld [vmem:[%s2 + $0x8] sm:$0xf]
        %v754 = vld [vmem:[%s2 + $0xc] sm:$0xf]
        %v755 = vld [vmem:[%s2 + $0x10] sm:$0xf]
        %v756 = vld [vmem:[%s2 + $0x14] sm:$0xf]
        %v757 = vld [vmem:[%s2 + $0x18] sm:$0xf]
        %v758 = vld [vmem:[%s2 + $0x1c] sm:$0xf]
        %v759 = vld [vmem:[%s2 + $0x20] sm:$0xf]
        %v760 = vld [vmem:[%s2 + $0x24] sm:$0xf]
        %v761 = vld [vmem:[%s2 + $0x28] sm:$0xf]
        %v762 = vld [vmem:[%s2 + $0x2c] sm:$0xf]
        %v763 = vld [vmem:[%s2 + $0x30] sm:$0xf]
        %v764 = vld [vmem:[%s2 + $0x34] sm:$0xf]
        %v765 = vld [vmem:[%s2 + $0x38] sm:$0xf]
        %v766 = vld [vmem:[%s2 + $0x3c] sm:$0xf]
        %v767 = vld [vmem:[%s2 + $0x40] sm:$0xf]
        %v768 = vld [vmem:[%s2 + $0x44] sm:$0xf]
        %v769 = vld [vmem:[%s3] sm:$0x1]
        %v771 = vlaneseq
        %v772 = vshrl.u32 %v771, 7
        %v773 = vsub.s32 0, %v772
        %v774 = vrot.slane %v769, %v773
        %v794 = vunpack.c.l.b16 %v751
        %v795 = vunpack.c.l.b16 %v752
        %v796 = vunpack.c.l.b16 %v753
        %v797 = vunpack.c.l.b16 %v754
        %v798 = vunpack.c.l.b16 %v755
        %v799 = vunpack.c.l.b16 %v756
        %v800 = vunpack.c.l.b16 %v757
        %v801 = vunpack.c.l.b16 %v758
        %v802 = vunpack.c.l.b16 %v759
        %v803 = vunpack.c.l.b16 %v760
        %v804 = vunpack.c.l.b16 %v761
        %v805 = vunpack.c.l.b16 %v762
        %v806 = vunpack.c.l.b16 %v763
        %v807 = vunpack.c.l.b16 %v764
        %v808 = vunpack.c.l.b16 %v765
        %v809 = vunpack.c.l.b16 %v766
        %v810 = vunpack.c.l.b16 %v767
        %v811 = vunpack.c.l.b16 %v768
        %v812 = vpack.c.b16 %v795, %v794
        %v813 = vpack.c.b16 %v797, %v796
        %v814 = vpack.c.b16 %v799, %v798
        %v815 = vpack.c.b16 %v801, %v800
        %v816 = vpack.c.b16 %v803, %v802
        %v817 = vpack.c.b16 %v805, %v804
        %v818 = vpack.c.b16 %v807, %v806
        %v819 = vpack.c.b16 %v809, %v808
        %v820 = vpack.c.b16 %v811, %v810
        %v831 = vsel %vm300, %v748, 0
        %v834 = vsel %vm300, %v750, 0
        %836 = vmatprep.subr.bf16.mxu0 0
        %837 = vmatpush1.bf16.msra.mxu0 %v812
        %838 = vmatprep.subr.bf16.mxu0 0
        %839 = vmatpush1.bf16.msra.mxu0 %v813
        %840 = vmatprep.subr.bf16.mxu0 0
        %841 = vmatpush1.bf16.msra.mxu0 %v814
        %842 = vmatprep.subr.bf16.mxu0 0
        %843 = vmatpush1.bf16.msra.mxu0 %v815
        %844 = vmatprep.subr.bf16.mxu0 0
        %845 = vmatpush1.bf16.msra.mxu0 %v816
        %846 = vmatprep.subr.bf16.mxu0 0
        %847 = vmatpush1.bf16.msra.mxu0 %v817
        %848 = vmatprep.subr.bf16.mxu0 0
        %849 = vmatpush1.bf16.msra.mxu0 %v818
        %850 = vmatprep.subr.bf16.mxu0 0
        %851 = vmatpush1.bf16.msra.mxu0 %v819
        %852 = vmatprep.subr.bf16.mxu0 0
        %853 = vmatpush1.bf16.msra.mxu0 %v820
        %854 = vmatprep.subr.bf16.mxu0 0
        %855 = vmatpush1.bf16.msra.mxu0 0
        %856 = vmatprep.subr.bf16.mxu0 0
        %857 = vmatpush1.bf16.msra.mxu0 0
        %858 = vmatprep.subr.bf16.mxu0 0
        %859 = vmatpush1.bf16.msra.mxu0 0
        %860 = vmatprep.subr.bf16.mxu0 0
        %861 = vmatpush1.bf16.msra.mxu0 0
        %862 = vmatprep.subr.bf16.mxu0 0
        %863 = vmatpush1.bf16.msra.mxu0 0
        %864 = vmatprep.subr.bf16.mxu0 0
        %865 = vmatpush1.bf16.msra.mxu0 0
        %866 = vmatprep.subr.bf16.mxu0 0
        %867 = vmatpush1.bf16.msra.mxu0 0
        %868 = vmatprep.mubr.bf16.mxu0 %v831
        %869 = vmatmul.mubr.bf16.gmra.mrb[0].mxu0 %v747
        %v870 = vpop.f32.mrb[0].mxu0
        %v871 = vadd.f32 %v774, %v870
        %v872 = vpop.f32.mrb[0].mxu0
        %v873 = vpop.f32.mrb[0].mxu0
        %v874 = vadd.f32 %v774, %v873
        %v875 = vpop.f32.mrb[0].mxu0
        %876 = vmatprep.mubr.bf16.mxu0 %v834
        %877 = vmatmul.mubr.bf16.gmra.mrb[0].mxu0 %v749
        %v878 = vpop.f32.mrb[0].mxu0
        %v879 = vadd.f32 %v774, %v878
        %v880 = vpop.f32.mrb[0].mxu0
        %v881 = vpop.f32.mrb[0].mxu0
        %v882 = vpop.f32.mrb[0].mxu0
        %883 = vdwg.mxu0
        %v884 = vmul.f32 %v871, 0.5
        %v885 = vmul.f32 %v874, 0.5
        %v886 = vmul.f32 %v879, 0.5
        %v887 = vmul.f32 %v871, 0.70710677
        %v888 = vmul.f32 %v874, 0.70710677
        %v889 = vmul.f32 %v879, 0.70710677
        %v890 = vand.u32 2147483647, %v887
        %v891 = vand.u32 2147483647, %v888
        %v892 = vand.u32 2147483647, %v889
        %v893 = vmul.f32 %v890, 0.3275911
        %v894 = vmul.f32 %v891, 0.3275911
        %v895 = vmul.f32 %v892, 0.3275911
        %v896 = vadd.f32 %v893, 1.0
        %v897 = vadd.f32 %v894, 1.0
        %v898 = vadd.f32 %v895, 1.0
        %v899 = vrcp.pop %v896
        %v900 = vrcp.pop %v897
        %v901 = vrcp.pop %v898
        %v902 = vmul.f32 %v899, 1.0614054
        %v903 = vmul.f32 %v900, 1.0614054
        %v904 = vmul.f32 %v901, 1.0614054
        %v905 = vadd.f32 %v902, -1.4531521
        %v906 = vadd.f32 %v903, -1.4531521
        %v907 = vadd.f32 %v904, -1.4531521
        %v908 = vmul.f32 %v905, %v899
        %v909 = vmul.f32 %v906, %v900
        %v910 = vmul.f32 %v907, %v901
        %v911 = vadd.f32 %v908, 1.4214138
        %v912 = vadd.f32 %v909, 1.4214138
        %v913 = vadd.f32 %v910, 1.4214138
        %v914 = vmul.f32 %v911, %v899
        %v915 = vmul.f32 %v912, %v900
        %v916 = vmul.f32 %v913, %v901
        %v917 = vadd.f32 %v914, -0.28449672
        %v918 = vadd.f32 %v915, -0.28449672
        %v919 = vadd.f32 %v916, -0.28449672
        %v920 = vmul.f32 %v917, %v899
        %v921 = vmul.f32 %v918, %v900
        %v922 = vmul.f32 %v919, %v901
        %v923 = vadd.f32 %v920, 0.2548296
        %v924 = vadd.f32 %v921, 0.2548296
        %v925 = vadd.f32 %v922, 0.2548296
        %v926 = vmul.f32 %v923, %v899
        %v927 = vmul.f32 %v924, %v900
        %v928 = vmul.f32 %v925, %v901
        %v929 = vsub.f32 0.0, %v890
        %v930 = vsub.f32 0.0, %v891
        %v931 = vsub.f32 0.0, %v892
        %v932 = vmul.f32 %v929, %v890
        %v933 = vmul.f32 %v930, %v891
        %v934 = vmul.f32 %v931, %v892
        %v935 = vmul.f32 %v932, 1.442695
        %v936 = vpow.pop %v935
        %v937 = vmul.f32 %v933, 1.442695
        %v938 = vpow.pop %v937
        %v939 = vmul.f32 %v934, 1.442695
        %v940 = vpow.pop %v939
        %v941 = vmul.f32 %v926, %v936
        %v942 = vmul.f32 %v927, %v938
        %v943 = vmul.f32 %v928, %v940
        %v944 = vsub.f32 1.0, %v941
        %v945 = vsub.f32 1.0, %v942
        %v946 = vsub.f32 1.0, %v943
        %vm947 = vcmp.ge.f32.partialorder %v887, 0.0
        %vm948 = vcmp.ge.f32.partialorder %v888, 0.0
        %vm949 = vcmp.ge.f32.partialorder %v889, 0.0
        %v950 = vsub.f32 0.0, %v944
        %v951 = vsub.f32 0.0, %v945
        %v952 = vsub.f32 0.0, %v946
        %v953 = vsel %vm947, %v944, %v950
        %v954 = vsel %vm948, %v945, %v951
        %v955 = vsel %vm949, %v946, %v952
        %v956 = vadd.f32 %v953, 1.0
        %v957 = vadd.f32 %v954, 1.0
        %v958 = vadd.f32 %v955, 1.0
        %v959 = vmul.f32 %v884, %v956
        %v960 = vmul.f32 %v885, %v957
        %v961 = vmul.f32 %v886, %v958
        %vm962 = vcmask 261120
        %963 = vst.msk [vmem:[#allocation3 + $0x3] sm:$0xff] %vm962, %v959
        %964 = vst.msk [vmem:[#allocation3 + $0xb] sm:$0xff] %vm962, %v960
        %vm965 = vcmask 254976
        %966 = vst.msk [vmem:[#allocation3 + $0x13] sm:$0x3] %vm965, %v961
        %v967 = vld [vmem:[#allocation3] sm:$0xff]
        %v968 = vld [vmem:[#allocation3 + $0x8] sm:$0xff]
        %v969 = vpack.c.bf16 %v968, %v967
        %v970 = vld [vmem:[%s6] sm:$0xf]
        %v971 = vld [vmem:[%s6 + $0x4] sm:$0xf]
        %973 = vset.pattern.permute.xlu0 0
        %974 = vperm.xlu0 %973, %v970
        %v975 = vpop.permute.xlu0 %974
        %v978 = vunpack.c.l.s4 839922192
        %v979 = vunpack.c.0.s8 %v978
        %v980 = vlaneseq
        %v981 = vshrl.u32 %v980, 7
        %v982 = vsub.s32 %v979, %v981
        %v983 = vrot.slane %v975, %v982
        %985 = vset.pattern.permute.xlu0 0
        %986 = vperm.xlu0 %985, %v971
        %v987 = vpop.permute.xlu0 %986
        %v990 = vunpack.c.l.s4 839922192
        %v991 = vunpack.c.0.s8 %v990
        %v992 = vlaneseq
        %v993 = vshrl.u32 %v992, 7
        %v994 = vsub.s32 %v991, %v993
        %v995 = vrot.slane %v987, %v994
        %v998 = vunpack.c.l.b16 %v983
        %v999 = vunpack.c.l.b16 %v995
        %v1000 = vpack.c.b16 %v999, %v998
        %v1002 = vmul.bf16 %v969, %v1000
        %1003 = vst.msk [vmem:[#allocation5] sm:$0xff] %vm962, %v1002
        %v1004 = vld [vmem:[#allocation3 + $0x1] sm:$0xff]
        %v1005 = vld [vmem:[#allocation3 + $0x9] sm:$0xff]
        %v1006 = vpack.c.bf16 %v1005, %v1004
        %1008 = vrot.lane.b32.xlu0 %v1006, 32
        %v1009 = vpop.permute.xlu0 %1008
        %vm1011 = vcmask 523520
        %1012 = vst.msk [vmem:[#allocation5] sm:$0xff] %vm1011, %v1009
        %v1013 = vld [vmem:[#allocation3 + $0x2] sm:$0xff]
        %v1014 = vld [vmem:[#allocation3 + $0xa] sm:$0xff]
        %v1015 = vpack.c.bf16 %v1014, %v1013
        %v1016 = vld [vmem:[%s387] sm:$0xf]
        %v1017 = vld [vmem:[%s387 + $0x4] sm:$0xf]
        %1019 = vset.pattern.permute.xlu0 0
        %1020 = vperm.xlu0 %1019, %v1016
        %v1021 = vpop.permute.xlu0 %1020
        %v1024 = vunpack.c.l.s4 839922192
        %v1025 = vunpack.c.0.s8 %v1024
        %v1026 = vlaneseq
        %v1027 = vshrl.u32 %v1026, 7
        %v1028 = vsub.s32 %v1025, %v1027
        %v1029 = vrot.slane %v1021, %v1028
        %1031 = vset.pattern.permute.xlu0 0
        %1032 = vperm.xlu0 %1031, %v1017
        %v1033 = vpop.permute.xlu0 %1032
        %v1036 = vunpack.c.l.s4 839922192
        %v1037 = vunpack.c.0.s8 %v1036
        %v1038 = vlaneseq
        %v1039 = vshrl.u32 %v1038, 7
        %v1040 = vsub.s32 %v1037, %v1039
        %v1041 = vrot.slane %v1033, %v1040
        %v1044 = vunpack.c.l.b16 %v1029
        %v1045 = vunpack.c.l.b16 %v1041
        %v1046 = vpack.c.b16 %v1045, %v1044
        %v1048 = vmul.bf16 %v1015, %v1046
        %1050 = vrot.lane.b32.xlu0 %v1048, 64
        %v1051 = vpop.permute.xlu0 %1050
        %vm1053 = vcmask 785920
        %1054 = vst.msk [vmem:[#allocation5] sm:$0xff] %vm1053, %v1051
        %v1055 = vld [vmem:[#allocation3 + $0x2] sm:$0xff]
        %v1056 = vld [vmem:[#allocation3 + $0xa] sm:$0xff]
        %v1057 = vpack.c.bf16 %v1056, %v1055
        %v1058 = vld [vmem:[%s6] sm:$0xf]
        %v1059 = vld [vmem:[%s6 + $0x4] sm:$0xf]
        %1061 = vset.pattern.permute.xlu0 0
        %1062 = vperm.xlu0 %1061, %v1058
        %v1063 = vpop.permute.xlu0 %1062
        %v1066 = vunpack.c.l.s4 839922192
        %v1067 = vunpack.c.0.s8 %v1066
        %v1068 = vlaneseq
        %v1069 = vshrl.u32 %v1068, 7
        %v1070 = vsub.s32 %v1067, %v1069
        %v1071 = vrot.slane %v1063, %v1070
        %1073 = vset.pattern.permute.xlu0 0
        %1074 = vperm.xlu0 %1073, %v1059
        %v1075 = vpop.permute.xlu0 %1074
        %v1078 = vunpack.c.l.s4 839922192
        %v1079 = vunpack.c.0.s8 %v1078
        %v1080 = vlaneseq
        %v1081 = vshrl.u32 %v1080, 7
        %v1082 = vsub.s32 %v1079, %v1081
        %v1083 = vrot.slane %v1075, %v1082
        %v1086 = vunpack.c.l.b16 %v1071
        %v1087 = vunpack.c.l.b16 %v1083
        %v1088 = vpack.c.b16 %v1087, %v1086
        %v1090 = vmul.bf16 %v1057, %v1088
        %1092 = vrot.lane.b32.xlu0 %v1090, 96
        %v1093 = vpop.permute.xlu0 %1092
        %vm1095 = vcmask 1048320
        %1096 = vst.msk [vmem:[#allocation5] sm:$0xff] %vm1095, %v1093
        %v1097 = vld [vmem:[#allocation3 + $0x3] sm:$0xff]
        %v1098 = vld [vmem:[#allocation3 + $0xb] sm:$0xff]
        %v1099 = vpack.c.bf16 %v1098, %v1097
        %1100 = vst.msk [vmem:[#allocation5 + $0x8] sm:$0xff] %vm962, %v1099
        %v1101 = vld [vmem:[#allocation3 + $0x4] sm:$0xff]
        %v1102 = vld [vmem:[#allocation3 + $0xc] sm:$0xff]
        %v1103 = vpack.c.bf16 %v1102, %v1101
        %v1104 = vld [vmem:[%s387] sm:$0xf]
        %v1105 = vld [vmem:[%s387 + $0x4] sm:$0xf]
        %1107 = vset.pattern.permute.xlu0 0
        %1108 = vperm.xlu0 %1107, %v1104
        %v1109 = vpop.permute.xlu0 %1108
        %v1112 = vunpack.c.l.s4 839922192
        %v1113 = vunpack.c.0.s8 %v1112
        %v1114 = vlaneseq
        %v1115 = vshrl.u32 %v1114, 7
        %v1116 = vsub.s32 %v1113, %v1115
        %v1117 = vrot.slane %v1109, %v1116
        %1119 = vset.pattern.permute.xlu0 0
        %1120 = vperm.xlu0 %1119, %v1105
        %v1121 = vpop.permute.xlu0 %1120
        %v1124 = vunpack.c.l.s4 839922192
        %v1125 = vunpack.c.0.s8 %v1124
        %v1126 = vlaneseq
        %v1127 = vshrl.u32 %v1126, 7
        %v1128 = vsub.s32 %v1125, %v1127
        %v1129 = vrot.slane %v1121, %v1128
        %v1132 = vunpack.c.l.b16 %v1117
        %v1133 = vunpack.c.l.b16 %v1129
        %v1134 = vpack.c.b16 %v1133, %v1132
        %v1136 = vmul.bf16 %v1103, %v1134
        %1138 = vrot.lane.b32.xlu0 %v1136, 32
        %v1139 = vpop.permute.xlu0 %1138
        %1141 = vst.msk [vmem:[#allocation5 + $0x8] sm:$0xff] %vm1011, %v1139
        %v1142 = vld [vmem:[#allocation3 + $0x4] sm:$0xff]
        %v1143 = vld [vmem:[#allocation3 + $0xc] sm:$0xff]
        %v1144 = vpack.c.bf16 %v1143, %v1142
        %v1145 = vld [vmem:[%s6] sm:$0xf]
        %v1146 = vld [vmem:[%s6 + $0x4] sm:$0xf]
        %1148 = vset.pattern.permute.xlu0 0
        %1149 = vperm.xlu0 %1148, %v1145
        %v1150 = vpop.permute.xlu0 %1149
        %v1153 = vunpack.c.l.s4 839922192
        %v1154 = vunpack.c.0.s8 %v1153
        %v1155 = vlaneseq
        %v1156 = vshrl.u32 %v1155, 7
        %v1157 = vsub.s32 %v1154, %v1156
        %v1158 = vrot.slane %v1150, %v1157
        %1160 = vset.pattern.permute.xlu0 0
        %1161 = vperm.xlu0 %1160, %v1146
        %v1162 = vpop.permute.xlu0 %1161
        %v1165 = vunpack.c.l.s4 839922192
        %v1166 = vunpack.c.0.s8 %v1165
        %v1167 = vlaneseq
        %v1168 = vshrl.u32 %v1167, 7
        %v1169 = vsub.s32 %v1166, %v1168
        %v1170 = vrot.slane %v1162, %v1169
        %v1173 = vunpack.c.l.b16 %v1158
        %v1174 = vunpack.c.l.b16 %v1170
        %v1175 = vpack.c.b16 %v1174, %v1173
        %v1177 = vmul.bf16 %v1144, %v1175
        %1179 = vrot.lane.b32.xlu0 %v1177, 64
        %v1180 = vpop.permute.xlu0 %1179
        %1182 = vst.msk [vmem:[#allocation5 + $0x8] sm:$0xff] %vm1053, %v1180
        %v1183 = vld [vmem:[#allocation3 + $0x5] sm:$0xff]
        %v1184 = vld [vmem:[#allocation3 + $0xd] sm:$0xff]
        %v1185 = vpack.c.bf16 %v1184, %v1183
        %1187 = vrot.lane.b32.xlu0 %v1185, 96
        %v1188 = vpop.permute.xlu0 %1187
        %1190 = vst.msk [vmem:[#allocation5 + $0x8] sm:$0xff] %vm1095, %v1188
        %v1191 = vld [vmem:[#allocation3 + $0x6] sm:$0xff]
        %v1192 = vld [vmem:[#allocation3 + $0xe] sm:$0xff]
        %v1193 = vpack.c.bf16 %v1192, %v1191
        %v1194 = vld [vmem:[%s387] sm:$0xf]
        %v1195 = vld [vmem:[%s387 + $0x4] sm:$0xf]
        %1197 = vset.pattern.permute.xlu0 0
        %1198 = vperm.xlu0 %1197, %v1194
        %v1199 = vpop.permute.xlu0 %1198
        %v1202 = vunpack.c.l.s4 839922192
        %v1203 = vunpack.c.0.s8 %v1202
        %v1204 = vlaneseq
        %v1205 = vshrl.u32 %v1204, 7
        %v1206 = vsub.s32 %v1203, %v1205
        %v1207 = vrot.slane %v1199, %v1206
        %1209 = vset.pattern.permute.xlu0 0
        %1210 = vperm.xlu0 %1209, %v1195
        %v1211 = vpop.permute.xlu0 %1210
        %v1214 = vunpack.c.l.s4 839922192
        %v1215 = vunpack.c.0.s8 %v1214
        %v1216 = vlaneseq
        %v1217 = vshrl.u32 %v1216, 7
        %v1218 = vsub.s32 %v1215, %v1217
        %v1219 = vrot.slane %v1211, %v1218
        %v1222 = vunpack.c.l.b16 %v1207
        %v1223 = vunpack.c.l.b16 %v1219
        %v1224 = vpack.c.b16 %v1223, %v1222
        %v1226 = vmul.bf16 %v1193, %v1224
        %1227 = vst.msk [vmem:[#allocation5 + $0x10] sm:$0xff] %vm962, %v1226
        %v1228 = vld [vmem:[#allocation5] sm:$0xff]
        %v1229 = vld [vmem:[#allocation5 + $0x8] sm:$0xff]
        %v1230 = vld [vmem:[#allocation5 + $0x10] sm:$0xff]
        %v1231 = vld [vmem:[%s4] sm:$0xf]
        %v1232 = vld [vmem:[%s4 + $0x4] sm:$0xf]
        %v1233 = vld [vmem:[%s4 + $0x8] sm:$0xf]
        %v1234 = vld [vmem:[%s4 + $0xc] sm:$0xf]
        %v1235 = vld [vmem:[%s4 + $0x10] sm:$0xf]
        %v1236 = vld [vmem:[%s4 + $0x14] sm:$0xf]
        %v1237 = vld [vmem:[%s4 + $0x18] sm:$0xf]
        %v1238 = vld [vmem:[%s4 + $0x1c] sm:$0xf]
        %v1239 = vld [vmem:[%s4 + $0x20] sm:$0xf]
        %v1240 = vld [vmem:[%s4 + $0x24] sm:$0xf]
        %v1241 = vld [vmem:[%s4 + $0x28] sm:$0xf]
        %v1242 = vld [vmem:[%s4 + $0x2c] sm:$0xf]
        %v1243 = vld [vmem:[%s4 + $0x30] sm:$0xf]
        %v1244 = vld [vmem:[%s4 + $0x34] sm:$0xf]
        %v1245 = vld [vmem:[%s4 + $0x38] sm:$0xf]
        %v1246 = vld [vmem:[%s4 + $0x3c] sm:$0xf]
        %v1247 = vld [vmem:[%s4 + $0x40] sm:$0xf]
        %v1248 = vld [vmem:[%s4 + $0x44] sm:$0xf]
        %v1249 = vld [vmem:[%s4 + $0x48] sm:$0xf]
        %v1250 = vld [vmem:[%s4 + $0x4c] sm:$0xf]
        %v1251 = vld [vmem:[%s4 + $0x50] sm:$0xf]
        %v1252 = vld [vmem:[%s4 + $0x54] sm:$0xf]
        %v1253 = vld [vmem:[%s4 + $0x58] sm:$0xf]
        %v1254 = vld [vmem:[%s4 + $0x5c] sm:$0xf]
        %v1255 = vld [vmem:[%s4 + $0x60] sm:$0xf]
        %v1256 = vld [vmem:[%s4 + $0x64] sm:$0xf]
        %v1257 = vld [vmem:[%s4 + $0x68] sm:$0xf]
        %v1258 = vld [vmem:[%s4 + $0x6c] sm:$0xf]
        %v1259 = vld [vmem:[%s4 + $0x70] sm:$0xf]
        %v1260 = vld [vmem:[%s4 + $0x74] sm:$0xf]
        %v1261 = vld [vmem:[%s4 + $0x78] sm:$0xf]
        %v1262 = vld [vmem:[%s4 + $0x7c] sm:$0xf]
        %v1263 = vld [vmem:[%s4 + $0x80] sm:$0xf]
        %v1264 = vld [vmem:[%s4 + $0x84] sm:$0xf]
        %v1265 = vld [vmem:[%s4 + $0x88] sm:$0xf]
        %v1266 = vld [vmem:[%s4 + $0x8c] sm:$0xf]
        %v1267 = vld [vmem:[%s5] sm:$0x1]
        %v1269 = vlaneseq
        %v1270 = vshrl.u32 %v1269, 7
        %v1271 = vsub.s32 0, %v1270
        %v1272 = vrot.slane %v1267, %v1271
        %v1310 = vunpack.c.l.b16 %v1231
        %v1311 = vunpack.c.l.b16 %v1232
        %v1312 = vunpack.c.l.b16 %v1233
        %v1313 = vunpack.c.l.b16 %v1234
        %v1314 = vunpack.c.l.b16 %v1235
        %v1315 = vunpack.c.l.b16 %v1236
        %v1316 = vunpack.c.l.b16 %v1237
        %v1317 = vunpack.c.l.b16 %v1238
        %v1318 = vunpack.c.l.b16 %v1239
        %v1319 = vunpack.c.l.b16 %v1240
        %v1320 = vunpack.c.l.b16 %v1241
        %v1321 = vunpack.c.l.b16 %v1242
        %v1322 = vunpack.c.l.b16 %v1243
        %v1323 = vunpack.c.l.b16 %v1244
        %v1324 = vunpack.c.l.b16 %v1245
        %v1325 = vunpack.c.l.b16 %v1246
        %v1326 = vunpack.c.l.b16 %v1247
        %v1327 = vunpack.c.l.b16 %v1248
        %v1328 = vunpack.c.l.b16 %v1249
        %v1329 = vunpack.c.l.b16 %v1250
        %v1330 = vunpack.c.l.b16 %v1251
        %v1331 = vunpack.c.l.b16 %v1252
        %v1332 = vunpack.c.l.b16 %v1253
        %v1333 = vunpack.c.l.b16 %v1254
        %v1334 = vunpack.c.l.b16 %v1255
        %v1335 = vunpack.c.l.b16 %v1256
        %v1336 = vunpack.c.l.b16 %v1257
        %v1337 = vunpack.c.l.b16 %v1258
        %v1338 = vunpack.c.l.b16 %v1259
        %v1339 = vunpack.c.l.b16 %v1260
        %v1340 = vunpack.c.l.b16 %v1261
        %v1341 = vunpack.c.l.b16 %v1262
        %v1342 = vunpack.c.l.b16 %v1263
        %v1343 = vunpack.c.l.b16 %v1264
        %v1344 = vunpack.c.l.b16 %v1265
        %v1345 = vunpack.c.l.b16 %v1266
        %v1346 = vpack.c.b16 %v1311, %v1310
        %v1347 = vpack.c.b16 %v1313, %v1312
        %v1348 = vpack.c.b16 %v1315, %v1314
        %v1349 = vpack.c.b16 %v1317, %v1316
        %v1350 = vpack.c.b16 %v1319, %v1318
        %v1351 = vpack.c.b16 %v1321, %v1320
        %v1352 = vpack.c.b16 %v1323, %v1322
        %v1353 = vpack.c.b16 %v1325, %v1324
        %v1354 = vpack.c.b16 %v1327, %v1326
        %v1355 = vpack.c.b16 %v1329, %v1328
        %v1356 = vpack.c.b16 %v1331, %v1330
        %v1357 = vpack.c.b16 %v1333, %v1332
        %v1358 = vpack.c.b16 %v1335, %v1334
        %v1359 = vpack.c.b16 %v1337, %v1336
        %v1360 = vpack.c.b16 %v1339, %v1338
        %v1361 = vpack.c.b16 %v1341, %v1340
        %v1362 = vpack.c.b16 %v1343, %v1342
        %v1363 = vpack.c.b16 %v1345, %v1344
        %v1383 = vsel %vm962, %v1230, 0
        %1385 = vmatprep.subr.bf16.mxu0 0
        %1386 = vmatpush1.bf16.msra.mxu0 %v1346
        %1387 = vmatprep.subr.bf16.mxu0 0
        %1388 = vmatpush1.bf16.msra.mxu0 %v1347
        %1389 = vmatprep.subr.bf16.mxu0 0
        %1390 = vmatpush1.bf16.msra.mxu0 %v1348
        %1391 = vmatprep.subr.bf16.mxu0 0
        %1392 = vmatpush1.bf16.msra.mxu0 %v1349
        %1393 = vmatprep.subr.bf16.mxu0 0
        %1394 = vmatpush1.bf16.msra.mxu0 %v1350
        %1395 = vmatprep.subr.bf16.mxu0 0
        %1396 = vmatpush1.bf16.msra.mxu0 %v1351
        %1397 = vmatprep.subr.bf16.mxu0 0
        %1398 = vmatpush1.bf16.msra.mxu0 %v1352
        %1399 = vmatprep.subr.bf16.mxu0 0
        %1400 = vmatpush1.bf16.msra.mxu0 %v1353
        %1401 = vmatprep.subr.bf16.mxu0 0
        %1402 = vmatpush1.bf16.msra.mxu0 %v1354
        %1403 = vmatprep.subr.bf16.mxu0 0
        %1404 = vmatpush1.bf16.msra.mxu0 %v1355
        %1405 = vmatprep.subr.bf16.mxu0 0
        %1406 = vmatpush1.bf16.msra.mxu0 %v1356
        %1407 = vmatprep.subr.bf16.mxu0 0
        %1408 = vmatpush1.bf16.msra.mxu0 %v1357
        %1409 = vmatprep.subr.bf16.mxu0 0
        %1410 = vmatpush1.bf16.msra.mxu0 %v1358
        %1411 = vmatprep.subr.bf16.mxu0 0
        %1412 = vmatpush1.bf16.msra.mxu0 %v1359
        %1413 = vmatprep.subr.bf16.mxu0 0
        %1414 = vmatpush1.bf16.msra.mxu0 %v1360
        %1415 = vmatprep.subr.bf16.mxu0 0
        %1416 = vmatpush1.bf16.msra.mxu0 %v1361
        %1417 = vmatprep.mubr.bf16.mxu0 %v1229
        %1418 = vmatmul.mubr.bf16.gmra.mrb[0].mxu0 %v1228
        %v1419 = vpop.f32.mrb[0].mxu0
        %v1420 = vadd.f32 %v1272, %v1419
        %v1421 = vpop.f32.mrb[0].mxu0
        %v1422 = vpop.f32.mrb[0].mxu0
        %v1423 = vadd.f32 %v1272, %v1422
        %v1424 = vpop.f32.mrb[0].mxu0
        %1425 = vdwg.mxu0
        %1426 = vmatprep.subr.bf16.mxu0 0
        %1427 = vmatpush1.bf16.msra.mxu0 %v1362
        %1428 = vmatprep.subr.bf16.mxu0 0
        %1429 = vmatpush1.bf16.msra.mxu0 %v1363
        %1430 = vmatprep.subr.bf16.mxu0 0
        %1431 = vmatpush1.bf16.msra.mxu0 0
        %1432 = vmatprep.subr.bf16.mxu0 0
        %1433 = vmatpush1.bf16.msra.mxu0 0
        %1434 = vmatprep.subr.bf16.mxu0 0
        %1435 = vmatpush1.bf16.msra.mxu0 0
        %1436 = vmatprep.subr.bf16.mxu0 0
        %1437 = vmatpush1.bf16.msra.mxu0 0
        %1438 = vmatprep.subr.bf16.mxu0 0
        %1439 = vmatpush1.bf16.msra.mxu0 0
        %1440 = vmatprep.subr.bf16.mxu0 0
        %1441 = vmatpush1.bf16.msra.mxu0 0
        %1442 = vmatprep.subr.bf16.mxu0 0
        %1443 = vmatpush1.bf16.msra.mxu0 0
        %1444 = vmatprep.subr.bf16.mxu0 0
        %1445 = vmatpush1.bf16.msra.mxu0 0
        %1446 = vmatprep.subr.bf16.mxu0 0
        %1447 = vmatpush1.bf16.msra.mxu0 0
        %1448 = vmatprep.subr.bf16.mxu0 0
        %1449 = vmatpush1.bf16.msra.mxu0 0
        %1450 = vmatprep.subr.bf16.mxu0 0
        %1451 = vmatpush1.bf16.msra.mxu0 0
        %1452 = vmatprep.subr.bf16.mxu0 0
        %1453 = vmatpush1.bf16.msra.mxu0 0
        %1454 = vmatprep.subr.bf16.mxu0 0
        %1455 = vmatpush1.bf16.msra.mxu0 0
        %1456 = vmatprep.subr.bf16.mxu0 0
        %1457 = vmatpush1.bf16.msra.mxu0 0
        %1458 = vmatprep.mubr.bf16.mxu0 0
        %1459 = vmatmul.mubr.bf16.gmra.mrb[0].mxu0 %v1383
        %v1460 = vpop.f32.mrb[0].mxu0
        %v1461 = vadd.f32 %v1420, %v1460
        %v1462 = vpop.f32.mrb[0].mxu0
        %v1463 = vpop.f32.mrb[0].mxu0
        %v1464 = vadd.f32 %v1423, %v1463
        %v1465 = vpop.f32.mrb[0].mxu0
        %1466 = vdwg.mxu0
        %s1467 = smul.u32 %s22, 2
        %s1468 = sld [smem:[#allocation6 + %s1467]]
        %v1469 = vstv %s1468
        %v1470 = vmul.f32 %v1469, %v1461
        %v1471 = vmul.f32 %v1469, %v1464
        %v1472 = vadd.f32 %v292, %v1470
        %v1473 = vadd.f32 %v293, %v1471
        %vm1474 = vcmask 128000
        %1475 = vst.msk [vmem:[#allocation2] sm:$0x3f] %vm1474, 0.0
        %1476 = vst.msk [vmem:[#allocation2 + $0x16] sm:$0xff] %vm300, 0.0
        %vm1477 = vcmask 123904
        %1478 = vst.msk [vmem:[#allocation2 + $0x1e] sm:$0x3] %vm1477, 0.0
        %v1479 = vld [vmem:[%s290] sm:$0xff]
        %v1480 = vld [vmem:[%s290 + $0x8] sm:$0xff]
        %1481 = vst.msk [vmem:[#allocation2 + $0x6] sm:$0xff] %vm300, %v1479
        %1482 = vst.msk [vmem:[#allocation2 + $0xe] sm:$0xff] %vm300, %v1480
        %vm1483 = vcmask 259072
        %1484 = vst.msk [vmem:[#allocation3] sm:$0x3f] %vm1483, 0.0
        %1485 = vst.msk [vmem:[#allocation3 + $0x1a] sm:$0x3f] %vm1483, 0.0
        %v1486 = vld [vmem:[#allocation2] sm:$0xff]
        %v1487 = vld [vmem:[#allocation2 + $0x8] sm:$0xff]
        %v1488 = vld [vmem:[#allocation2 + $0x10] sm:$0xf]
        %v1489 = vpack.c.bf16 %v1487, %v1486
        %v1490 = vpack.c.bf16 %v1488, %v1488
        %s1491 = scalar_lea.vmem %s6, 36
        %v1492 = vld [vmem:[%s1491] sm:$0xf]
        %v1493 = vld [vmem:[%s1491 + $0x4] sm:$0xf]
        %v1494 = vld [vmem:[%s1491 + $0x8] sm:$0x3]
        %1496 = vset.pattern.permute.xlu0 0
        %1497 = vperm.xlu0 %1496, %v1492
        %v1498 = vpop.permute.xlu0 %1497
        %v1501 = vunpack.c.l.s4 839922192
        %v1502 = vunpack.c.0.s8 %v1501
        %v1503 = vlaneseq
        %v1504 = vshrl.u32 %v1503, 7
        %v1505 = vsub.s32 %v1502, %v1504
        %v1506 = vrot.slane %v1498, %v1505
        %1508 = vset.pattern.permute.xlu0 0
        %1509 = vperm.xlu0 %1508, %v1493
        %v1510 = vpop.permute.xlu0 %1509
        %v1513 = vunpack.c.l.s4 839922192
        %v1514 = vunpack.c.0.s8 %v1513
        %v1515 = vlaneseq
        %v1516 = vshrl.u32 %v1515, 7
        %v1517 = vsub.s32 %v1514, %v1516
        %v1518 = vrot.slane %v1510, %v1517
        %1520 = vset.pattern.permute.xlu0 0
        %1521 = vperm.xlu0 %1520, %v1494
        %v1522 = vpop.permute.xlu0 %1521
        %v1525 = vunpack.c.l.s4 839922192
        %v1526 = vunpack.c.0.s8 %v1525
        %v1527 = vlaneseq
        %v1528 = vshrl.u32 %v1527, 7
        %v1529 = vsub.s32 %v1526, %v1528
        %v1530 = vrot.slane %v1522, %v1529
        %v1534 = vunpack.c.l.b16 %v1506
        %v1535 = vunpack.c.l.b16 %v1518
        %v1536 = vunpack.c.l.b16 %v1530
        %v1537 = vpack.c.b16 %v1535, %v1534
        %v1538 = vpack.c.b16 %v1536, %v1536
        %v1541 = vmul.bf16 %v1489, %v1537
        %v1542 = vmul.bf16 %v1490, %v1538
        %1543 = vst.msk [vmem:[#allocation4] sm:$0xff] %vm300, %v1541
        %1544 = vst.msk [vmem:[#allocation4 + $0x10] sm:$0x3] %vm1477, %v1542
        %v1545 = vld [vmem:[#allocation2 + $0x1] sm:$0xff]
        %v1546 = vld [vmem:[#allocation2 + $0x9] sm:$0xff]
        %v1547 = vld [vmem:[#allocation2 + $0x11] sm:$0xf]
        %v1548 = vpack.c.bf16 %v1546, %v1545
        %v1549 = vpack.c.bf16 %v1547, %v1547
        %1552 = vrot.lane.b32.xlu0 %v1548, 16
        %v1553 = vpop.permute.xlu0 %1552
        %1554 = vrot.lane.b32.xlu0 %v1549, 16
        %v1555 = vpop.permute.xlu0 %1554
        %1558 = vst.msk [vmem:[#allocation4] sm:$0xff] %vm378, %v1553
        %vm1559 = vcmask 255104
        %1560 = vst.msk [vmem:[#allocation4 + $0x10] sm:$0x3] %vm1559, %v1555
        %v1561 = vld [vmem:[#allocation2 + $0x2] sm:$0xff]
        %v1562 = vld [vmem:[#allocation2 + $0xa] sm:$0xff]
        %v1563 = vld [vmem:[#allocation2 + $0x12] sm:$0xf]
        %v1564 = vpack.c.bf16 %v1562, %v1561
        %v1565 = vpack.c.bf16 %v1563, %v1563
        %s1566 = scalar_lea.vmem %s6, 60
        %v1567 = vld [vmem:[%s1566] sm:$0xf]
        %v1568 = vld [vmem:[%s1566 + $0x4] sm:$0xf]
        %v1569 = vld [vmem:[%s1566 + $0x8] sm:$0x3]
        %1571 = vset.pattern.permute.xlu0 0
        %1572 = vperm.xlu0 %1571, %v1567
        %v1573 = vpop.permute.xlu0 %1572
        %v1576 = vunpack.c.l.s4 839922192
        %v1577 = vunpack.c.0.s8 %v1576
        %v1578 = vlaneseq
        %v1579 = vshrl.u32 %v1578, 7
        %v1580 = vsub.s32 %v1577, %v1579
        %v1581 = vrot.slane %v1573, %v1580
        %1583 = vset.pattern.permute.xlu0 0
        %1584 = vperm.xlu0 %1583, %v1568
        %v1585 = vpop.permute.xlu0 %1584
        %v1588 = vunpack.c.l.s4 839922192
        %v1589 = vunpack.c.0.s8 %v1588
        %v1590 = vlaneseq
        %v1591 = vshrl.u32 %v1590, 7
        %v1592 = vsub.s32 %v1589, %v1591
        %v1593 = vrot.slane %v1585, %v1592
        %1595 = vset.pattern.permute.xlu0 0
        %1596 = vperm.xlu0 %1595, %v1569
        %v1597 = vpop.permute.xlu0 %1596
        %v1600 = vunpack.c.l.s4 839922192
        %v1601 = vunpack.c.0.s8 %v1600
        %v1602 = vlaneseq
        %v1603 = vshrl.u32 %v1602, 7
        %v1604 = vsub.s32 %v1601, %v1603
        %v1605 = vrot.slane %v1597, %v1604
        %v1609 = vunpack.c.l.b16 %v1581
        %v1610 = vunpack.c.l.b16 %v1593
        %v1611 = vunpack.c.l.b16 %v1605
        %v1612 = vpack.c.b16 %v1610, %v1609
        %v1613 = vpack.c.b16 %v1611, %v1611
        %v1616 = vmul.bf16 %v1564, %v1612
        %v1617 = vmul.bf16 %v1565, %v1613
        %1620 = vrot.lane.b32.xlu0 %v1616, 32
        %v1621 = vpop.permute.xlu0 %1620
        %1622 = vrot.lane.b32.xlu0 %v1617, 32
        %v1623 = vpop.permute.xlu0 %1622
        %1626 = vst.msk [vmem:[#allocation4] sm:$0xff] %vm447, %v1621
        %vm1627 = vcmask 386304
        %1628 = vst.msk [vmem:[#allocation4 + $0x10] sm:$0x3] %vm1627, %v1623
        %v1629 = vld [vmem:[#allocation2 + $0x5] sm:$0xff]
        %v1630 = vld [vmem:[#allocation2 + $0xd] sm:$0xff]
        %v1631 = vld [vmem:[#allocation2 + $0x15] sm:$0xf]
        %v1632 = vpack.c.bf16 %v1630, %v1629
        %v1633 = vpack.c.bf16 %v1631, %v1631
        %v1634 = vld [vmem:[%s1491] sm:$0xf]
        %v1635 = vld [vmem:[%s1491 + $0x4] sm:$0xf]
        %v1636 = vld [vmem:[%s1491 + $0x8] sm:$0x3]
        %1638 = vset.pattern.permute.xlu0 0
        %1639 = vperm.xlu0 %1638, %v1634
        %v1640 = vpop.permute.xlu0 %1639
        %v1643 = vunpack.c.l.s4 839922192
        %v1644 = vunpack.c.0.s8 %v1643
        %v1645 = vlaneseq
        %v1646 = vshrl.u32 %v1645, 7
        %v1647 = vsub.s32 %v1644, %v1646
        %v1648 = vrot.slane %v1640, %v1647
        %1650 = vset.pattern.permute.xlu0 0
        %1651 = vperm.xlu0 %1650, %v1635
        %v1652 = vpop.permute.xlu0 %1651
        %v1655 = vunpack.c.l.s4 839922192
        %v1656 = vunpack.c.0.s8 %v1655
        %v1657 = vlaneseq
        %v1658 = vshrl.u32 %v1657, 7
        %v1659 = vsub.s32 %v1656, %v1658
        %v1660 = vrot.slane %v1652, %v1659
        %1662 = vset.pattern.permute.xlu0 0
        %1663 = vperm.xlu0 %1662, %v1636
        %v1664 = vpop.permute.xlu0 %1663
        %v1667 = vunpack.c.l.s4 839922192
        %v1668 = vunpack.c.0.s8 %v1667
        %v1669 = vlaneseq
        %v1670 = vshrl.u32 %v1669, 7
        %v1671 = vsub.s32 %v1668, %v1670
        %v1672 = vrot.slane %v1664, %v1671
        %v1676 = vunpack.c.l.b16 %v1648
        %v1677 = vunpack.c.l.b16 %v1660
        %v1678 = vunpack.c.l.b16 %v1672
        %v1679 = vpack.c.b16 %v1677, %v1676
        %v1680 = vpack.c.b16 %v1678, %v1678
        %v1683 = vmul.bf16 %v1632, %v1679
        %v1684 = vmul.bf16 %v1633, %v1680
        %1687 = vrot.lane.b32.xlu0 %v1683, 48
        %v1688 = vpop.permute.xlu0 %1687
        %1689 = vrot.lane.b32.xlu0 %v1684, 48
        %v1690 = vpop.permute.xlu0 %1689
        %1693 = vst.msk [vmem:[#allocation4] sm:$0xff] %vm515, %v1688
        %vm1694 = vcmask 517504
        %1695 = vst.msk [vmem:[#allocation4 + $0x10] sm:$0x3] %vm1694, %v1690
        %v1696 = vld [vmem:[#allocation2 + $0x6] sm:$0xff]
        %v1697 = vld [vmem:[#allocation2 + $0xe] sm:$0xff]
        %v1698 = vld [vmem:[#allocation2 + $0x16] sm:$0xf]
        %v1699 = vpack.c.bf16 %v1697, %v1696
        %v1700 = vpack.c.bf16 %v1698, %v1698
        %1703 = vrot.lane.b32.xlu0 %v1699, 64
        %v1704 = vpop.permute.xlu0 %1703
        %1705 = vrot.lane.b32.xlu0 %v1700, 64
        %v1706 = vpop.permute.xlu0 %1705
        %1709 = vst.msk [vmem:[#allocation4] sm:$0xff] %vm532, %v1704
        %vm1710 = vcmask 648704
        %1711 = vst.msk [vmem:[#allocation4 + $0x10] sm:$0x3] %vm1710, %v1706
        %v1712 = vld [vmem:[#allocation2 + $0x7] sm:$0xff]
        %v1713 = vld [vmem:[#allocation2 + $0xf] sm:$0xff]
        %v1714 = vld [vmem:[#allocation2 + $0x17] sm:$0xf]
        %v1715 = vpack.c.bf16 %v1713, %v1712
        %v1716 = vpack.c.bf16 %v1714, %v1714
        %v1717 = vld [vmem:[%s1566] sm:$0xf]
        %v1718 = vld [vmem:[%s1566 + $0x4] sm:$0xf]
        %v1719 = vld [vmem:[%s1566 + $0x8] sm:$0x3]
        %1721 = vset.pattern.permute.xlu0 0
        %1722 = vperm.xlu0 %1721, %v1717
        %v1723 = vpop.permute.xlu0 %1722
        %v1726 = vunpack.c.l.s4 839922192
        %v1727 = vunpack.c.0.s8 %v1726
        %v1728 = vlaneseq
        %v1729 = vshrl.u32 %v1728, 7
        %v1730 = vsub.s32 %v1727, %v1729
        %v1731 = vrot.slane %v1723, %v1730
        %1733 = vset.pattern.permute.xlu0 0
        %1734 = vperm.xlu0 %1733, %v1718
        %v1735 = vpop.permute.xlu0 %1734
        %v1738 = vunpack.c.l.s4 839922192
        %v1739 = vunpack.c.0.s8 %v1738
        %v1740 = vlaneseq
        %v1741 = vshrl.u32 %v1740, 7
        %v1742 = vsub.s32 %v1739, %v1741
        %v1743 = vrot.slane %v1735, %v1742
        %1745 = vset.pattern.permute.xlu0 0
        %1746 = vperm.xlu0 %1745, %v1719
        %v1747 = vpop.permute.xlu0 %1746
        %v1750 = vunpack.c.l.s4 839922192
        %v1751 = vunpack.c.0.s8 %v1750
        %v1752 = vlaneseq
        %v1753 = vshrl.u32 %v1752, 7
        %v1754 = vsub.s32 %v1751, %v1753
        %v1755 = vrot.slane %v1747, %v1754
        %v1759 = vunpack.c.l.b16 %v1731
        %v1760 = vunpack.c.l.b16 %v1743
        %v1761 = vunpack.c.l.b16 %v1755
        %v1762 = vpack.c.b16 %v1760, %v1759
        %v1763 = vpack.c.b16 %v1761, %v1761
        %v1766 = vmul.bf16 %v1715, %v1762
        %v1767 = vmul.bf16 %v1716, %v1763
        %1770 = vrot.lane.b32.xlu0 %v1766, 80
        %v1771 = vpop.permute.xlu0 %1770
        %1772 = vrot.lane.b32.xlu0 %v1767, 80
        %v1773 = vpop.permute.xlu0 %1772
        %1776 = vst.msk [vmem:[#allocation4] sm:$0xff] %vm600, %v1771
        %vm1777 = vcmask 779904
        %1778 = vst.msk [vmem:[#allocation4 + $0x10] sm:$0x3] %vm1777, %v1773
        %v1779 = vld [vmem:[#allocation2 + $0xa] sm:$0xff]
        %v1780 = vld [vmem:[#allocation2 + $0x12] sm:$0xff]
        %v1781 = vld [vmem:[#allocation2 + $0x1a] sm:$0xf]
        %v1782 = vpack.c.bf16 %v1780, %v1779
        %v1783 = vpack.c.bf16 %v1781, %v1781
        %v1784 = vld [vmem:[%s1491] sm:$0xf]
        %v1785 = vld [vmem:[%s1491 + $0x4] sm:$0xf]
        %v1786 = vld [vmem:[%s1491 + $0x8] sm:$0x3]
        %1788 = vset.pattern.permute.xlu0 0
        %1789 = vperm.xlu0 %1788, %v1784
        %v1790 = vpop.permute.xlu0 %1789
        %v1793 = vunpack.c.l.s4 839922192
        %v1794 = vunpack.c.0.s8 %v1793
        %v1795 = vlaneseq
        %v1796 = vshrl.u32 %v1795, 7
        %v1797 = vsub.s32 %v1794, %v1796
        %v1798 = vrot.slane %v1790, %v1797
        %1800 = vset.pattern.permute.xlu0 0
        %1801 = vperm.xlu0 %1800, %v1785
        %v1802 = vpop.permute.xlu0 %1801
        %v1805 = vunpack.c.l.s4 839922192
        %v1806 = vunpack.c.0.s8 %v1805
        %v1807 = vlaneseq
        %v1808 = vshrl.u32 %v1807, 7
        %v1809 = vsub.s32 %v1806, %v1808
        %v1810 = vrot.slane %v1802, %v1809
        %1812 = vset.pattern.permute.xlu0 0
        %1813 = vperm.xlu0 %1812, %v1786
        %v1814 = vpop.permute.xlu0 %1813
        %v1817 = vunpack.c.l.s4 839922192
        %v1818 = vunpack.c.0.s8 %v1817
        %v1819 = vlaneseq
        %v1820 = vshrl.u32 %v1819, 7
        %v1821 = vsub.s32 %v1818, %v1820
        %v1822 = vrot.slane %v1814, %v1821
        %v1826 = vunpack.c.l.b16 %v1798
        %v1827 = vunpack.c.l.b16 %v1810
        %v1828 = vunpack.c.l.b16 %v1822
        %v1829 = vpack.c.b16 %v1827, %v1826
        %v1830 = vpack.c.b16 %v1828, %v1828
        %v1833 = vmul.bf16 %v1782, %v1829
        %v1834 = vmul.bf16 %v1783, %v1830
        %1837 = vrot.lane.b32.xlu0 %v1833, 96
        %v1838 = vpop.permute.xlu0 %1837
        %1839 = vrot.lane.b32.xlu0 %v1834, 96
        %v1840 = vpop.permute.xlu0 %1839
        %1843 = vst.msk [vmem:[#allocation4] sm:$0xff] %vm668, %v1838
        %vm1844 = vcmask 911104
        %1845 = vst.msk [vmem:[#allocation4 + $0x10] sm:$0x3] %vm1844, %v1840
        %v1846 = vld [vmem:[#allocation2 + $0xb] sm:$0xff]
        %v1847 = vld [vmem:[#allocation2 + $0x13] sm:$0xff]
        %v1848 = vld [vmem:[#allocation2 + $0x1b] sm:$0xf]
        %v1849 = vpack.c.bf16 %v1847, %v1846
        %v1850 = vpack.c.bf16 %v1848, %v1848
        %1853 = vrot.lane.b32.xlu0 %v1849, 112
        %v1854 = vpop.permute.xlu0 %1853
        %1855 = vrot.lane.b32.xlu0 %v1850, 112
        %v1856 = vpop.permute.xlu0 %1855
        %1859 = vst.msk [vmem:[#allocation4] sm:$0xff] %vm685, %v1854
        %vm1860 = vcmask 1042304
        %1861 = vst.msk [vmem:[#allocation4 + $0x10] sm:$0x3] %vm1860, %v1856
        %v1862 = vld [vmem:[#allocation2 + $0xc] sm:$0xff]
        %v1863 = vld [vmem:[#allocation2 + $0x14] sm:$0xff]
        %v1864 = vld [vmem:[#allocation2 + $0x1c] sm:$0xf]
        %v1865 = vpack.c.bf16 %v1863, %v1862
        %v1866 = vpack.c.bf16 %v1864, %v1864
        %v1867 = vld [vmem:[%s1566] sm:$0xf]
        %v1868 = vld [vmem:[%s1566 + $0x4] sm:$0xf]
        %v1869 = vld [vmem:[%s1566 + $0x8] sm:$0x3]
        %1871 = vset.pattern.permute.xlu0 0
        %1872 = vperm.xlu0 %1871, %v1867
        %v1873 = vpop.permute.xlu0 %1872
        %v1876 = vunpack.c.l.s4 839922192
        %v1877 = vunpack.c.0.s8 %v1876
        %v1878 = vlaneseq
        %v1879 = vshrl.u32 %v1878, 7
        %v1880 = vsub.s32 %v1877, %v1879
        %v1881 = vrot.slane %v1873, %v1880
        %1883 = vset.pattern.permute.xlu0 0
        %1884 = vperm.xlu0 %1883, %v1868
        %v1885 = vpop.permute.xlu0 %1884
        %v1888 = vunpack.c.l.s4 839922192
        %v1889 = vunpack.c.0.s8 %v1888
        %v1890 = vlaneseq
        %v1891 = vshrl.u32 %v1890, 7
        %v1892 = vsub.s32 %v1889, %v1891
        %v1893 = vrot.slane %v1885, %v1892
        %1895 = vset.pattern.permute.xlu0 0
        %1896 = vperm.xlu0 %1895, %v1869
        %v1897 = vpop.permute.xlu0 %1896
        %v1900 = vunpack.c.l.s4 839922192
        %v1901 = vunpack.c.0.s8 %v1900
        %v1902 = vlaneseq
        %v1903 = vshrl.u32 %v1902, 7
        %v1904 = vsub.s32 %v1901, %v1903
        %v1905 = vrot.slane %v1897, %v1904
        %v1909 = vunpack.c.l.b16 %v1881
        %v1910 = vunpack.c.l.b16 %v1893
        %v1911 = vunpack.c.l.b16 %v1905
        %v1912 = vpack.c.b16 %v1910, %v1909
        %v1913 = vpack.c.b16 %v1911, %v1911
        %v1916 = vmul.bf16 %v1865, %v1912
        %v1917 = vmul.bf16 %v1866, %v1913
        %1918 = vst.msk [vmem:[#allocation4 + $0x8] sm:$0xff] %vm300, %v1916
        %1919 = vst.msk [vmem:[#allocation4 + $0x18] sm:$0x3] %vm1477, %v1917
        %v1920 = vld [vmem:[#allocation4] sm:$0xff]
        %v1921 = vld [vmem:[#allocation4 + $0x8] sm:$0xff]
        %v1922 = vld [vmem:[#allocation4 + $0x10] sm:$0x3]
        %v1923 = vld [vmem:[#allocation4 + $0x18] sm:$0x3]
        %v1924 = vld [vmem:[%s2] sm:$0xf]
        %v1925 = vld [vmem:[%s2 + $0x4] sm:$0xf]
        %v1926 = vld [vmem:[%s2 + $0x8] sm:$0xf]
        %v1927 = vld [vmem:[%s2 + $0xc] sm:$0xf]
        %v1928 = vld [vmem:[%s2 + $0x10] sm:$0xf]
        %v1929 = vld [vmem:[%s2 + $0x14] sm:$0xf]
        %v1930 = vld [vmem:[%s2 + $0x18] sm:$0xf]
        %v1931 = vld [vmem:[%s2 + $0x1c] sm:$0xf]
        %v1932 = vld [vmem:[%s2 + $0x20] sm:$0xf]
        %v1933 = vld [vmem:[%s2 + $0x24] sm:$0xf]
        %v1934 = vld [vmem:[%s2 + $0x28] sm:$0xf]
        %v1935 = vld [vmem:[%s2 + $0x2c] sm:$0xf]
        %v1936 = vld [vmem:[%s2 + $0x30] sm:$0xf]
        %v1937 = vld [vmem:[%s2 + $0x34] sm:$0xf]
        %v1938 = vld [vmem:[%s2 + $0x38] sm:$0xf]
        %v1939 = vld [vmem:[%s2 + $0x3c] sm:$0xf]
        %v1940 = vld [vmem:[%s2 + $0x40] sm:$0xf]
        %v1941 = vld [vmem:[%s2 + $0x44] sm:$0xf]
        %v1942 = vld [vmem:[%s3] sm:$0x1]
        %v1944 = vlaneseq
        %v1945 = vshrl.u32 %v1944, 7
        %v1946 = vsub.s32 0, %v1945
        %v1947 = vrot.slane %v1942, %v1946
        %v1967 = vunpack.c.l.b16 %v1924
        %v1968 = vunpack.c.l.b16 %v1925
        %v1969 = vunpack.c.l.b16 %v1926
        %v1970 = vunpack.c.l.b16 %v1927
        %v1971 = vunpack.c.l.b16 %v1928
        %v1972 = vunpack.c.l.b16 %v1929
        %v1973 = vunpack.c.l.b16 %v1930
        %v1974 = vunpack.c.l.b16 %v1931
        %v1975 = vunpack.c.l.b16 %v1932
        %v1976 = vunpack.c.l.b16 %v1933
        %v1977 = vunpack.c.l.b16 %v1934
        %v1978 = vunpack.c.l.b16 %v1935
        %v1979 = vunpack.c.l.b16 %v1936
        %v1980 = vunpack.c.l.b16 %v1937
        %v1981 = vunpack.c.l.b16 %v1938
        %v1982 = vunpack.c.l.b16 %v1939
        %v1983 = vunpack.c.l.b16 %v1940
        %v1984 = vunpack.c.l.b16 %v1941
        %v1985 = vpack.c.b16 %v1968, %v1967
        %v1986 = vpack.c.b16 %v1970, %v1969
        %v1987 = vpack.c.b16 %v1972, %v1971
        %v1988 = vpack.c.b16 %v1974, %v1973
        %v1989 = vpack.c.b16 %v1976, %v1975
        %v1990 = vpack.c.b16 %v1978, %v1977
        %v1991 = vpack.c.b16 %v1980, %v1979
        %v1992 = vpack.c.b16 %v1982, %v1981
        %v1993 = vpack.c.b16 %v1984, %v1983
        %v2004 = vsel %vm300, %v1921, 0
        %v2007 = vsel %vm300, %v1923, 0
        %2009 = vmatprep.subr.bf16.mxu0 0
        %2010 = vmatpush1.bf16.msra.mxu0 %v1985
        %2011 = vmatprep.subr.bf16.mxu0 0
        %2012 = vmatpush1.bf16.msra.mxu0 %v1986
        %2013 = vmatprep.subr.bf16.mxu0 0
        %2014 = vmatpush1.bf16.msra.mxu0 %v1987
        %2015 = vmatprep.subr.bf16.mxu0 0
        %2016 = vmatpush1.bf16.msra.mxu0 %v1988
        %2017 = vmatprep.subr.bf16.mxu0 0
        %2018 = vmatpush1.bf16.msra.mxu0 %v1989
        %2019 = vmatprep.subr.bf16.mxu0 0
        %2020 = vmatpush1.bf16.msra.mxu0 %v1990
        %2021 = vmatprep.subr.bf16.mxu0 0
        %2022 = vmatpush1.bf16.msra.mxu0 %v1991
        %2023 = vmatprep.subr.bf16.mxu0 0
        %2024 = vmatpush1.bf16.msra.mxu0 %v1992
        %2025 = vmatprep.subr.bf16.mxu0 0
        %2026 = vmatpush1.bf16.msra.mxu0 %v1993
        %2027 = vmatprep.subr.bf16.mxu0 0
        %2028 = vmatpush1.bf16.msra.mxu0 0
        %2029 = vmatprep.subr.bf16.mxu0 0
        %2030 = vmatpush1.bf16.msra.mxu0 0
        %2031 = vmatprep.subr.bf16.mxu0 0
        %2032 = vmatpush1.bf16.msra.mxu0 0
        %2033 = vmatprep.subr.bf16.mxu0 0
        %2034 = vmatpush1.bf16.msra.mxu0 0
        %2035 = vmatprep.subr.bf16.mxu0 0
        %2036 = vmatpush1.bf16.msra.mxu0 0
        %2037 = vmatprep.subr.bf16.mxu0 0
        %2038 = vmatpush1.bf16.msra.mxu0 0
        %2039 = vmatprep.subr.bf16.mxu0 0
        %2040 = vmatpush1.bf16.msra.mxu0 0
        %2041 = vmatprep.mubr.bf16.mxu0 %v2004
        %2042 = vmatmul.mubr.bf16.gmra.mrb[0].mxu0 %v1920
        %v2043 = vpop.f32.mrb[0].mxu0
        %v2044 = vadd.f32 %v1947, %v2043
        %v2045 = vpop.f32.mrb[0].mxu0
        %v2046 = vpop.f32.mrb[0].mxu0
        %v2047 = vadd.f32 %v1947, %v2046
        %v2048 = vpop.f32.mrb[0].mxu0
        %2049 = vmatprep.mubr.bf16.mxu0 %v2007
        %2050 = vmatmul.mubr.bf16.gmra.mrb[0].mxu0 %v1922
        %v2051 = vpop.f32.mrb[0].mxu0
        %v2052 = vadd.f32 %v1947, %v2051
        %v2053 = vpop.f32.mrb[0].mxu0
        %v2054 = vpop.f32.mrb[0].mxu0
        %v2055 = vpop.f32.mrb[0].mxu0
        %2056 = vdwg.mxu0
        %v2057 = vmul.f32 %v2044, 0.5
        %v2058 = vmul.f32 %v2047, 0.5
        %v2059 = vmul.f32 %v2052, 0.5
        %v2060 = vmul.f32 %v2044, 0.70710677
        %v2061 = vmul.f32 %v2047, 0.70710677
        %v2062 = vmul.f32 %v2052, 0.70710677
        %v2063 = vand.u32 2147483647, %v2060
        %v2064 = vand.u32 2147483647, %v2061
        %v2065 = vand.u32 2147483647, %v2062
        %v2066 = vmul.f32 %v2063, 0.3275911
        %v2067 = vmul.f32 %v2064, 0.3275911
        %v2068 = vmul.f32 %v2065, 0.3275911
        %v2069 = vadd.f32 %v2066, 1.0
        %v2070 = vadd.f32 %v2067, 1.0
        %v2071 = vadd.f32 %v2068, 1.0
        %v2072 = vrcp.pop %v2069
        %v2073 = vrcp.pop %v2070
        %v2074 = vrcp.pop %v2071
        %v2075 = vmul.f32 %v2072, 1.0614054
        %v2076 = vmul.f32 %v2073, 1.0614054
        %v2077 = vmul.f32 %v2074, 1.0614054
        %v2078 = vadd.f32 %v2075, -1.4531521
        %v2079 = vadd.f32 %v2076, -1.4531521
        %v2080 = vadd.f32 %v2077, -1.4531521
        %v2081 = vmul.f32 %v2078, %v2072
        %v2082 = vmul.f32 %v2079, %v2073
        %v2083 = vmul.f32 %v2080, %v2074
        %v2084 = vadd.f32 %v2081, 1.4214138
        %v2085 = vadd.f32 %v2082, 1.4214138
        %v2086 = vadd.f32 %v2083, 1.4214138
        %v2087 = vmul.f32 %v2084, %v2072
        %v2088 = vmul.f32 %v2085, %v2073
        %v2089 = vmul.f32 %v2086, %v2074
        %v2090 = vadd.f32 %v2087, -0.28449672
        %v2091 = vadd.f32 %v2088, -0.28449672
        %v2092 = vadd.f32 %v2089, -0.28449672
        %v2093 = vmul.f32 %v2090, %v2072
        %v2094 = vmul.f32 %v2091, %v2073
        %v2095 = vmul.f32 %v2092, %v2074
        %v2096 = vadd.f32 %v2093, 0.2548296
        %v2097 = vadd.f32 %v2094, 0.2548296
        %v2098 = vadd.f32 %v2095, 0.2548296
        %v2099 = vmul.f32 %v2096, %v2072
        %v2100 = vmul.f32 %v2097, %v2073
        %v2101 = vmul.f32 %v2098, %v2074
        %v2102 = vsub.f32 0.0, %v2063
        %v2103 = vsub.f32 0.0, %v2064
        %v2104 = vsub.f32 0.0, %v2065
        %v2105 = vmul.f32 %v2102, %v2063
        %v2106 = vmul.f32 %v2103, %v2064
        %v2107 = vmul.f32 %v2104, %v2065
        %v2108 = vmul.f32 %v2105, 1.442695
        %v2109 = vpow.pop %v2108
        %v2110 = vmul.f32 %v2106, 1.442695
        %v2111 = vpow.pop %v2110
        %v2112 = vmul.f32 %v2107, 1.442695
        %v2113 = vpow.pop %v2112
        %v2114 = vmul.f32 %v2099, %v2109
        %v2115 = vmul.f32 %v2100, %v2111
        %v2116 = vmul.f32 %v2101, %v2113
        %v2117 = vsub.f32 1.0, %v2114
        %v2118 = vsub.f32 1.0, %v2115
        %v2119 = vsub.f32 1.0, %v2116
        %vm2120 = vcmp.ge.f32.partialorder %v2060, 0.0
        %vm2121 = vcmp.ge.f32.partialorder %v2061, 0.0
        %vm2122 = vcmp.ge.f32.partialorder %v2062, 0.0
        %v2123 = vsub.f32 0.0, %v2117
        %v2124 = vsub.f32 0.0, %v2118
        %v2125 = vsub.f32 0.0, %v2119
        %v2126 = vsel %vm2120, %v2117, %v2123
        %v2127 = vsel %vm2121, %v2118, %v2124
        %v2128 = vsel %vm2122, %v2119, %v2125
        %v2129 = vadd.f32 %v2126, 1.0
        %v2130 = vadd.f32 %v2127, 1.0
        %v2131 = vadd.f32 %v2128, 1.0
        %v2132 = vmul.f32 %v2057, %v2129
        %v2133 = vmul.f32 %v2058, %v2130
        %v2134 = vmul.f32 %v2059, %v2131
        %2135 = vst.msk [vmem:[#allocation3 + $0x6] sm:$0xff] %vm962, %v2132
        %2136 = vst.msk [vmem:[#allocation3 + $0xe] sm:$0xff] %vm962, %v2133
        %vm2137 = vcmask 257024
        %2138 = vst.msk [vmem:[#allocation3 + $0x16] sm:$0xf] %vm2137, %v2134
        %v2139 = vld [vmem:[#allocation3] sm:$0xff]
        %v2140 = vld [vmem:[#allocation3 + $0x8] sm:$0xff]
        %v2141 = vpack.c.bf16 %v2140, %v2139
        %v2142 = vld [vmem:[%s1491] sm:$0xf]
        %v2143 = vld [vmem:[%s1491 + $0x4] sm:$0xf]
        %2145 = vset.pattern.permute.xlu0 0
        %2146 = vperm.xlu0 %2145, %v2142
        %v2147 = vpop.permute.xlu0 %2146
        %v2150 = vunpack.c.l.s4 839922192
        %v2151 = vunpack.c.0.s8 %v2150
        %v2152 = vlaneseq
        %v2153 = vshrl.u32 %v2152, 7
        %v2154 = vsub.s32 %v2151, %v2153
        %v2155 = vrot.slane %v2147, %v2154
        %2157 = vset.pattern.permute.xlu0 0
        %2158 = vperm.xlu0 %2157, %v2143
        %v2159 = vpop.permute.xlu0 %2158
        %v2162 = vunpack.c.l.s4 839922192
        %v2163 = vunpack.c.0.s8 %v2162
        %v2164 = vlaneseq
        %v2165 = vshrl.u32 %v2164, 7
        %v2166 = vsub.s32 %v2163, %v2165
        %v2167 = vrot.slane %v2159, %v2166
        %v2170 = vunpack.c.l.b16 %v2155
        %v2171 = vunpack.c.l.b16 %v2167
        %v2172 = vpack.c.b16 %v2171, %v2170
        %v2174 = vmul.bf16 %v2141, %v2172
        %2175 = vst.msk [vmem:[#allocation5] sm:$0xff] %vm962, %v2174
        %v2176 = vld [vmem:[#allocation3 + $0x1] sm:$0xff]
        %v2177 = vld [vmem:[#allocation3 + $0x9] sm:$0xff]
        %v2178 = vpack.c.bf16 %v2177, %v2176
        %2180 = vrot.lane.b32.xlu0 %v2178, 32
        %v2181 = vpop.permute.xlu0 %2180
        %2183 = vst.msk [vmem:[#allocation5] sm:$0xff] %vm1011, %v2181
        %v2184 = vld [vmem:[#allocation3 + $0x2] sm:$0xff]
        %v2185 = vld [vmem:[#allocation3 + $0xa] sm:$0xff]
        %v2186 = vpack.c.bf16 %v2185, %v2184
        %v2187 = vld [vmem:[%s1566] sm:$0xf]
        %v2188 = vld [vmem:[%s1566 + $0x4] sm:$0xf]
        %2190 = vset.pattern.permute.xlu0 0
        %2191 = vperm.xlu0 %2190, %v2187
        %v2192 = vpop.permute.xlu0 %2191
        %v2195 = vunpack.c.l.s4 839922192
        %v2196 = vunpack.c.0.s8 %v2195
        %v2197 = vlaneseq
        %v2198 = vshrl.u32 %v2197, 7
        %v2199 = vsub.s32 %v2196, %v2198
        %v2200 = vrot.slane %v2192, %v2199
        %2202 = vset.pattern.permute.xlu0 0
        %2203 = vperm.xlu0 %2202, %v2188
        %v2204 = vpop.permute.xlu0 %2203
        %v2207 = vunpack.c.l.s4 839922192
        %v2208 = vunpack.c.0.s8 %v2207
        %v2209 = vlaneseq
        %v2210 = vshrl.u32 %v2209, 7
        %v2211 = vsub.s32 %v2208, %v2210
        %v2212 = vrot.slane %v2204, %v2211
        %v2215 = vunpack.c.l.b16 %v2200
        %v2216 = vunpack.c.l.b16 %v2212
        %v2217 = vpack.c.b16 %v2216, %v2215
        %v2219 = vmul.bf16 %v2186, %v2217
        %2221 = vrot.lane.b32.xlu0 %v2219, 64
        %v2222 = vpop.permute.xlu0 %2221
        %2224 = vst.msk [vmem:[#allocation5] sm:$0xff] %vm1053, %v2222
        %v2225 = vld [vmem:[#allocation3 + $0x5] sm:$0xff]
        %v2226 = vld [vmem:[#allocation3 + $0xd] sm:$0xff]
        %v2227 = vpack.c.bf16 %v2226, %v2225
        %v2228 = vld [vmem:[%s1491] sm:$0xf]
        %v2229 = vld [vmem:[%s1491 + $0x4] sm:$0xf]
        %2231 = vset.pattern.permute.xlu0 0
        %2232 = vperm.xlu0 %2231, %v2228
        %v2233 = vpop.permute.xlu0 %2232
        %v2236 = vunpack.c.l.s4 839922192
        %v2237 = vunpack.c.0.s8 %v2236
        %v2238 = vlaneseq
        %v2239 = vshrl.u32 %v2238, 7
        %v2240 = vsub.s32 %v2237, %v2239
        %v2241 = vrot.slane %v2233, %v2240
        %2243 = vset.pattern.permute.xlu0 0
        %2244 = vperm.xlu0 %2243, %v2229
        %v2245 = vpop.permute.xlu0 %2244
        %v2248 = vunpack.c.l.s4 839922192
        %v2249 = vunpack.c.0.s8 %v2248
        %v2250 = vlaneseq
        %v2251 = vshrl.u32 %v2250, 7
        %v2252 = vsub.s32 %v2249, %v2251
        %v2253 = vrot.slane %v2245, %v2252
        %v2256 = vunpack.c.l.b16 %v2241
        %v2257 = vunpack.c.l.b16 %v2253
        %v2258 = vpack.c.b16 %v2257, %v2256
        %v2260 = vmul.bf16 %v2227, %v2258
        %2262 = vrot.lane.b32.xlu0 %v2260, 96
        %v2263 = vpop.permute.xlu0 %2262
        %2265 = vst.msk [vmem:[#allocation5] sm:$0xff] %vm1095, %v2263
        %v2266 = vld [vmem:[#allocation3 + $0x6] sm:$0xff]
        %v2267 = vld [vmem:[#allocation3 + $0xe] sm:$0xff]
        %v2268 = vpack.c.bf16 %v2267, %v2266
        %2269 = vst.msk [vmem:[#allocation5 + $0x8] sm:$0xff] %vm962, %v2268
        %v2270 = vld [vmem:[#allocation3 + $0x7] sm:$0xff]
        %v2271 = vld [vmem:[#allocation3 + $0xf] sm:$0xff]
        %v2272 = vpack.c.bf16 %v2271, %v2270
        %v2273 = vld [vmem:[%s1566] sm:$0xf]
        %v2274 = vld [vmem:[%s1566 + $0x4] sm:$0xf]
        %2276 = vset.pattern.permute.xlu0 0
        %2277 = vperm.xlu0 %2276, %v2273
        %v2278 = vpop.permute.xlu0 %2277
        %v2281 = vunpack.c.l.s4 839922192
        %v2282 = vunpack.c.0.s8 %v2281
        %v2283 = vlaneseq
        %v2284 = vshrl.u32 %v2283, 7
        %v2285 = vsub.s32 %v2282, %v2284
        %v2286 = vrot.slane %v2278, %v2285
        %2288 = vset.pattern.permute.xlu0 0
        %2289 = vperm.xlu0 %2288, %v2274
        %v2290 = vpop.permute.xlu0 %2289
        %v2293 = vunpack.c.l.s4 839922192
        %v2294 = vunpack.c.0.s8 %v2293
        %v2295 = vlaneseq
        %v2296 = vshrl.u32 %v2295, 7
        %v2297 = vsub.s32 %v2294, %v2296
        %v2298 = vrot.slane %v2290, %v2297
        %v2301 = vunpack.c.l.b16 %v2286
        %v2302 = vunpack.c.l.b16 %v2298
        %v2303 = vpack.c.b16 %v2302, %v2301
        %v2305 = vmul.bf16 %v2272, %v2303
        %2307 = vrot.lane.b32.xlu0 %v2305, 32
        %v2308 = vpop.permute.xlu0 %2307
        %2310 = vst.msk [vmem:[#allocation5 + $0x8] sm:$0xff] %vm1011, %v2308
        %v2311 = vld [vmem:[#allocation3 + $0xa] sm:$0xff]
        %v2312 = vld [vmem:[#allocation3 + $0x12] sm:$0xff]
        %v2313 = vpack.c.bf16 %v2312, %v2311
        %v2314 = vld [vmem:[%s1491] sm:$0xf]
        %v2315 = vld [vmem:[%s1491 + $0x4] sm:$0xf]
        %2317 = vset.pattern.permute.xlu0 0
        %2318 = vperm.xlu0 %2317, %v2314
        %v2319 = vpop.permute.xlu0 %2318
        %v2322 = vunpack.c.l.s4 839922192
        %v2323 = vunpack.c.0.s8 %v2322
        %v2324 = vlaneseq
        %v2325 = vshrl.u32 %v2324, 7
        %v2326 = vsub.s32 %v2323, %v2325
        %v2327 = vrot.slane %v2319, %v2326
        %2329 = vset.pattern.permute.xlu0 0
        %2330 = vperm.xlu0 %2329, %v2315
        %v2331 = vpop.permute.xlu0 %2330
        %v2334 = vunpack.c.l.s4 839922192
        %v2335 = vunpack.c.0.s8 %v2334
        %v2336 = vlaneseq
        %v2337 = vshrl.u32 %v2336, 7
        %v2338 = vsub.s32 %v2335, %v2337
        %v2339 = vrot.slane %v2331, %v2338
        %v2342 = vunpack.c.l.b16 %v2327
        %v2343 = vunpack.c.l.b16 %v2339
        %v2344 = vpack.c.b16 %v2343, %v2342
        %v2346 = vmul.bf16 %v2313, %v2344
        %2348 = vrot.lane.b32.xlu0 %v2346, 64
        %v2349 = vpop.permute.xlu0 %2348
        %2351 = vst.msk [vmem:[#allocation5 + $0x8] sm:$0xff] %vm1053, %v2349
        %v2352 = vld [vmem:[#allocation3 + $0xb] sm:$0xff]
        %v2353 = vld [vmem:[#allocation3 + $0x13] sm:$0xff]
        %v2354 = vpack.c.bf16 %v2353, %v2352
        %2356 = vrot.lane.b32.xlu0 %v2354, 96
        %v2357 = vpop.permute.xlu0 %2356
        %2359 = vst.msk [vmem:[#allocation5 + $0x8] sm:$0xff] %vm1095, %v2357
        %v2360 = vld [vmem:[#allocation3 + $0xc] sm:$0xff]
        %v2361 = vld [vmem:[#allocation3 + $0x14] sm:$0xff]
        %v2362 = vpack.c.bf16 %v2361, %v2360
        %v2363 = vld [vmem:[%s1566] sm:$0xf]
        %v2364 = vld [vmem:[%s1566 + $0x4] sm:$0xf]
        %2366 = vset.pattern.permute.xlu0 0
        %2367 = vperm.xlu0 %2366, %v2363
        %v2368 = vpop.permute.xlu0 %2367
        %v2371 = vunpack.c.l.s4 839922192
        %v2372 = vunpack.c.0.s8 %v2371
        %v2373 = vlaneseq
        %v2374 = vshrl.u32 %v2373, 7
        %v2375 = vsub.s32 %v2372, %v2374
        %v2376 = vrot.slane %v2368, %v2375
        %2378 = vset.pattern.permute.xlu0 0
        %2379 = vperm.xlu0 %2378, %v2364
        %v2380 = vpop.permute.xlu0 %2379
        %v2383 = vunpack.c.l.s4 839922192
        %v2384 = vunpack.c.0.s8 %v2383
        %v2385 = vlaneseq
        %v2386 = vshrl.u32 %v2385, 7
        %v2387 = vsub.s32 %v2384, %v2386
        %v2388 = vrot.slane %v2380, %v2387
        %v2391 = vunpack.c.l.b16 %v2376
        %v2392 = vunpack.c.l.b16 %v2388
        %v2393 = vpack.c.b16 %v2392, %v2391
        %v2395 = vmul.bf16 %v2362, %v2393
        %2396 = vst.msk [vmem:[#allocation5 + $0x10] sm:$0xff] %vm962, %v2395
        %v2397 = vld [vmem:[#allocation5] sm:$0xff]
        %v2398 = vld [vmem:[#allocation5 + $0x8] sm:$0xff]
        %v2399 = vld [vmem:[#allocation5 + $0x10] sm:$0xff]
        %v2400 = vld [vmem:[%s4] sm:$0xf]
        %v2401 = vld [vmem:[%s4 + $0x4] sm:$0xf]
        %v2402 = vld [vmem:[%s4 + $0x8] sm:$0xf]
        %v2403 = vld [vmem:[%s4 + $0xc] sm:$0xf]
        %v2404 = vld [vmem:[%s4 + $0x10] sm:$0xf]
        %v2405 = vld [vmem:[%s4 + $0x14] sm:$0xf]
        %v2406 = vld [vmem:[%s4 + $0x18] sm:$0xf]
        %v2407 = vld [vmem:[%s4 + $0x1c] sm:$0xf]
        %v2408 = vld [vmem:[%s4 + $0x20] sm:$0xf]
        %v2409 = vld [vmem:[%s4 + $0x24] sm:$0xf]
        %v2410 = vld [vmem:[%s4 + $0x28] sm:$0xf]
        %v2411 = vld [vmem:[%s4 + $0x2c] sm:$0xf]
        %v2412 = vld [vmem:[%s4 + $0x30] sm:$0xf]
        %v2413 = vld [vmem:[%s4 + $0x34] sm:$0xf]
        %v2414 = vld [vmem:[%s4 + $0x38] sm:$0xf]
        %v2415 = vld [vmem:[%s4 + $0x3c] sm:$0xf]
        %v2416 = vld [vmem:[%s4 + $0x40] sm:$0xf]
        %v2417 = vld [vmem:[%s4 + $0x44] sm:$0xf]
        %v2418 = vld [vmem:[%s4 + $0x48] sm:$0xf]
        %v2419 = vld [vmem:[%s4 + $0x4c] sm:$0xf]
        %v2420 = vld [vmem:[%s4 + $0x50] sm:$0xf]
        %v2421 = vld [vmem:[%s4 + $0x54] sm:$0xf]
        %v2422 = vld [vmem:[%s4 + $0x58] sm:$0xf]
        %v2423 = vld [vmem:[%s4 + $0x5c] sm:$0xf]
        %v2424 = vld [vmem:[%s4 + $0x60] sm:$0xf]
        %v2425 = vld [vmem:[%s4 + $0x64] sm:$0xf]
        %v2426 = vld [vmem:[%s4 + $0x68] sm:$0xf]
        %v2427 = vld [vmem:[%s4 + $0x6c] sm:$0xf]
        %v2428 = vld [vmem:[%s4 + $0x70] sm:$0xf]
        %v2429 = vld [vmem:[%s4 + $0x74] sm:$0xf]
        %v2430 = vld [vmem:[%s4 + $0x78] sm:$0xf]
        %v2431 = vld [vmem:[%s4 + $0x7c] sm:$0xf]
        %v2432 = vld [vmem:[%s4 + $0x80] sm:$0xf]
        %v2433 = vld [vmem:[%s4 + $0x84] sm:$0xf]
        %v2434 = vld [vmem:[%s4 + $0x88] sm:$0xf]
        %v2435 = vld [vmem:[%s4 + $0x8c] sm:$0xf]
        %v2436 = vld [vmem:[%s5] sm:$0x1]
        %v2438 = vlaneseq
        %v2439 = vshrl.u32 %v2438, 7
        %v2440 = vsub.s32 0, %v2439
        %v2441 = vrot.slane %v2436, %v2440
        %v2479 = vunpack.c.l.b16 %v2400
        %v2480 = vunpack.c.l.b16 %v2401
        %v2481 = vunpack.c.l.b16 %v2402
        %v2482 = vunpack.c.l.b16 %v2403
        %v2483 = vunpack.c.l.b16 %v2404
        %v2484 = vunpack.c.l.b16 %v2405
        %v2485 = vunpack.c.l.b16 %v2406
        %v2486 = vunpack.c.l.b16 %v2407
        %v2487 = vunpack.c.l.b16 %v2408
        %v2488 = vunpack.c.l.b16 %v2409
        %v2489 = vunpack.c.l.b16 %v2410
        %v2490 = vunpack.c.l.b16 %v2411
        %v2491 = vunpack.c.l.b16 %v2412
        %v2492 = vunpack.c.l.b16 %v2413
        %v2493 = vunpack.c.l.b16 %v2414
        %v2494 = vunpack.c.l.b16 %v2415
        %v2495 = vunpack.c.l.b16 %v2416
        %v2496 = vunpack.c.l.b16 %v2417
        %v2497 = vunpack.c.l.b16 %v2418
        %v2498 = vunpack.c.l.b16 %v2419
        %v2499 = vunpack.c.l.b16 %v2420
        %v2500 = vunpack.c.l.b16 %v2421
        %v2501 = vunpack.c.l.b16 %v2422
        %v2502 = vunpack.c.l.b16 %v2423
        %v2503 = vunpack.c.l.b16 %v2424
        %v2504 = vunpack.c.l.b16 %v2425
        %v2505 = vunpack.c.l.b16 %v2426
        %v2506 = vunpack.c.l.b16 %v2427
        %v2507 = vunpack.c.l.b16 %v2428
        %v2508 = vunpack.c.l.b16 %v2429
        %v2509 = vunpack.c.l.b16 %v2430
        %v2510 = vunpack.c.l.b16 %v2431
        %v2511 = vunpack.c.l.b16 %v2432
        %v2512 = vunpack.c.l.b16 %v2433
        %v2513 = vunpack.c.l.b16 %v2434
        %v2514 = vunpack.c.l.b16 %v2435
        %v2515 = vpack.c.b16 %v2480, %v2479
        %v2516 = vpack.c.b16 %v2482, %v2481
        %v2517 = vpack.c.b16 %v2484, %v2483
        %v2518 = vpack.c.b16 %v2486, %v2485
        %v2519 = vpack.c.b16 %v2488, %v2487
        %v2520 = vpack.c.b16 %v2490, %v2489
        %v2521 = vpack.c.b16 %v2492, %v2491
        %v2522 = vpack.c.b16 %v2494, %v2493
        %v2523 = vpack.c.b16 %v2496, %v2495
        %v2524 = vpack.c.b16 %v2498, %v2497
        %v2525 = vpack.c.b16 %v2500, %v2499
        %v2526 = vpack.c.b16 %v2502, %v2501
        %v2527 = vpack.c.b16 %v2504, %v2503
        %v2528 = vpack.c.b16 %v2506, %v2505
        %v2529 = vpack.c.b16 %v2508, %v2507
        %v2530 = vpack.c.b16 %v2510, %v2509
        %v2531 = vpack.c.b16 %v2512, %v2511
        %v2532 = vpack.c.b16 %v2514, %v2513
        %v2552 = vsel %vm962, %v2399, 0
        %2554 = vmatprep.subr.bf16.mxu0 0
        %2555 = vmatpush1.bf16.msra.mxu0 %v2515
        %2556 = vmatprep.subr.bf16.mxu0 0
        %2557 = vmatpush1.bf16.msra.mxu0 %v2516
        %2558 = vmatprep.subr.bf16.mxu0 0
        %2559 = vmatpush1.bf16.msra.mxu0 %v2517
        %2560 = vmatprep.subr.bf16.mxu0 0
        %2561 = vmatpush1.bf16.msra.mxu0 %v2518
        %2562 = vmatprep.subr.bf16.mxu0 0
        %2563 = vmatpush1.bf16.msra.mxu0 %v2519
        %2564 = vmatprep.subr.bf16.mxu0 0
        %2565 = vmatpush1.bf16.msra.mxu0 %v2520
        %2566 = vmatprep.subr.bf16.mxu0 0
        %2567 = vmatpush1.bf16.msra.mxu0 %v2521
        %2568 = vmatprep.subr.bf16.mxu0 0
        %2569 = vmatpush1.bf16.msra.mxu0 %v2522
        %2570 = vmatprep.subr.bf16.mxu0 0
        %2571 = vmatpush1.bf16.msra.mxu0 %v2523
        %2572 = vmatprep.subr.bf16.mxu0 0
        %2573 = vmatpush1.bf16.msra.mxu0 %v2524
        %2574 = vmatprep.subr.bf16.mxu0 0
        %2575 = vmatpush1.bf16.msra.mxu0 %v2525
        %2576 = vmatprep.subr.bf16.mxu0 0
        %2577 = vmatpush1.bf16.msra.mxu0 %v2526
        %2578 = vmatprep.subr.bf16.mxu0 0
        %2579 = vmatpush1.bf16.msra.mxu0 %v2527
        %2580 = vmatprep.subr.bf16.mxu0 0
        %2581 = vmatpush1.bf16.msra.mxu0 %v2528
        %2582 = vmatprep.subr.bf16.mxu0 0
        %2583 = vmatpush1.bf16.msra.mxu0 %v2529
        %2584 = vmatprep.subr.bf16.mxu0 0
        %2585 = vmatpush1.bf16.msra.mxu0 %v2530
        %2586 = vmatprep.mubr.bf16.mxu0 %v2398
        %2587 = vmatmul.mubr.bf16.gmra.mrb[0].mxu0 %v2397
        %v2588 = vpop.f32.mrb[0].mxu0
        %v2589 = vadd.f32 %v2441, %v2588
        %v2590 = vpop.f32.mrb[0].mxu0
        %v2591 = vpop.f32.mrb[0].mxu0
        %v2592 = vadd.f32 %v2441, %v2591
        %v2593 = vpop.f32.mrb[0].mxu0
        %2594 = vdwg.mxu0
        %2595 = vmatprep.subr.bf16.mxu0 0
        %2596 = vmatpush1.bf16.msra.mxu0 %v2531
        %2597 = vmatprep.subr.bf16.mxu0 0
        %2598 = vmatpush1.bf16.msra.mxu0 %v2532
        %2599 = vmatprep.subr.bf16.mxu0 0
        %2600 = vmatpush1.bf16.msra.mxu0 0
        %2601 = vmatprep.subr.bf16.mxu0 0
        %2602 = vmatpush1.bf16.msra.mxu0 0
        %2603 = vmatprep.subr.bf16.mxu0 0
        %2604 = vmatpush1.bf16.msra.mxu0 0
        %2605 = vmatprep.subr.bf16.mxu0 0
        %2606 = vmatpush1.bf16.msra.mxu0 0
        %2607 = vmatprep.subr.bf16.mxu0 0
        %2608 = vmatpush1.bf16.msra.mxu0 0
        %2609 = vmatprep.subr.bf16.mxu0 0
        %2610 = vmatpush1.bf16.msra.mxu0 0
        %2611 = vmatprep.subr.bf16.mxu0 0
        %2612 = vmatpush1.bf16.msra.mxu0 0
        %2613 = vmatprep.subr.bf16.mxu0 0
        %2614 = vmatpush1.bf16.msra.mxu0 0
        %2615 = vmatprep.subr.bf16.mxu0 0
        %2616 = vmatpush1.bf16.msra.mxu0 0
        %2617 = vmatprep.subr.bf16.mxu0 0
        %2618 = vmatpush1.bf16.msra.mxu0 0
        %2619 = vmatprep.subr.bf16.mxu0 0
        %2620 = vmatpush1.bf16.msra.mxu0 0
        %2621 = vmatprep.subr.bf16.mxu0 0
        %2622 = vmatpush1.bf16.msra.mxu0 0
        %2623 = vmatprep.subr.bf16.mxu0 0
        %2624 = vmatpush1.bf16.msra.mxu0 0
        %2625 = vmatprep.subr.bf16.mxu0 0
        %2626 = vmatpush1.bf16.msra.mxu0 0
        %2627 = vmatprep.mubr.bf16.mxu0 0
        %2628 = vmatmul.mubr.bf16.gmra.mrb[0].mxu0 %v2552
        %v2629 = vpop.f32.mrb[0].mxu0
        %v2630 = vadd.f32 %v2589, %v2629
        %v2631 = vpop.f32.mrb[0].mxu0
        %v2632 = vpop.f32.mrb[0].mxu0
        %v2633 = vadd.f32 %v2592, %v2632
        %v2634 = vpop.f32.mrb[0].mxu0
        %2635 = vdwg.mxu0
        %s2636 = sadd.s32 %s1467, 1
        %s2637 = sld [smem:[#allocation6 + %s2636]]
        %v2638 = vstv %s2637
        %v2639 = vmul.f32 %v2638, %v2630
        %v2640 = vmul.f32 %v2638, %v2633
        %v2641 = vadd.f32 %v1472, %v2639
        %v2642 = vadd.f32 %v1473, %v2640
        %2643 = vst.msk [vmem:[%s285] sm:$0xff] %vm300, %v2641
        %2644 = vst.msk [vmem:[%s285 + $0x8] sm:$0xff] %vm300, %v2642
        %s2645 = sand.u32 %s182, 1
        %s2646 = scalar_lea.sflag [#allocation7], %s2645
        %s2647 = sand.u32 %s182, 1
        %s2648 = smul.addr %s2647, 16
        %s2649 = scalar_lea.vmem [#allocation9], %s2648
        // Predicated region
        $region53: #{tpu_custom_call.1} parent=47 // pred_check
          %p2650 = pneg %p192
        $region54: #{tpu_custom_call.1} parent=47 // pred_check_branch
          %2652 = sbr.rel (%p2650) target = $region56
        $region55: #{tpu_custom_call.1} parent=47 // pred_region
          %s2654 = ssub.s32 256, 256
          %2655 = vsyncadd %s2646, %s2654
          %s2656 = smul.addr %s22, 2
          %s2657 = smul.addr %s2656, 128
          %s2658 = scalar_lea.hbm %s7, %s2657
          %s2659 = sshll.u32 %s2649, 4
          %s2660 = int_to_ptr.vmem [resolvable:$true] %s2659
          %2665 = dma.vmem_to_hbm [thread:$0]  %s2660, 256, %s2658, %s2646, 128, 128, 8
        $region56: #{tpu_custom_call.1} parent=47 // pred_fallthru
          _
      $region48: #{tpu_custom_call.1} parent=5 // pred_fallthru
        _
      %p2666 = scmp.le.s32.totalorder 2, %s17
      // Predicated region
      $region57: #{tpu_custom_call.1} parent=5 // pred_check
        %p2667 = pneg %p2666
      $region58: #{tpu_custom_call.1} parent=5 // pred_check_branch
        %2669 = sbr.rel (%p2667) target = $region60
      $region59: #{tpu_custom_call.1} parent=5 // pred_region
        %s2670 = ssub.s32 %s17, 2
        // Predicated region
        $region61: #{tpu_custom_call.1} parent=59 // pred_check
          %p2671 = pneg %p198
        $region62: #{tpu_custom_call.1} parent=59 // pred_check_branch
          %2673 = sbr.rel (%p2671) target = $region64
        $region63: #{tpu_custom_call.1} parent=59 // pred_region
          %s2674 = sand.u32 %s183, 1
          %s2675 = scalar_lea.sflag [#allocation7], %s2674
          %s2676 = sand.u32 %s183, 1
          %s2677 = smul.addr %s2676, 16
          %s2678 = scalar_lea.vmem [#allocation9], %s2677
          %2679 = dma.done %s2675, 256
        $region64: #{tpu_custom_call.1} parent=59 // pred_fallthru
          _
      $region60: #{tpu_custom_call.1} parent=5 // pred_fallthru
        _
    $region6: #{tpu_custom_call.1} parent=1 // loop_footer
      %s21 = sadd.s32 1, %s17
    $region7: #{tpu_custom_call.1} parent=1 // loop_footer_branch
      %16 = sbr.rel target = $region3
    $region8: #{tpu_custom_call.1} parent=1 // loop_exit
      _
    %2680 = vsyncpa [#allocation7], 1
    %s2681 = scalar_lea.sflag [#allocation7], 1
    %2682 = vsyncpa %s2681, 1
    %2683 = vsyncpa [#allocation8], 1
    %s2684 = scalar_lea.sflag [#allocation8], 1
    %2685 = vsyncpa %s2684, 1

</llo_original>
